<compile_context>
chip_gen: v7x
topology: tpu7x:2x2x1
jax: 0.10.0
libtpu: 0.0.40
codegen_flags: <defaults>
</compile_context>

<pallas_src>
import jax
import jax.numpy as jnp
from jax.experimental import pallas as pl
from jax.experimental.pallas import tpu as pltpu

D_IN = 3720    # layer0 input features (not padded; full-dim block)
D_H = 150      # hidden width
D_OUT = 1
D_H_PAD = 256  # hidden padded to 2*128 lanes (zero padding is exact)


def _round_up(n, m):
    return ((n + m - 1) // m) * m


def _const_spec(shape):
    """BlockSpec for a weight/bias resident for the whole grid.

    Constant index map -> fetched once.  Single-buffered (Buffered(1)) so the
    unused second pipeline buffer's VMEM is not reserved; falls back to the
    default double-buffering if this jax version lacks pipeline_mode.
    """
    try:
        return pl.BlockSpec(shape, lambda i: (0, 0), pipeline_mode=pl.Buffered(1))
    except (TypeError, AttributeError):
        return pl.BlockSpec(shape, lambda i: (0, 0))


def ffnn_kernel(x_ref, w0_ref, b0_ref, w1_ref, b1_ref, w2_ref, b2_ref, o_ref):
    # In-kernel cast to bf16 (no-op if the caller already supplies bf16 x).
    x = x_ref[...].astype(jnp.bfloat16)

    # layer0: [tm, 3720] @ [3720, 256] on the MXU, f32 accumulation.
    h0 = jnp.dot(x, w0_ref[...], preferred_element_type=jnp.float32)
    h0 = jnp.maximum(h0 + b0_ref[...], 0.0)

    # layer1: [tm, 256] @ [256, 256] on the MXU, f32 accumulation.
    h1 = jnp.dot(h0.astype(jnp.bfloat16), w1_ref[...],
                 preferred_element_type=jnp.float32)
    h1 = jnp.maximum(h1 + b1_ref[...], 0.0)

    # layer2 (out width 1): VPU multiply + XLU lane reduction; b2 is an SMEM scalar.
    h2 = jnp.sum(h1 * w2_ref[...], axis=-1, keepdims=True) + b2_ref[0, 0]
    o_ref[...] = jnp.maximum(h2, 0.0).astype(o_ref.dtype)


def prepare_params(w0, b0, w1, b1, w2, b2):
    """One-time weight preprocessing (hoisted out of the per-call path).

    Weights are stored as [in, out] (i.e. nn.Linear.weight.T).  Matmul weights
    are cast to bf16; the hidden dim is zero-padded 150 -> 256 (exact)."""
    pad_h = D_H_PAD - D_H
    w0_p = jnp.pad(w0.astype(jnp.bfloat16), ((0, 0), (0, pad_h)))
    b0_p = jnp.pad(b0.astype(jnp.float32).reshape(1, D_H), ((0, 0), (0, pad_h)))
    w1_p = jnp.pad(w1.astype(jnp.bfloat16), ((0, pad_h), (0, pad_h)))
    b1_p = jnp.pad(b1.astype(jnp.float32).reshape(1, D_H), ((0, 0), (0, pad_h)))
    # layer2 weight column -> padded row [1, 256] (f32, used on the VPU).
    w2_row = jnp.pad(w2.astype(jnp.float32).reshape(D_H, D_OUT).T,
                     ((0, 0), (0, pad_h)))
    b2_p = b2.astype(jnp.float32).reshape(1, 1)
    return w0_p, b0_p, w1_p, b1_p, w2_row, b2_p


def _vmem_capacity_bytes():
    try:
        return int(pltpu.get_tpu_info().vmem_capacity_bytes)
    except Exception:
        return 64 << 20  # conservative: assume v7x-class (64 MiB per TensorCore)


def _pick_tiling(B, tm):
    vmem = _vmem_capacity_bytes()
    if vmem >= (100 << 20):      # v5e / v6e: 128 MiB VMEM
        tm_cap, vmem_limit = 1024, 72 << 20
    else:                        # v7x-class: 64 MiB VMEM per TensorCore
        tm_cap, vmem_limit = 768, 48 << 20
    if tm is None:
        tm = tm_cap
        # Guarantee >= 2 grid steps when the batch allows it, so the two v7x
        # TensorCores both get work (one extra ~0.35us step elsewhere: free).
        if B >= 32:
            tm = min(tm, _round_up(pl.cdiv(B, 2), 16))
    # Round to 16 sublanes (bf16 packing); never larger than the rounded batch.
    tm = _round_up(min(tm, _round_up(B, 16)), 16)
    return tm, vmem_limit


def ffnn_antecedent(x, params, *, tm=None):
    """x: [B, 3720] float32 (or bfloat16). params: output of prepare_params()."""
    B = x.shape[0]
    tm, vmem_limit = _pick_tiling(B, tm)
    grid_m = pl.cdiv(B, tm)
    w0_p, b0_p, w1_p, b1_p, w2_row, b2_p = params

    return pl.pallas_call(
        ffnn_kernel,
        out_shape=jax.ShapeDtypeStruct((B, D_OUT), jnp.float32),
        grid_spec=pltpu.PrefetchScalarGridSpec(
            num_scalar_prefetch=0,
            grid=(grid_m,),
            in_specs=[
                pl.BlockSpec((tm, D_IN), lambda i: (i, 0)),   # x row tile (ragged last block OK)
                _const_spec((D_IN, D_H_PAD)),                 # W0 (bf16)
                _const_spec((1, D_H_PAD)),                    # b0 (f32)
                _const_spec((D_H_PAD, D_H_PAD)),              # W1 (bf16)
                _const_spec((1, D_H_PAD)),                    # b1 (f32)
                _const_spec((1, D_H_PAD)),                    # W2 column as row (f32)
                pl.BlockSpec(memory_space=pltpu.MemorySpace.SMEM),  # b2 scalar
            ],
            out_specs=pl.BlockSpec((tm, D_OUT), lambda i: (i, 0)),
        ),
        compiler_params=pltpu.CompilerParams(
            dimension_semantics=("parallel",),
            vmem_limit_bytes=vmem_limit,
        ),
    )(x, w0_p, b0_p, w1_p, b1_p, w2_row, b2_p)


def init_linear(key, fan_in, fan_out):
    # Deterministic init mirroring torch.nn.Linear default: U(-1/sqrt(fan_in), +)
    kw, kb = jax.random.split(key)
    bound = 1.0 / jnp.sqrt(fan_in)
    w = jax.random.uniform(kw, (fan_in, fan_out), jnp.float32, -bound, bound)
    b = jax.random.uniform(kb, (1, fan_out), jnp.float32, -bound, bound)
    return w, b


def reference(x, w0, b0, w1, b1, w2, b2):
    h = jnp.maximum(x @ w0 + b0, 0.0)
    h = jnp.maximum(h @ w1 + b1, 0.0)
    h = jnp.maximum(h @ w2 + b2, 0.0)
    return h


if __name__ == "__main__":
    key = jax.random.PRNGKey(0)
    kx1, kx2, k0, k1, k2 = jax.random.split(key, 5)

    w0, b0 = init_linear(k0, D_IN, D_H)
    w1, b1 = init_linear(k1, D_H, D_H)
    w2, b2 = init_linear(k2, D_H, D_OUT)
    params = prepare_params(w0, b0, w1, b1, w2, b2)  # hoisted; reused below

    # Case 1: small batch, single grid step.
    B1 = 16
    x1 = jax.random.normal(kx1, (B1, D_IN), jnp.float32)
    out1 = jax.block_until_ready(ffnn_antecedent(x1, params))
    ref1 = reference(x1, w0, b0, w1, b1, w2, b2)
    assert out1.shape == (B1, D_OUT)
    # bf16 inputs on the MXU -> relaxed tolerance vs the f32 reference.
    assert jnp.allclose(out1, ref1, atol=6e-2, rtol=6e-2), "mismatch vs reference (B=16)"

    # Case 2: multi-step grid with a ragged last block (B not a multiple of tm).
    B2 = 300
    x2 = jax.random.normal(kx2, (B2, D_IN), jnp.float32)
    out2 = jax.block_until_ready(ffnn_antecedent(x2, params, tm=128))
    ref2 = reference(x2, w0, b0, w1, b1, w2, b2)
    assert out2.shape == (B2, D_OUT)
    assert jnp.allclose(out2, ref2, atol=6e-2, rtol=6e-2), "mismatch vs reference (B=300)"

    print("KERNEL_OK")
</pallas_src>

<mosaic_0001>
module attributes {stable_mosaic.version = 11 : i64} {
  func.func @ffnn_kernel(%arg0: i32, %arg1: memref<16x3720xf32, #tpu.memory_space<vmem>>, %arg2: memref<3720x256xbf16, #tpu.memory_space<vmem>>, %arg3: memref<1x256xf32, #tpu.memory_space<vmem>>, %arg4: memref<256x256xbf16, #tpu.memory_space<vmem>>, %arg5: memref<1x256xf32, #tpu.memory_space<vmem>>, %arg6: memref<1x256xf32, #tpu.memory_space<vmem>>, %arg7: memref<1x1xf32, #tpu.memory_space<smem>>, %arg8: memref<16x1xf32, #tpu.memory_space<vmem>>) attributes {dimension_semantics = [#tpu.dimension_semantics<parallel>], iteration_bounds = array<i64: 1>, scalar_prefetch = 0 : i64, scratch_operands = 0 : i64, tpu.core_type = #tpu.core_type<tc>, window_params = [{transform_indices = @transform_0, window_bounds = array<i64: 16, 3720>}, {pipeline_mode = #tpu.pipeline_mode<synchronous>, transform_indices = @transform_1, window_bounds = array<i64: 3720, 256>}, {pipeline_mode = #tpu.pipeline_mode<synchronous>, transform_indices = @transform_2, window_bounds = array<i64: 1, 256>}, {pipeline_mode = #tpu.pipeline_mode<synchronous>, transform_indices = @transform_3, window_bounds = array<i64: 256, 256>}, {pipeline_mode = #tpu.pipeline_mode<synchronous>, transform_indices = @transform_4, window_bounds = array<i64: 1, 256>}, {pipeline_mode = #tpu.pipeline_mode<synchronous>, transform_indices = @transform_5, window_bounds = array<i64: 1, 256>}, {transform_indices = @transform_6, window_bounds = array<i64: 1, 1>}, {transform_indices = @transform_7, window_bounds = array<i64: 16, 1>}]} {
    %c0 = arith.constant 0 : index
    %c0_0 = arith.constant 0 : index
    %0 = vector.load %arg1[%c0, %c0_0] : memref<16x3720xf32, #tpu.memory_space<vmem>>, vector<16x3720xf32>
    %1 = arith.truncf %0 : vector<16x3720xf32> to vector<16x3720xbf16>
    %c0_1 = arith.constant 0 : index
    %c0_2 = arith.constant 0 : index
    %2 = vector.load %arg2[%c0_1, %c0_2] : memref<3720x256xbf16, #tpu.memory_space<vmem>>, vector<3720x256xbf16>
    %cst = arith.constant dense<0.000000e+00> : vector<16x256xf32>
    %3 = tpu.matmul %1, %2, %cst {dimension_numbers = #tpu.dot_dimension_numbers<[1], [0], [0], [1], [0, 0, 1, 1], [], []>} : vector<16x3720xbf16>, vector<3720x256xbf16>, vector<16x256xf32> -> vector<16x256xf32>
    %c0_3 = arith.constant 0 : index
    %c0_4 = arith.constant 0 : index
    %4 = vector.load %arg3[%c0_3, %c0_4] : memref<1x256xf32, #tpu.memory_space<vmem>>, vector<1x256xf32>
    %5 = vector.broadcast %4 : vector<1x256xf32> to vector<16x256xf32>
    %6 = arith.addf %3, %5 : vector<16x256xf32>
    %cst_5 = arith.constant 0.000000e+00 : f32
    %7 = vector.broadcast %cst_5 : f32 to vector<16x256xf32>
    %8 = arith.maximumf %6, %7 : vector<16x256xf32>
    %9 = arith.truncf %8 : vector<16x256xf32> to vector<16x256xbf16>
    %c0_6 = arith.constant 0 : index
    %c0_7 = arith.constant 0 : index
    %10 = vector.load %arg4[%c0_6, %c0_7] : memref<256x256xbf16, #tpu.memory_space<vmem>>, vector<256x256xbf16>
    %cst_8 = arith.constant dense<0.000000e+00> : vector<16x256xf32>
    %11 = tpu.matmul %9, %10, %cst_8 {dimension_numbers = #tpu.dot_dimension_numbers<[1], [0], [0], [1], [0, 0, 1, 1], [], []>} : vector<16x256xbf16>, vector<256x256xbf16>, vector<16x256xf32> -> vector<16x256xf32>
    %c0_9 = arith.constant 0 : index
    %c0_10 = arith.constant 0 : index
    %12 = vector.load %arg5[%c0_9, %c0_10] : memref<1x256xf32, #tpu.memory_space<vmem>>, vector<1x256xf32>
    %13 = vector.broadcast %12 : vector<1x256xf32> to vector<16x256xf32>
    %14 = arith.addf %11, %13 : vector<16x256xf32>
    %cst_11 = arith.constant 0.000000e+00 : f32
    %15 = vector.broadcast %cst_11 : f32 to vector<16x256xf32>
    %16 = arith.maximumf %14, %15 : vector<16x256xf32>
    %c0_12 = arith.constant 0 : index
    %c0_13 = arith.constant 0 : index
    %17 = vector.load %arg6[%c0_12, %c0_13] : memref<1x256xf32, #tpu.memory_space<vmem>>, vector<1x256xf32>
    %18 = vector.broadcast %17 : vector<1x256xf32> to vector<16x256xf32>
    %19 = arith.mulf %16, %18 : vector<16x256xf32>
    %cst_14 = arith.constant dense<0.000000e+00> : vector<16xf32>
    %20 = vector.multi_reduction <add>, %19, %cst_14 [1] : vector<16x256xf32> to vector<16xf32>
    %21 = vector.shape_cast %20 : vector<16xf32> to vector<16x1xf32>
    %c0_15 = arith.constant 0 : index
    %c0_16 = arith.constant 0 : index
    %22 = memref.load %arg7[%c0_15, %c0_16] : memref<1x1xf32, #tpu.memory_space<smem>>
    %23 = vector.broadcast %22 : f32 to vector<16x1xf32>
    %24 = arith.addf %21, %23 : vector<16x1xf32>
    %cst_17 = arith.constant 0.000000e+00 : f32
    %25 = vector.broadcast %cst_17 : f32 to vector<16x1xf32>
    %26 = arith.maximumf %24, %25 : vector<16x1xf32>
    %c0_18 = arith.constant 0 : index
    %c0_19 = arith.constant 0 : index
    %27 = vector.load %arg8[%c0_18, %c0_19] : memref<16x1xf32, #tpu.memory_space<vmem>>, vector<16x1xf32>
    tpu.vector_store %arg8[%c0_18, %c0_19], %26 {strides = array<i32>} : memref<16x1xf32, #tpu.memory_space<vmem>>, vector<16x1xf32>,
    return
  }
  func.func @transform_0(%arg0: i32) -> (i32, i32) {
    %c0_i32 = arith.constant 0 : i32
    %c0_i32_0 = arith.constant 0 : i32
    return %arg0, %c0_i32 : i32, i32
  }
  func.func @transform_1(%arg0: i32) -> (i32, i32) {
    %c0_i32 = arith.constant 0 : i32
    %c0_i32_0 = arith.constant 0 : i32
    %c0_i32_1 = arith.constant 0 : i32
    return %c0_i32, %c0_i32_0 : i32, i32
  }
  func.func @transform_2(%arg0: i32) -> (i32, i32) {
    %c0_i32 = arith.constant 0 : i32
    %c0_i32_0 = arith.constant 0 : i32
    %c0_i32_1 = arith.constant 0 : i32
    return %c0_i32, %c0_i32_0 : i32, i32
  }
  func.func @transform_3(%arg0: i32) -> (i32, i32) {
    %c0_i32 = arith.constant 0 : i32
    %c0_i32_0 = arith.constant 0 : i32
    %c0_i32_1 = arith.constant 0 : i32
    return %c0_i32, %c0_i32_0 : i32, i32
  }
  func.func @transform_4(%arg0: i32) -> (i32, i32) {
    %c0_i32 = arith.constant 0 : i32
    %c0_i32_0 = arith.constant 0 : i32
    %c0_i32_1 = arith.constant 0 : i32
    return %c0_i32, %c0_i32_0 : i32, i32
  }
  func.func @transform_5(%arg0: i32) -> (i32, i32) {
    %c0_i32 = arith.constant 0 : i32
    %c0_i32_0 = arith.constant 0 : i32
    %c0_i32_1 = arith.constant 0 : i32
    return %c0_i32, %c0_i32_0 : i32, i32
  }
  func.func @transform_6(%arg0: i32) -> (i32, i32) {
    %c0_i32 = arith.constant 0 : i32
    %c0_i32_0 = arith.constant 0 : i32
    %c0_i32_1 = arith.constant 0 : i32
    return %c0_i32, %c0_i32_0 : i32, i32
  }
  func.func @transform_7(%arg0: i32) -> (i32, i32) {
    %c0_i32 = arith.constant 0 : i32
    %c0_i32_0 = arith.constant 0 : i32
    return %arg0, %c0_i32 : i32, i32
  }
}

</mosaic_0001>

<llo_original>
// kernel: tpu_custom_call.1
$region0: #{tpu_custom_call.1}
  #allocation0 [shape = 'u32[]', space=smem, size = 0x4, offset = 0x4, fixed_abs, tag = 'smem constant byte address 0x4 - core index']
  #allocation1 [shape = 'u32[144,128]{1,0:T(1,128)}', space=vmem, size = 0x12000, scoped, tag = 'internal scratch']
  #allocation2 [shape = 'f32[1,1]{1,0:T(1,128)S(6)}', space=smem, size = 0x200, scoped, tag = 'scoped memory for tpu_custom_call.1']
  %s0 = inlined_call_operand.hbm [shape: f32[16,3720], index: 0, kind: input, shape index: {}]
  %s1 = inlined_call_operand.hbm [shape: bf16[3720,256], index: 1, kind: input, shape index: {}]
  %s2 = inlined_call_operand.hbm [shape: f32[1,256], index: 2, kind: input, shape index: {}]
  %s3 = inlined_call_operand.hbm [shape: bf16[256,256], index: 3, kind: input, shape index: {}]
  %s4 = inlined_call_operand.hbm [shape: f32[1,256], index: 4, kind: input, shape index: {}]
  %s5 = inlined_call_operand.hbm [shape: f32[1,256], index: 5, kind: input, shape index: {}]
  %s6 = inlined_call_operand.<no memory space> [shape: f32[1,1], index: 6, kind: input, shape index: {}]
  %s7 = inlined_call_operand.vmem [shape: f32[16,1], index: 7, kind: output, shape index: {}]
  %s8 = sld [smem:[#allocation0]]
  $region62: #{tpu_custom_call.1} parent=0
    _
  %s10 = ssub.s32 1, %s8
  %s11 = scalar_select 0, %s10, %s8
  %12 = sst [smem:[#allocation2]] %s6
  $region1: #{tpu_custom_call.1} parent=0
    #allocation3 [shape = 'u8[245760]{0}', space=vmem, size = 0x3c000, scoped, tag = 'input window, operand 0, single buffered']
    #allocation4 [shape = 's32[1]{0}', space=sflag, size = 0x4, scoped, tag = 'scoped memory for tpu_custom_call.1']
    #allocation5 [shape = 'u8[1904640]{0}', space=vmem, size = 0x1d1000, scoped, tag = 'input window, operand 1, single buffered']
    #allocation6 [shape = 's32[1]{0}', space=sflag, size = 0x4, scoped, tag = 'scoped memory for tpu_custom_call.1']
    #allocation7 [shape = 'u8[1024]{0}', space=vmem, size = 0x400, scoped, tag = 'input window, operand 2, single buffered']
    #allocation8 [shape = 'u8[131072]{0}', space=vmem, size = 0x20000, scoped, tag = 'input window, operand 3, single buffered']
    #allocation9 [shape = 's32[1]{0}', space=sflag, size = 0x4, scoped, tag = 'scoped memory for tpu_custom_call.1']
    #allocation10 [shape = 'u8[1024]{0}', space=vmem, size = 0x400, scoped, tag = 'input window, operand 4, single buffered']
    #allocation11 [shape = 'u8[1024]{0}', space=vmem, size = 0x400, scoped, tag = 'input window, operand 5, single buffered']
    #allocation12 [shape = 's32[1]{0}', space=sflag, size = 0x4, scoped, tag = 'scoped memory for tpu_custom_call.1']
    %13 = vsyncpa [#allocation4], 0
    %14 = vsyncpa [#allocation6], 0
    %15 = vsyncpa [#allocation9], 0
    %16 = vsyncpa [#allocation12], 0
    // Predicated region
    $region2: #{tpu_custom_call.1} parent=1 // pred_check
      _
    $region3: #{tpu_custom_call.1} parent=1 // pred_check_branch
      %18 = sbr.rel (0) target = $region5
    $region4: #{tpu_custom_call.1} parent=1 // pred_region
      %s20 = ssub.s32 7680, 7680
      %21 = vsyncadd [#allocation4], %s20
      %s22 = sshll.u32 [#allocation3], 4
      %s23 = int_to_ptr.vmem [resolvable:$true] %s22
      %28 = dma.hbm_to_vmem [thread:$0]  %s0, 7680, %s23, [#allocation4], 3840, 3840, 240
    $region5: #{tpu_custom_call.1} parent=1 // pred_fallthru
      _
    // Predicated region
    $region6: #{tpu_custom_call.1} parent=1 // pred_check
      _
    $region7: #{tpu_custom_call.1} parent=1 // pred_check_branch
      %30 = sbr.rel (0) target = $region9
    $region8: #{tpu_custom_call.1} parent=1 // pred_region
      %s32 = ssub.s32 59520, 59520
      %33 = vsyncadd [#allocation6], %s32
      %s34 = sshll.u32 [#allocation5], 4
      %s35 = int_to_ptr.vmem [resolvable:$true] %s34
      %40 = dma.hbm_to_vmem [thread:$0]  %s1, 59520, %s35, [#allocation6], 128, 128, 8
    $region9: #{tpu_custom_call.1} parent=1 // pred_fallthru
      _
    // Predicated region
    $region10: #{tpu_custom_call.1} parent=1 // pred_check
      _
    $region11: #{tpu_custom_call.1} parent=1 // pred_check_branch
      %42 = sbr.rel (0) target = $region13
    $region12: #{tpu_custom_call.1} parent=1 // pred_region
      %s44 = ssub.s32 32, 32
      %45 = vsyncadd [#allocation6], %s44
      %s47 = sshll.u32 [#allocation7], 4
      %s48 = int_to_ptr.vmem [resolvable:$true] %s47
      %50 = dma.hbm_to_vmem [thread:$0]  %s2, 32, %s48, [#allocation6]
    $region13: #{tpu_custom_call.1} parent=1 // pred_fallthru
      _
    // Predicated region
    $region14: #{tpu_custom_call.1} parent=1 // pred_check
      _
    $region15: #{tpu_custom_call.1} parent=1 // pred_check_branch
      %52 = sbr.rel (0) target = $region17
    $region16: #{tpu_custom_call.1} parent=1 // pred_region
      %s54 = ssub.s32 4096, 4096
      %55 = vsyncadd [#allocation9], %s54
      %s56 = sshll.u32 [#allocation8], 4
      %s57 = int_to_ptr.vmem [resolvable:$true] %s56
      %62 = dma.hbm_to_vmem [thread:$0]  %s3, 4096, %s57, [#allocation9], 128, 128, 8
    $region17: #{tpu_custom_call.1} parent=1 // pred_fallthru
      _
    // Predicated region
    $region18: #{tpu_custom_call.1} parent=1 // pred_check
      _
    $region19: #{tpu_custom_call.1} parent=1 // pred_check_branch
      %64 = sbr.rel (0) target = $region21
    $region20: #{tpu_custom_call.1} parent=1 // pred_region
      %s66 = ssub.s32 32, 32
      %67 = vsyncadd [#allocation9], %s66
      %s69 = sshll.u32 [#allocation10], 4
      %s70 = int_to_ptr.vmem [resolvable:$true] %s69
      %72 = dma.hbm_to_vmem [thread:$0]  %s4, 32, %s70, [#allocation9]
    $region21: #{tpu_custom_call.1} parent=1 // pred_fallthru
      _
    // Predicated region
    $region22: #{tpu_custom_call.1} parent=1 // pred_check
      _
    $region23: #{tpu_custom_call.1} parent=1 // pred_check_branch
      %74 = sbr.rel (0) target = $region25
    $region24: #{tpu_custom_call.1} parent=1 // pred_region
      %s76 = ssub.s32 32, 32
      %77 = vsyncadd [#allocation12], %s76
      %s79 = sshll.u32 [#allocation11], 4
      %s80 = int_to_ptr.vmem [resolvable:$true] %s79
      %82 = dma.hbm_to_vmem [thread:$0]  %s5, 32, %s80, [#allocation12]
    $region25: #{tpu_custom_call.1} parent=1 // pred_fallthru
      _
    // Predicated region
    $region26: #{tpu_custom_call.1} parent=1 // pred_check
      _
    $region27: #{tpu_custom_call.1} parent=1 // pred_check_branch
      %84 = sbr.rel (0) target = $region29
    $region28: #{tpu_custom_call.1} parent=1 // pred_region
      _
    $region29: #{tpu_custom_call.1} parent=1 // pred_fallthru
      _
    // Predicated region
    $region30: #{tpu_custom_call.1} parent=1 // pred_check
      _
    $region31: #{tpu_custom_call.1} parent=1 // pred_check_branch
      %86 = sbr.rel (0) target = $region33
    $region32: #{tpu_custom_call.1} parent=1 // pred_region
      %87 = dma.done [#allocation4], 7680
    $region33: #{tpu_custom_call.1} parent=1 // pred_fallthru
      _
    // Predicated region
    $region34: #{tpu_custom_call.1} parent=1 // pred_check
      _
    $region35: #{tpu_custom_call.1} parent=1 // pred_check_branch
      %89 = sbr.rel (0) target = $region37
    $region36: #{tpu_custom_call.1} parent=1 // pred_region
      %90 = dma.done [#allocation6], 59520
    $region37: #{tpu_custom_call.1} parent=1 // pred_fallthru
      _
    // Predicated region
    $region38: #{tpu_custom_call.1} parent=1 // pred_check
      _
    $region39: #{tpu_custom_call.1} parent=1 // pred_check_branch
      %92 = sbr.rel (0) target = $region41
    $region40: #{tpu_custom_call.1} parent=1 // pred_region
      %93 = dma.done [#allocation6], 32
    $region41: #{tpu_custom_call.1} parent=1 // pred_fallthru
      _
    // Predicated region
    $region42: #{tpu_custom_call.1} parent=1 // pred_check
      _
    $region43: #{tpu_custom_call.1} parent=1 // pred_check_branch
      %95 = sbr.rel (0) target = $region45
    $region44: #{tpu_custom_call.1} parent=1 // pred_region
      %96 = dma.done [#allocation9], 4096
    $region45: #{tpu_custom_call.1} parent=1 // pred_fallthru
      _
    // Predicated region
    $region46: #{tpu_custom_call.1} parent=1 // pred_check
      _
    $region47: #{tpu_custom_call.1} parent=1 // pred_check_branch
      %98 = sbr.rel (0) target = $region49
    $region48: #{tpu_custom_call.1} parent=1 // pred_region
      %99 = dma.done [#allocation9], 32
    $region49: #{tpu_custom_call.1} parent=1 // pred_fallthru
      _
    // Predicated region
    $region50: #{tpu_custom_call.1} parent=1 // pred_check
      _
    $region51: #{tpu_custom_call.1} parent=1 // pred_check_branch
      %101 = sbr.rel (0) target = $region53
    $region52: #{tpu_custom_call.1} parent=1 // pred_region
      %102 = dma.done [#allocation12], 32
    $region53: #{tpu_custom_call.1} parent=1 // pred_fallthru
      _
    %v104 = vld [vmem:[#allocation3] sm:$0xff]
    %v105 = vld [vmem:[#allocation3 + $0x8] sm:$0xff]
    %v106 = vld [vmem:[#allocation3 + $0x10] sm:$0xff]
    %v107 = vld [vmem:[#allocation3 + $0x18] sm:$0xff]
    %v108 = vld [vmem:[#allocation3 + $0x20] sm:$0xff]
    %v109 = vld [vmem:[#allocation3 + $0x28] sm:$0xff]
    %v110 = vld [vmem:[#allocation3 + $0x30] sm:$0xff]
    %v111 = vld [vmem:[#allocation3 + $0x38] sm:$0xff]
    %v112 = vld [vmem:[#allocation3 + $0x40] sm:$0xff]
    %v113 = vld [vmem:[#allocation3 + $0x48] sm:$0xff]
    %v114 = vld [vmem:[#allocation3 + $0x50] sm:$0xff]
    %v115 = vld [vmem:[#allocation3 + $0x58] sm:$0xff]
    %v116 = vld [vmem:[#allocation3 + $0x60] sm:$0xff]
    %v117 = vld [vmem:[#allocation3 + $0x68] sm:$0xff]
    %v118 = vld [vmem:[#allocation3 + $0x70] sm:$0xff]
    %v119 = vld [vmem:[#allocation3 + $0x78] sm:$0xff]
    %v120 = vld [vmem:[#allocation3 + $0x80] sm:$0xff]
    %v121 = vld [vmem:[#allocation3 + $0x88] sm:$0xff]
    %v122 = vld [vmem:[#allocation3 + $0x90] sm:$0xff]
    %v123 = vld [vmem:[#allocation3 + $0x98] sm:$0xff]
    %v124 = vld [vmem:[#allocation3 + $0xa0] sm:$0xff]
    %v125 = vld [vmem:[#allocation3 + $0xa8] sm:$0xff]
    %v126 = vld [vmem:[#allocation3 + $0xb0] sm:$0xff]
    %v127 = vld [vmem:[#allocation3 + $0xb8] sm:$0xff]
    %v128 = vld [vmem:[#allocation3 + $0xc0] sm:$0xff]
    %v129 = vld [vmem:[#allocation3 + $0xc8] sm:$0xff]
    %v130 = vld [vmem:[#allocation3 + $0xd0] sm:$0xff]
    %v131 = vld [vmem:[#allocation3 + $0xd8] sm:$0xff]
    %v132 = vld [vmem:[#allocation3 + $0xe0] sm:$0xff]
    %v133 = vld [vmem:[#allocation3 + $0xe8] sm:$0xff]
    %v134 = vld [vmem:[#allocation3 + $0xf0] sm:$0xff]
    %v135 = vld [vmem:[#allocation3 + $0xf8] sm:$0xff]
    %v136 = vld [vmem:[#allocation3 + $0x100] sm:$0xff]
    %v137 = vld [vmem:[#allocation3 + $0x108] sm:$0xff]
    %v138 = vld [vmem:[#allocation3 + $0x110] sm:$0xff]
    %v139 = vld [vmem:[#allocation3 + $0x118] sm:$0xff]
    %v140 = vld [vmem:[#allocation3 + $0x120] sm:$0xff]
    %v141 = vld [vmem:[#allocation3 + $0x128] sm:$0xff]
    %v142 = vld [vmem:[#allocation3 + $0x130] sm:$0xff]
    %v143 = vld [vmem:[#allocation3 + $0x138] sm:$0xff]
    %v144 = vld [vmem:[#allocation3 + $0x140] sm:$0xff]
    %v145 = vld [vmem:[#allocation3 + $0x148] sm:$0xff]
    %v146 = vld [vmem:[#allocation3 + $0x150] sm:$0xff]
    %v147 = vld [vmem:[#allocation3 + $0x158] sm:$0xff]
    %v148 = vld [vmem:[#allocation3 + $0x160] sm:$0xff]
    %v149 = vld [vmem:[#allocation3 + $0x168] sm:$0xff]
    %v150 = vld [vmem:[#allocation3 + $0x170] sm:$0xff]
    %v151 = vld [vmem:[#allocation3 + $0x178] sm:$0xff]
    %v152 = vld [vmem:[#allocation3 + $0x180] sm:$0xff]
    %v153 = vld [vmem:[#allocation3 + $0x188] sm:$0xff]
    %v154 = vld [vmem:[#allocation3 + $0x190] sm:$0xff]
    %v155 = vld [vmem:[#allocation3 + $0x198] sm:$0xff]
    %v156 = vld [vmem:[#allocation3 + $0x1a0] sm:$0xff]
    %v157 = vld [vmem:[#allocation3 + $0x1a8] sm:$0xff]
    %v158 = vld [vmem:[#allocation3 + $0x1b0] sm:$0xff]
    %v159 = vld [vmem:[#allocation3 + $0x1b8] sm:$0xff]
    %v160 = vld [vmem:[#allocation3 + $0x1c0] sm:$0xff]
    %v161 = vld [vmem:[#allocation3 + $0x1c8] sm:$0xff]
    %v162 = vld [vmem:[#allocation3 + $0x1d0] sm:$0xff]
    %v163 = vld [vmem:[#allocation3 + $0x1d8] sm:$0xff]
    %v164 = vpack.c.bf16 %v134, %v104
    %v165 = vpack.c.bf16 %v135, %v105
    %v166 = vpack.c.bf16 %v136, %v106
    %v167 = vpack.c.bf16 %v137, %v107
    %v168 = vpack.c.bf16 %v138, %v108
    %v169 = vpack.c.bf16 %v139, %v109
    %v170 = vpack.c.bf16 %v140, %v110
    %v171 = vpack.c.bf16 %v141, %v111
    %v172 = vpack.c.bf16 %v142, %v112
    %v173 = vpack.c.bf16 %v143, %v113
    %v174 = vpack.c.bf16 %v144, %v114
    %v175 = vpack.c.bf16 %v145, %v115
    %v176 = vpack.c.bf16 %v146, %v116
    %v177 = vpack.c.bf16 %v147, %v117
    %v178 = vpack.c.bf16 %v148, %v118
    %v179 = vpack.c.bf16 %v149, %v119
    %v180 = vpack.c.bf16 %v150, %v120
    %v181 = vpack.c.bf16 %v151, %v121
    %v182 = vpack.c.bf16 %v152, %v122
    %v183 = vpack.c.bf16 %v153, %v123
    %v184 = vpack.c.bf16 %v154, %v124
    %v185 = vpack.c.bf16 %v155, %v125
    %v186 = vpack.c.bf16 %v156, %v126
    %v187 = vpack.c.bf16 %v157, %v127
    %v188 = vpack.c.bf16 %v158, %v128
    %v189 = vpack.c.bf16 %v159, %v129
    %v190 = vpack.c.bf16 %v160, %v130
    %v191 = vpack.c.bf16 %v161, %v131
    %v192 = vpack.c.bf16 %v162, %v132
    %v193 = vpack.c.bf16 %v163, %v133
    %v194 = vld [vmem:[#allocation5] sm:$0xff]
    %v195 = vld [vmem:[#allocation5 + $0x8] sm:$0xff]
    %v196 = vld [vmem:[#allocation5 + $0x10] sm:$0xff]
    %v197 = vld [vmem:[#allocation5 + $0x18] sm:$0xff]
    %v198 = vld [vmem:[#allocation5 + $0x20] sm:$0xff]
    %v199 = vld [vmem:[#allocation5 + $0x28] sm:$0xff]
    %v200 = vld [vmem:[#allocation5 + $0x30] sm:$0xff]
    %v201 = vld [vmem:[#allocation5 + $0x38] sm:$0xff]
    %v202 = vld [vmem:[#allocation5 + $0x40] sm:$0xff]
    %v203 = vld [vmem:[#allocation5 + $0x48] sm:$0xff]
    %v204 = vld [vmem:[#allocation5 + $0x50] sm:$0xff]
    %v205 = vld [vmem:[#allocation5 + $0x58] sm:$0xff]
    %v206 = vld [vmem:[#allocation5 + $0x60] sm:$0xff]
    %v207 = vld [vmem:[#allocation5 + $0x68] sm:$0xff]
    %v208 = vld [vmem:[#allocation5 + $0x70] sm:$0xff]
    %v209 = vld [vmem:[#allocation5 + $0x78] sm:$0xff]
    %v210 = vld [vmem:[#allocation5 + $0x80] sm:$0xff]
    %v211 = vld [vmem:[#allocation5 + $0x88] sm:$0xff]
    %v212 = vld [vmem:[#allocation5 + $0x90] sm:$0xff]
    %v213 = vld [vmem:[#allocation5 + $0x98] sm:$0xff]
    %v214 = vld [vmem:[#allocation5 + $0xa0] sm:$0xff]
    %v215 = vld [vmem:[#allocation5 + $0xa8] sm:$0xff]
    %v216 = vld [vmem:[#allocation5 + $0xb0] sm:$0xff]
    %v217 = vld [vmem:[#allocation5 + $0xb8] sm:$0xff]
    %v218 = vld [vmem:[#allocation5 + $0xc0] sm:$0xff]
    %v219 = vld [vmem:[#allocation5 + $0xc8] sm:$0xff]
    %v220 = vld [vmem:[#allocation5 + $0xd0] sm:$0xff]
    %v221 = vld [vmem:[#allocation5 + $0xd8] sm:$0xff]
    %v222 = vld [vmem:[#allocation5 + $0xe0] sm:$0xff]
    %v223 = vld [vmem:[#allocation5 + $0xe8] sm:$0xff]
    %v224 = vld [vmem:[#allocation5 + $0xf0] sm:$0xff]
    %v225 = vld [vmem:[#allocation5 + $0xf8] sm:$0xff]
    %v226 = vld [vmem:[#allocation5 + $0x100] sm:$0xff]
    %v227 = vld [vmem:[#allocation5 + $0x108] sm:$0xff]
    %v228 = vld [vmem:[#allocation5 + $0x110] sm:$0xff]
    %v229 = vld [vmem:[#allocation5 + $0x118] sm:$0xff]
    %v230 = vld [vmem:[#allocation5 + $0x120] sm:$0xff]
    %v231 = vld [vmem:[#allocation5 + $0x128] sm:$0xff]
    %v232 = vld [vmem:[#allocation5 + $0x130] sm:$0xff]
    %v233 = vld [vmem:[#allocation5 + $0x138] sm:$0xff]
    %v234 = vld [vmem:[#allocation5 + $0x140] sm:$0xff]
    %v235 = vld [vmem:[#allocation5 + $0x148] sm:$0xff]
    %v236 = vld [vmem:[#allocation5 + $0x150] sm:$0xff]
    %v237 = vld [vmem:[#allocation5 + $0x158] sm:$0xff]
    %v238 = vld [vmem:[#allocation5 + $0x160] sm:$0xff]
    %v239 = vld [vmem:[#allocation5 + $0x168] sm:$0xff]
    %v240 = vld [vmem:[#allocation5 + $0x170] sm:$0xff]
    %v241 = vld [vmem:[#allocation5 + $0x178] sm:$0xff]
    %v242 = vld [vmem:[#allocation5 + $0x180] sm:$0xff]
    %v243 = vld [vmem:[#allocation5 + $0x188] sm:$0xff]
    %v244 = vld [vmem:[#allocation5 + $0x190] sm:$0xff]
    %v245 = vld [vmem:[#allocation5 + $0x198] sm:$0xff]
    %v246 = vld [vmem:[#allocation5 + $0x1a0] sm:$0xff]
    %v247 = vld [vmem:[#allocation5 + $0x1a8] sm:$0xff]
    %v248 = vld [vmem:[#allocation5 + $0x1b0] sm:$0xff]
    %v249 = vld [vmem:[#allocation5 + $0x1b8] sm:$0xff]
    %v250 = vld [vmem:[#allocation5 + $0x1c0] sm:$0xff]
    %v251 = vld [vmem:[#allocation5 + $0x1c8] sm:$0xff]
    %v252 = vld [vmem:[#allocation5 + $0x1d0] sm:$0xff]
    %v253 = vld [vmem:[#allocation5 + $0x1d8] sm:$0xff]
    %v254 = vld [vmem:[#allocation5 + $0x1e0] sm:$0xff]
    %v255 = vld [vmem:[#allocation5 + $0x1e8] sm:$0xff]
    %v256 = vld [vmem:[#allocation5 + $0x1f0] sm:$0xff]
    %v257 = vld [vmem:[#allocation5 + $0x1f8] sm:$0xff]
    %v258 = vld [vmem:[#allocation5 + $0x200] sm:$0xff]
    %v259 = vld [vmem:[#allocation5 + $0x208] sm:$0xff]
    %v260 = vld [vmem:[#allocation5 + $0x210] sm:$0xff]
    %v261 = vld [vmem:[#allocation5 + $0x218] sm:$0xff]
    %v262 = vld [vmem:[#allocation5 + $0x220] sm:$0xff]
    %v263 = vld [vmem:[#allocation5 + $0x228] sm:$0xff]
    %v264 = vld [vmem:[#allocation5 + $0x230] sm:$0xff]
    %v265 = vld [vmem:[#allocation5 + $0x238] sm:$0xff]
    %v266 = vld [vmem:[#allocation5 + $0x240] sm:$0xff]
    %v267 = vld [vmem:[#allocation5 + $0x248] sm:$0xff]
    %v268 = vld [vmem:[#allocation5 + $0x250] sm:$0xff]
    %v269 = vld [vmem:[#allocation5 + $0x258] sm:$0xff]
    %v270 = vld [vmem:[#allocation5 + $0x260] sm:$0xff]
    %v271 = vld [vmem:[#allocation5 + $0x268] sm:$0xff]
    %v272 = vld [vmem:[#allocation5 + $0x270] sm:$0xff]
    %v273 = vld [vmem:[#allocation5 + $0x278] sm:$0xff]
    %v274 = vld [vmem:[#allocation5 + $0x280] sm:$0xff]
    %v275 = vld [vmem:[#allocation5 + $0x288] sm:$0xff]
    %v276 = vld [vmem:[#allocation5 + $0x290] sm:$0xff]
    %v277 = vld [vmem:[#allocation5 + $0x298] sm:$0xff]
    %v278 = vld [vmem:[#allocation5 + $0x2a0] sm:$0xff]
    %v279 = vld [vmem:[#allocation5 + $0x2a8] sm:$0xff]
    %v280 = vld [vmem:[#allocation5 + $0x2b0] sm:$0xff]
    %v281 = vld [vmem:[#allocation5 + $0x2b8] sm:$0xff]
    %v282 = vld [vmem:[#allocation5 + $0x2c0] sm:$0xff]
    %v283 = vld [vmem:[#allocation5 + $0x2c8] sm:$0xff]
    %v284 = vld [vmem:[#allocation5 + $0x2d0] sm:$0xff]
    %v285 = vld [vmem:[#allocation5 + $0x2d8] sm:$0xff]
    %v286 = vld [vmem:[#allocation5 + $0x2e0] sm:$0xff]
    %v287 = vld [vmem:[#allocation5 + $0x2e8] sm:$0xff]
    %v288 = vld [vmem:[#allocation5 + $0x2f0] sm:$0xff]
    %v289 = vld [vmem:[#allocation5 + $0x2f8] sm:$0xff]
    %v290 = vld [vmem:[#allocation5 + $0x300] sm:$0xff]
    %v291 = vld [vmem:[#allocation5 + $0x308] sm:$0xff]
    %v292 = vld [vmem:[#allocation5 + $0x310] sm:$0xff]
    %v293 = vld [vmem:[#allocation5 + $0x318] sm:$0xff]
    %v294 = vld [vmem:[#allocation5 + $0x320] sm:$0xff]
    %v295 = vld [vmem:[#allocation5 + $0x328] sm:$0xff]
    %v296 = vld [vmem:[#allocation5 + $0x330] sm:$0xff]
    %v297 = vld [vmem:[#allocation5 + $0x338] sm:$0xff]
    %v298 = vld [vmem:[#allocation5 + $0x340] sm:$0xff]
    %v299 = vld [vmem:[#allocation5 + $0x348] sm:$0xff]
    %v300 = vld [vmem:[#allocation5 + $0x350] sm:$0xff]
    %v301 = vld [vmem:[#allocation5 + $0x358] sm:$0xff]
    %v302 = vld [vmem:[#allocation5 + $0x360] sm:$0xff]
    %v303 = vld [vmem:[#allocation5 + $0x368] sm:$0xff]
    %v304 = vld [vmem:[#allocation5 + $0x370] sm:$0xff]
    %v305 = vld [vmem:[#allocation5 + $0x378] sm:$0xff]
    %v306 = vld [vmem:[#allocation5 + $0x380] sm:$0xff]
    %v307 = vld [vmem:[#allocation5 + $0x388] sm:$0xff]
    %v308 = vld [vmem:[#allocation5 + $0x390] sm:$0xff]
    %v309 = vld [vmem:[#allocation5 + $0x398] sm:$0xff]
    %v310 = vld [vmem:[#allocation5 + $0x3a0] sm:$0xff]
    %v311 = vld [vmem:[#allocation5 + $0x3a8] sm:$0xff]
    %v312 = vld [vmem:[#allocation5 + $0x3b0] sm:$0xff]
    %v313 = vld [vmem:[#allocation5 + $0x3b8] sm:$0xff]
    %v314 = vld [vmem:[#allocation5 + $0x3c0] sm:$0xff]
    %v315 = vld [vmem:[#allocation5 + $0x3c8] sm:$0xff]
    %v316 = vld [vmem:[#allocation5 + $0x3d0] sm:$0xff]
    %v317 = vld [vmem:[#allocation5 + $0x3d8] sm:$0xff]
    %v318 = vld [vmem:[#allocation5 + $0x3e0] sm:$0xff]
    %v319 = vld [vmem:[#allocation5 + $0x3e8] sm:$0xff]
    %v320 = vld [vmem:[#allocation5 + $0x3f0] sm:$0xff]
    %v321 = vld [vmem:[#allocation5 + $0x3f8] sm:$0xff]
    %v322 = vld [vmem:[#allocation5 + $0x400] sm:$0xff]
    %v323 = vld [vmem:[#allocation5 + $0x408] sm:$0xff]
    %v324 = vld [vmem:[#allocation5 + $0x410] sm:$0xff]
    %v325 = vld [vmem:[#allocation5 + $0x418] sm:$0xff]
    %v326 = vld [vmem:[#allocation5 + $0x420] sm:$0xff]
    %v327 = vld [vmem:[#allocation5 + $0x428] sm:$0xff]
    %v328 = vld [vmem:[#allocation5 + $0x430] sm:$0xff]
    %v329 = vld [vmem:[#allocation5 + $0x438] sm:$0xff]
    %v330 = vld [vmem:[#allocation5 + $0x440] sm:$0xff]
    %v331 = vld [vmem:[#allocation5 + $0x448] sm:$0xff]
    %v332 = vld [vmem:[#allocation5 + $0x450] sm:$0xff]
    %v333 = vld [vmem:[#allocation5 + $0x458] sm:$0xff]
    %v334 = vld [vmem:[#allocation5 + $0x460] sm:$0xff]
    %v335 = vld [vmem:[#allocation5 + $0x468] sm:$0xff]
    %v336 = vld [vmem:[#allocation5 + $0x470] sm:$0xff]
    %v337 = vld [vmem:[#allocation5 + $0x478] sm:$0xff]
    %v338 = vld [vmem:[#allocation5 + $0x480] sm:$0xff]
    %v339 = vld [vmem:[#allocation5 + $0x488] sm:$0xff]
    %v340 = vld [vmem:[#allocation5 + $0x490] sm:$0xff]
    %v341 = vld [vmem:[#allocation5 + $0x498] sm:$0xff]
    %v342 = vld [vmem:[#allocation5 + $0x4a0] sm:$0xff]
    %v343 = vld [vmem:[#allocation5 + $0x4a8] sm:$0xff]
    %v344 = vld [vmem:[#allocation5 + $0x4b0] sm:$0xff]
    %v345 = vld [vmem:[#allocation5 + $0x4b8] sm:$0xff]
    %v346 = vld [vmem:[#allocation5 + $0x4c0] sm:$0xff]
    %v347 = vld [vmem:[#allocation5 + $0x4c8] sm:$0xff]
    %v348 = vld [vmem:[#allocation5 + $0x4d0] sm:$0xff]
    %v349 = vld [vmem:[#allocation5 + $0x4d8] sm:$0xff]
    %v350 = vld [vmem:[#allocation5 + $0x4e0] sm:$0xff]
    %v351 = vld [vmem:[#allocation5 + $0x4e8] sm:$0xff]
    %v352 = vld [vmem:[#allocation5 + $0x4f0] sm:$0xff]
    %v353 = vld [vmem:[#allocation5 + $0x4f8] sm:$0xff]
    %v354 = vld [vmem:[#allocation5 + $0x500] sm:$0xff]
    %v355 = vld [vmem:[#allocation5 + $0x508] sm:$0xff]
    %v356 = vld [vmem:[#allocation5 + $0x510] sm:$0xff]
    %v357 = vld [vmem:[#allocation5 + $0x518] sm:$0xff]
    %v358 = vld [vmem:[#allocation5 + $0x520] sm:$0xff]
    %v359 = vld [vmem:[#allocation5 + $0x528] sm:$0xff]
    %v360 = vld [vmem:[#allocation5 + $0x530] sm:$0xff]
    %v361 = vld [vmem:[#allocation5 + $0x538] sm:$0xff]
    %v362 = vld [vmem:[#allocation5 + $0x540] sm:$0xff]
    %v363 = vld [vmem:[#allocation5 + $0x548] sm:$0xff]
    %v364 = vld [vmem:[#allocation5 + $0x550] sm:$0xff]
    %v365 = vld [vmem:[#allocation5 + $0x558] sm:$0xff]
    %v366 = vld [vmem:[#allocation5 + $0x560] sm:$0xff]
    %v367 = vld [vmem:[#allocation5 + $0x568] sm:$0xff]
    %v368 = vld [vmem:[#allocation5 + $0x570] sm:$0xff]
    %v369 = vld [vmem:[#allocation5 + $0x578] sm:$0xff]
    %v370 = vld [vmem:[#allocation5 + $0x580] sm:$0xff]
    %v371 = vld [vmem:[#allocation5 + $0x588] sm:$0xff]
    %v372 = vld [vmem:[#allocation5 + $0x590] sm:$0xff]
    %v373 = vld [vmem:[#allocation5 + $0x598] sm:$0xff]
    %v374 = vld [vmem:[#allocation5 + $0x5a0] sm:$0xff]
    %v375 = vld [vmem:[#allocation5 + $0x5a8] sm:$0xff]
    %v376 = vld [vmem:[#allocation5 + $0x5b0] sm:$0xff]
    %v377 = vld [vmem:[#allocation5 + $0x5b8] sm:$0xff]
    %v378 = vld [vmem:[#allocation5 + $0x5c0] sm:$0xff]
    %v379 = vld [vmem:[#allocation5 + $0x5c8] sm:$0xff]
    %v380 = vld [vmem:[#allocation5 + $0x5d0] sm:$0xff]
    %v381 = vld [vmem:[#allocation5 + $0x5d8] sm:$0xff]
    %v382 = vld [vmem:[#allocation5 + $0x5e0] sm:$0xff]
    %v383 = vld [vmem:[#allocation5 + $0x5e8] sm:$0xff]
    %v384 = vld [vmem:[#allocation5 + $0x5f0] sm:$0xff]
    %v385 = vld [vmem:[#allocation5 + $0x5f8] sm:$0xff]
    %v386 = vld [vmem:[#allocation5 + $0x600] sm:$0xff]
    %v387 = vld [vmem:[#allocation5 + $0x608] sm:$0xff]
    %v388 = vld [vmem:[#allocation5 + $0x610] sm:$0xff]
    %v389 = vld [vmem:[#allocation5 + $0x618] sm:$0xff]
    %v390 = vld [vmem:[#allocation5 + $0x620] sm:$0xff]
    %v391 = vld [vmem:[#allocation5 + $0x628] sm:$0xff]
    %v392 = vld [vmem:[#allocation5 + $0x630] sm:$0xff]
    %v393 = vld [vmem:[#allocation5 + $0x638] sm:$0xff]
    %v394 = vld [vmem:[#allocation5 + $0x640] sm:$0xff]
    %v395 = vld [vmem:[#allocation5 + $0x648] sm:$0xff]
    %v396 = vld [vmem:[#allocation5 + $0x650] sm:$0xff]
    %v397 = vld [vmem:[#allocation5 + $0x658] sm:$0xff]
    %v398 = vld [vmem:[#allocation5 + $0x660] sm:$0xff]
    %v399 = vld [vmem:[#allocation5 + $0x668] sm:$0xff]
    %v400 = vld [vmem:[#allocation5 + $0x670] sm:$0xff]
    %v401 = vld [vmem:[#allocation5 + $0x678] sm:$0xff]
    %v402 = vld [vmem:[#allocation5 + $0x680] sm:$0xff]
    %v403 = vld [vmem:[#allocation5 + $0x688] sm:$0xff]
    %v404 = vld [vmem:[#allocation5 + $0x690] sm:$0xff]
    %v405 = vld [vmem:[#allocation5 + $0x698] sm:$0xff]
    %v406 = vld [vmem:[#allocation5 + $0x6a0] sm:$0xff]
    %v407 = vld [vmem:[#allocation5 + $0x6a8] sm:$0xff]
    %v408 = vld [vmem:[#allocation5 + $0x6b0] sm:$0xff]
    %v409 = vld [vmem:[#allocation5 + $0x6b8] sm:$0xff]
    %v410 = vld [vmem:[#allocation5 + $0x6c0] sm:$0xff]
    %v411 = vld [vmem:[#allocation5 + $0x6c8] sm:$0xff]
    %v412 = vld [vmem:[#allocation5 + $0x6d0] sm:$0xff]
    %v413 = vld [vmem:[#allocation5 + $0x6d8] sm:$0xff]
    %v414 = vld [vmem:[#allocation5 + $0x6e0] sm:$0xff]
    %v415 = vld [vmem:[#allocation5 + $0x6e8] sm:$0xff]
    %v416 = vld [vmem:[#allocation5 + $0x6f0] sm:$0xff]
    %v417 = vld [vmem:[#allocation5 + $0x6f8] sm:$0xff]
    %v418 = vld [vmem:[#allocation5 + $0x700] sm:$0xff]
    %v419 = vld [vmem:[#allocation5 + $0x708] sm:$0xff]
    %v420 = vld [vmem:[#allocation5 + $0x710] sm:$0xff]
    %v421 = vld [vmem:[#allocation5 + $0x718] sm:$0xff]
    %v422 = vld [vmem:[#allocation5 + $0x720] sm:$0xff]
    %v423 = vld [vmem:[#allocation5 + $0x728] sm:$0xff]
    %v424 = vld [vmem:[#allocation5 + $0x730] sm:$0xff]
    %v425 = vld [vmem:[#allocation5 + $0x738] sm:$0xff]
    %v426 = vld [vmem:[#allocation5 + $0x740] sm:$0xff]
    %v427 = vld [vmem:[#allocation5 + $0x748] sm:$0xff]
    %v428 = vld [vmem:[#allocation5 + $0x750] sm:$0xff]
    %v429 = vld [vmem:[#allocation5 + $0x758] sm:$0xff]
    %v430 = vld [vmem:[#allocation5 + $0x760] sm:$0xff]
    %v431 = vld [vmem:[#allocation5 + $0x768] sm:$0xff]
    %v432 = vld [vmem:[#allocation5 + $0x770] sm:$0xff]
    %v433 = vld [vmem:[#allocation5 + $0x778] sm:$0xff]
    %v434 = vld [vmem:[#allocation5 + $0x780] sm:$0xff]
    %v435 = vld [vmem:[#allocation5 + $0x788] sm:$0xff]
    %v436 = vld [vmem:[#allocation5 + $0x790] sm:$0xff]
    %v437 = vld [vmem:[#allocation5 + $0x798] sm:$0xff]
    %v438 = vld [vmem:[#allocation5 + $0x7a0] sm:$0xff]
    %v439 = vld [vmem:[#allocation5 + $0x7a8] sm:$0xff]
    %v440 = vld [vmem:[#allocation5 + $0x7b0] sm:$0xff]
    %v441 = vld [vmem:[#allocation5 + $0x7b8] sm:$0xff]
    %v442 = vld [vmem:[#allocation5 + $0x7c0] sm:$0xff]
    %v443 = vld [vmem:[#allocation5 + $0x7c8] sm:$0xff]
    %v444 = vld [vmem:[#allocation5 + $0x7d0] sm:$0xff]
    %v445 = vld [vmem:[#allocation5 + $0x7d8] sm:$0xff]
    %v446 = vld [vmem:[#allocation5 + $0x7e0] sm:$0xff]
    %v447 = vld [vmem:[#allocation5 + $0x7e8] sm:$0xff]
    %v448 = vld [vmem:[#allocation5 + $0x7f0] sm:$0xff]
    %v449 = vld [vmem:[#allocation5 + $0x7f8] sm:$0xff]
    %v450 = vld [vmem:[#allocation5 + $0x800] sm:$0xff]
    %v451 = vld [vmem:[#allocation5 + $0x808] sm:$0xff]
    %v452 = vld [vmem:[#allocation5 + $0x810] sm:$0xff]
    %v453 = vld [vmem:[#allocation5 + $0x818] sm:$0xff]
    %v454 = vld [vmem:[#allocation5 + $0x820] sm:$0xff]
    %v455 = vld [vmem:[#allocation5 + $0x828] sm:$0xff]
    %v456 = vld [vmem:[#allocation5 + $0x830] sm:$0xff]
    %v457 = vld [vmem:[#allocation5 + $0x838] sm:$0xff]
    %v458 = vld [vmem:[#allocation5 + $0x840] sm:$0xff]
    %v459 = vld [vmem:[#allocation5 + $0x848] sm:$0xff]
    %v460 = vld [vmem:[#allocation5 + $0x850] sm:$0xff]
    %v461 = vld [vmem:[#allocation5 + $0x858] sm:$0xff]
    %v462 = vld [vmem:[#allocation5 + $0x860] sm:$0xff]
    %v463 = vld [vmem:[#allocation5 + $0x868] sm:$0xff]
    %v464 = vld [vmem:[#allocation5 + $0x870] sm:$0xff]
    %v465 = vld [vmem:[#allocation5 + $0x878] sm:$0xff]
    %v466 = vld [vmem:[#allocation5 + $0x880] sm:$0xff]
    %v467 = vld [vmem:[#allocation5 + $0x888] sm:$0xff]
    %v468 = vld [vmem:[#allocation5 + $0x890] sm:$0xff]
    %v469 = vld [vmem:[#allocation5 + $0x898] sm:$0xff]
    %v470 = vld [vmem:[#allocation5 + $0x8a0] sm:$0xff]
    %v471 = vld [vmem:[#allocation5 + $0x8a8] sm:$0xff]
    %v472 = vld [vmem:[#allocation5 + $0x8b0] sm:$0xff]
    %v473 = vld [vmem:[#allocation5 + $0x8b8] sm:$0xff]
    %v474 = vld [vmem:[#allocation5 + $0x8c0] sm:$0xff]
    %v475 = vld [vmem:[#allocation5 + $0x8c8] sm:$0xff]
    %v476 = vld [vmem:[#allocation5 + $0x8d0] sm:$0xff]
    %v477 = vld [vmem:[#allocation5 + $0x8d8] sm:$0xff]
    %v478 = vld [vmem:[#allocation5 + $0x8e0] sm:$0xff]
    %v479 = vld [vmem:[#allocation5 + $0x8e8] sm:$0xff]
    %v480 = vld [vmem:[#allocation5 + $0x8f0] sm:$0xff]
    %v481 = vld [vmem:[#allocation5 + $0x8f8] sm:$0xff]
    %v482 = vld [vmem:[#allocation5 + $0x900] sm:$0xff]
    %v483 = vld [vmem:[#allocation5 + $0x908] sm:$0xff]
    %v484 = vld [vmem:[#allocation5 + $0x910] sm:$0xff]
    %v485 = vld [vmem:[#allocation5 + $0x918] sm:$0xff]
    %v486 = vld [vmem:[#allocation5 + $0x920] sm:$0xff]
    %v487 = vld [vmem:[#allocation5 + $0x928] sm:$0xff]
    %v488 = vld [vmem:[#allocation5 + $0x930] sm:$0xff]
    %v489 = vld [vmem:[#allocation5 + $0x938] sm:$0xff]
    %v490 = vld [vmem:[#allocation5 + $0x940] sm:$0xff]
    %v491 = vld [vmem:[#allocation5 + $0x948] sm:$0xff]
    %v492 = vld [vmem:[#allocation5 + $0x950] sm:$0xff]
    %v493 = vld [vmem:[#allocation5 + $0x958] sm:$0xff]
    %v494 = vld [vmem:[#allocation5 + $0x960] sm:$0xff]
    %v495 = vld [vmem:[#allocation5 + $0x968] sm:$0xff]
    %v496 = vld [vmem:[#allocation5 + $0x970] sm:$0xff]
    %v497 = vld [vmem:[#allocation5 + $0x978] sm:$0xff]
    %v498 = vld [vmem:[#allocation5 + $0x980] sm:$0xff]
    %v499 = vld [vmem:[#allocation5 + $0x988] sm:$0xff]
    %v500 = vld [vmem:[#allocation5 + $0x990] sm:$0xff]
    %v501 = vld [vmem:[#allocation5 + $0x998] sm:$0xff]
    %v502 = vld [vmem:[#allocation5 + $0x9a0] sm:$0xff]
    %v503 = vld [vmem:[#allocation5 + $0x9a8] sm:$0xff]
    %v504 = vld [vmem:[#allocation5 + $0x9b0] sm:$0xff]
    %v505 = vld [vmem:[#allocation5 + $0x9b8] sm:$0xff]
    %v506 = vld [vmem:[#allocation5 + $0x9c0] sm:$0xff]
    %v507 = vld [vmem:[#allocation5 + $0x9c8] sm:$0xff]
    %v508 = vld [vmem:[#allocation5 + $0x9d0] sm:$0xff]
    %v509 = vld [vmem:[#allocation5 + $0x9d8] sm:$0xff]
    %v510 = vld [vmem:[#allocation5 + $0x9e0] sm:$0xff]
    %v511 = vld [vmem:[#allocation5 + $0x9e8] sm:$0xff]
    %v512 = vld [vmem:[#allocation5 + $0x9f0] sm:$0xff]
    %v513 = vld [vmem:[#allocation5 + $0x9f8] sm:$0xff]
    %v514 = vld [vmem:[#allocation5 + $0xa00] sm:$0xff]
    %v515 = vld [vmem:[#allocation5 + $0xa08] sm:$0xff]
    %v516 = vld [vmem:[#allocation5 + $0xa10] sm:$0xff]
    %v517 = vld [vmem:[#allocation5 + $0xa18] sm:$0xff]
    %v518 = vld [vmem:[#allocation5 + $0xa20] sm:$0xff]
    %v519 = vld [vmem:[#allocation5 + $0xa28] sm:$0xff]
    %v520 = vld [vmem:[#allocation5 + $0xa30] sm:$0xff]
    %v521 = vld [vmem:[#allocation5 + $0xa38] sm:$0xff]
    %v522 = vld [vmem:[#allocation5 + $0xa40] sm:$0xff]
    %v523 = vld [vmem:[#allocation5 + $0xa48] sm:$0xff]
    %v524 = vld [vmem:[#allocation5 + $0xa50] sm:$0xff]
    %v525 = vld [vmem:[#allocation5 + $0xa58] sm:$0xff]
    %v526 = vld [vmem:[#allocation5 + $0xa60] sm:$0xff]
    %v527 = vld [vmem:[#allocation5 + $0xa68] sm:$0xff]
    %v528 = vld [vmem:[#allocation5 + $0xa70] sm:$0xff]
    %v529 = vld [vmem:[#allocation5 + $0xa78] sm:$0xff]
    %v530 = vld [vmem:[#allocation5 + $0xa80] sm:$0xff]
    %v531 = vld [vmem:[#allocation5 + $0xa88] sm:$0xff]
    %v532 = vld [vmem:[#allocation5 + $0xa90] sm:$0xff]
    %v533 = vld [vmem:[#allocation5 + $0xa98] sm:$0xff]
    %v534 = vld [vmem:[#allocation5 + $0xaa0] sm:$0xff]
    %v535 = vld [vmem:[#allocation5 + $0xaa8] sm:$0xff]
    %v536 = vld [vmem:[#allocation5 + $0xab0] sm:$0xff]
    %v537 = vld [vmem:[#allocation5 + $0xab8] sm:$0xff]
    %v538 = vld [vmem:[#allocation5 + $0xac0] sm:$0xff]
    %v539 = vld [vmem:[#allocation5 + $0xac8] sm:$0xff]
    %v540 = vld [vmem:[#allocation5 + $0xad0] sm:$0xff]
    %v541 = vld [vmem:[#allocation5 + $0xad8] sm:$0xff]
    %v542 = vld [vmem:[#allocation5 + $0xae0] sm:$0xff]
    %v543 = vld [vmem:[#allocation5 + $0xae8] sm:$0xff]
    %v544 = vld [vmem:[#allocation5 + $0xaf0] sm:$0xff]
    %v545 = vld [vmem:[#allocation5 + $0xaf8] sm:$0xff]
    %v546 = vld [vmem:[#allocation5 + $0xb00] sm:$0xff]
    %v547 = vld [vmem:[#allocation5 + $0xb08] sm:$0xff]
    %v548 = vld [vmem:[#allocation5 + $0xb10] sm:$0xff]
    %v549 = vld [vmem:[#allocation5 + $0xb18] sm:$0xff]
    %v550 = vld [vmem:[#allocation5 + $0xb20] sm:$0xff]
    %v551 = vld [vmem:[#allocation5 + $0xb28] sm:$0xff]
    %v552 = vld [vmem:[#allocation5 + $0xb30] sm:$0xff]
    %v553 = vld [vmem:[#allocation5 + $0xb38] sm:$0xff]
    %v554 = vld [vmem:[#allocation5 + $0xb40] sm:$0xff]
    %v555 = vld [vmem:[#allocation5 + $0xb48] sm:$0xff]
    %v556 = vld [vmem:[#allocation5 + $0xb50] sm:$0xff]
    %v557 = vld [vmem:[#allocation5 + $0xb58] sm:$0xff]
    %v558 = vld [vmem:[#allocation5 + $0xb60] sm:$0xff]
    %v559 = vld [vmem:[#allocation5 + $0xb68] sm:$0xff]
    %v560 = vld [vmem:[#allocation5 + $0xb70] sm:$0xff]
    %v561 = vld [vmem:[#allocation5 + $0xb78] sm:$0xff]
    %v562 = vld [vmem:[#allocation5 + $0xb80] sm:$0xff]
    %v563 = vld [vmem:[#allocation5 + $0xb88] sm:$0xff]
    %v564 = vld [vmem:[#allocation5 + $0xb90] sm:$0xff]
    %v565 = vld [vmem:[#allocation5 + $0xb98] sm:$0xff]
    %v566 = vld [vmem:[#allocation5 + $0xba0] sm:$0xff]
    %v567 = vld [vmem:[#allocation5 + $0xba8] sm:$0xff]
    %v568 = vld [vmem:[#allocation5 + $0xbb0] sm:$0xff]
    %v569 = vld [vmem:[#allocation5 + $0xbb8] sm:$0xff]
    %v570 = vld [vmem:[#allocation5 + $0xbc0] sm:$0xff]
    %v571 = vld [vmem:[#allocation5 + $0xbc8] sm:$0xff]
    %v572 = vld [vmem:[#allocation5 + $0xbd0] sm:$0xff]
    %v573 = vld [vmem:[#allocation5 + $0xbd8] sm:$0xff]
    %v574 = vld [vmem:[#allocation5 + $0xbe0] sm:$0xff]
    %v575 = vld [vmem:[#allocation5 + $0xbe8] sm:$0xff]
    %v576 = vld [vmem:[#allocation5 + $0xbf0] sm:$0xff]
    %v577 = vld [vmem:[#allocation5 + $0xbf8] sm:$0xff]
    %v578 = vld [vmem:[#allocation5 + $0xc00] sm:$0xff]
    %v579 = vld [vmem:[#allocation5 + $0xc08] sm:$0xff]
    %v580 = vld [vmem:[#allocation5 + $0xc10] sm:$0xff]
    %v581 = vld [vmem:[#allocation5 + $0xc18] sm:$0xff]
    %v582 = vld [vmem:[#allocation5 + $0xc20] sm:$0xff]
    %v583 = vld [vmem:[#allocation5 + $0xc28] sm:$0xff]
    %v584 = vld [vmem:[#allocation5 + $0xc30] sm:$0xff]
    %v585 = vld [vmem:[#allocation5 + $0xc38] sm:$0xff]
    %v586 = vld [vmem:[#allocation5 + $0xc40] sm:$0xff]
    %v587 = vld [vmem:[#allocation5 + $0xc48] sm:$0xff]
    %v588 = vld [vmem:[#allocation5 + $0xc50] sm:$0xff]
    %v589 = vld [vmem:[#allocation5 + $0xc58] sm:$0xff]
    %v590 = vld [vmem:[#allocation5 + $0xc60] sm:$0xff]
    %v591 = vld [vmem:[#allocation5 + $0xc68] sm:$0xff]
    %v592 = vld [vmem:[#allocation5 + $0xc70] sm:$0xff]
    %v593 = vld [vmem:[#allocation5 + $0xc78] sm:$0xff]
    %v594 = vld [vmem:[#allocation5 + $0xc80] sm:$0xff]
    %v595 = vld [vmem:[#allocation5 + $0xc88] sm:$0xff]
    %v596 = vld [vmem:[#allocation5 + $0xc90] sm:$0xff]
    %v597 = vld [vmem:[#allocation5 + $0xc98] sm:$0xff]
    %v598 = vld [vmem:[#allocation5 + $0xca0] sm:$0xff]
    %v599 = vld [vmem:[#allocation5 + $0xca8] sm:$0xff]
    %v600 = vld [vmem:[#allocation5 + $0xcb0] sm:$0xff]
    %v601 = vld [vmem:[#allocation5 + $0xcb8] sm:$0xff]
    %v602 = vld [vmem:[#allocation5 + $0xcc0] sm:$0xff]
    %v603 = vld [vmem:[#allocation5 + $0xcc8] sm:$0xff]
    %v604 = vld [vmem:[#allocation5 + $0xcd0] sm:$0xff]
    %v605 = vld [vmem:[#allocation5 + $0xcd8] sm:$0xff]
    %v606 = vld [vmem:[#allocation5 + $0xce0] sm:$0xff]
    %v607 = vld [vmem:[#allocation5 + $0xce8] sm:$0xff]
    %v608 = vld [vmem:[#allocation5 + $0xcf0] sm:$0xff]
    %v609 = vld [vmem:[#allocation5 + $0xcf8] sm:$0xff]
    %v610 = vld [vmem:[#allocation5 + $0xd00] sm:$0xff]
    %v611 = vld [vmem:[#allocation5 + $0xd08] sm:$0xff]
    %v612 = vld [vmem:[#allocation5 + $0xd10] sm:$0xff]
    %v613 = vld [vmem:[#allocation5 + $0xd18] sm:$0xff]
    %v614 = vld [vmem:[#allocation5 + $0xd20] sm:$0xff]
    %v615 = vld [vmem:[#allocation5 + $0xd28] sm:$0xff]
    %v616 = vld [vmem:[#allocation5 + $0xd30] sm:$0xff]
    %v617 = vld [vmem:[#allocation5 + $0xd38] sm:$0xff]
    %v618 = vld [vmem:[#allocation5 + $0xd40] sm:$0xff]
    %v619 = vld [vmem:[#allocation5 + $0xd48] sm:$0xff]
    %v620 = vld [vmem:[#allocation5 + $0xd50] sm:$0xff]
    %v621 = vld [vmem:[#allocation5 + $0xd58] sm:$0xff]
    %v622 = vld [vmem:[#allocation5 + $0xd60] sm:$0xff]
    %v623 = vld [vmem:[#allocation5 + $0xd68] sm:$0xff]
    %v624 = vld [vmem:[#allocation5 + $0xd70] sm:$0xff]
    %v625 = vld [vmem:[#allocation5 + $0xd78] sm:$0xff]
    %v626 = vld [vmem:[#allocation5 + $0xd80] sm:$0xff]
    %v627 = vld [vmem:[#allocation5 + $0xd88] sm:$0xff]
    %v628 = vld [vmem:[#allocation5 + $0xd90] sm:$0xff]
    %v629 = vld [vmem:[#allocation5 + $0xd98] sm:$0xff]
    %v630 = vld [vmem:[#allocation5 + $0xda0] sm:$0xff]
    %v631 = vld [vmem:[#allocation5 + $0xda8] sm:$0xff]
    %v632 = vld [vmem:[#allocation5 + $0xdb0] sm:$0xff]
    %v633 = vld [vmem:[#allocation5 + $0xdb8] sm:$0xff]
    %v634 = vld [vmem:[#allocation5 + $0xdc0] sm:$0xff]
    %v635 = vld [vmem:[#allocation5 + $0xdc8] sm:$0xff]
    %v636 = vld [vmem:[#allocation5 + $0xdd0] sm:$0xff]
    %v637 = vld [vmem:[#allocation5 + $0xdd8] sm:$0xff]
    %v638 = vld [vmem:[#allocation5 + $0xde0] sm:$0xff]
    %v639 = vld [vmem:[#allocation5 + $0xde8] sm:$0xff]
    %v640 = vld [vmem:[#allocation5 + $0xdf0] sm:$0xff]
    %v641 = vld [vmem:[#allocation5 + $0xdf8] sm:$0xff]
    %v642 = vld [vmem:[#allocation5 + $0xe00] sm:$0xff]
    %v643 = vld [vmem:[#allocation5 + $0xe08] sm:$0xff]
    %v644 = vld [vmem:[#allocation5 + $0xe10] sm:$0xff]
    %v645 = vld [vmem:[#allocation5 + $0xe18] sm:$0xff]
    %v646 = vld [vmem:[#allocation5 + $0xe20] sm:$0xff]
    %v647 = vld [vmem:[#allocation5 + $0xe28] sm:$0xff]
    %v648 = vld [vmem:[#allocation5 + $0xe30] sm:$0xff]
    %v649 = vld [vmem:[#allocation5 + $0xe38] sm:$0xff]
    %v650 = vld [vmem:[#allocation5 + $0xe40] sm:$0xff]
    %v651 = vld [vmem:[#allocation5 + $0xe48] sm:$0xff]
    %v652 = vld [vmem:[#allocation5 + $0xe50] sm:$0xff]
    %v653 = vld [vmem:[#allocation5 + $0xe58] sm:$0xff]
    %v654 = vld [vmem:[#allocation5 + $0xe60] sm:$0xff]
    %v655 = vld [vmem:[#allocation5 + $0xe68] sm:$0xff]
    %v656 = vld [vmem:[#allocation5 + $0xe70] sm:$0xff]
    %v657 = vld [vmem:[#allocation5 + $0xe78] sm:$0xff]
    %v658 = vld [vmem:[#allocation5 + $0xe80] sm:$0xff]
    %v659 = vld [vmem:[#allocation7] sm:$0x3]
    %v661 = vlaneseq
    %v662 = vshrl.u32 %v661, 7
    %v663 = vsub.s32 0, %v662
    %v664 = vrot.slane %v659, %v663
    %v665 = vlaneseq
    %v666 = vshrl.u32 %v665, 7
    %v667 = vsub.s32 1, %v666
    %v668 = vrot.slane %v659, %v667
    %v1136 = vunpack.c.l.b16 %v194
    %v1137 = vunpack.c.h.b16 %v194
    %v1138 = vunpack.c.l.b16 %v195
    %v1139 = vunpack.c.h.b16 %v195
    %v1140 = vunpack.c.l.b16 %v196
    %v1141 = vunpack.c.h.b16 %v196
    %v1142 = vunpack.c.l.b16 %v197
    %v1143 = vunpack.c.h.b16 %v197
    %v1144 = vunpack.c.l.b16 %v198
    %v1145 = vunpack.c.h.b16 %v198
    %v1146 = vunpack.c.l.b16 %v199
    %v1147 = vunpack.c.h.b16 %v199
    %v1148 = vunpack.c.l.b16 %v200
    %v1149 = vunpack.c.h.b16 %v200
    %v1150 = vunpack.c.l.b16 %v201
    %v1151 = vunpack.c.h.b16 %v201
    %v1152 = vunpack.c.l.b16 %v202
    %v1153 = vunpack.c.h.b16 %v202
    %v1154 = vunpack.c.l.b16 %v203
    %v1155 = vunpack.c.h.b16 %v203
    %v1156 = vunpack.c.l.b16 %v204
    %v1157 = vunpack.c.h.b16 %v204
    %v1158 = vunpack.c.l.b16 %v205
    %v1159 = vunpack.c.h.b16 %v205
    %v1160 = vunpack.c.l.b16 %v206
    %v1161 = vunpack.c.h.b16 %v206
    %v1162 = vunpack.c.l.b16 %v207
    %v1163 = vunpack.c.h.b16 %v207
    %v1164 = vunpack.c.l.b16 %v208
    %v1165 = vunpack.c.h.b16 %v208
    %v1166 = vunpack.c.l.b16 %v209
    %v1167 = vunpack.c.h.b16 %v209
    %v1168 = vunpack.c.l.b16 %v210
    %v1169 = vunpack.c.h.b16 %v210
    %v1170 = vunpack.c.l.b16 %v211
    %v1171 = vunpack.c.h.b16 %v211
    %v1172 = vunpack.c.l.b16 %v212
    %v1173 = vunpack.c.h.b16 %v212
    %v1174 = vunpack.c.l.b16 %v213
    %v1175 = vunpack.c.h.b16 %v213
    %v1176 = vunpack.c.l.b16 %v214
    %v1177 = vunpack.c.h.b16 %v214
    %v1178 = vunpack.c.l.b16 %v215
    %v1179 = vunpack.c.h.b16 %v215
    %v1180 = vunpack.c.l.b16 %v216
    %v1181 = vunpack.c.h.b16 %v216
    %v1182 = vunpack.c.l.b16 %v217
    %v1183 = vunpack.c.h.b16 %v217
    %v1184 = vunpack.c.l.b16 %v218
    %v1185 = vunpack.c.h.b16 %v218
    %v1186 = vunpack.c.l.b16 %v219
    %v1187 = vunpack.c.h.b16 %v219
    %v1188 = vunpack.c.l.b16 %v220
    %v1189 = vunpack.c.h.b16 %v220
    %v1190 = vunpack.c.l.b16 %v221
    %v1191 = vunpack.c.h.b16 %v221
    %v1192 = vunpack.c.l.b16 %v222
    %v1193 = vunpack.c.h.b16 %v222
    %v1194 = vunpack.c.l.b16 %v223
    %v1195 = vunpack.c.h.b16 %v223
    %v1196 = vunpack.c.l.b16 %v224
    %v1197 = vunpack.c.h.b16 %v224
    %v1198 = vunpack.c.l.b16 %v225
    %v1199 = vunpack.c.h.b16 %v225
    %v1200 = vunpack.c.l.b16 %v226
    %v1201 = vunpack.c.h.b16 %v226
    %v1202 = vunpack.c.l.b16 %v227
    %v1203 = vunpack.c.h.b16 %v227
    %v1204 = vunpack.c.l.b16 %v228
    %v1205 = vunpack.c.h.b16 %v228
    %v1206 = vunpack.c.l.b16 %v229
    %v1207 = vunpack.c.h.b16 %v229
    %v1208 = vunpack.c.l.b16 %v230
    %v1209 = vunpack.c.h.b16 %v230
    %v1210 = vunpack.c.l.b16 %v231
    %v1211 = vunpack.c.h.b16 %v231
    %v1212 = vunpack.c.l.b16 %v232
    %v1213 = vunpack.c.h.b16 %v232
    %v1214 = vunpack.c.l.b16 %v233
    %v1215 = vunpack.c.h.b16 %v233
    %v1216 = vunpack.c.l.b16 %v234
    %v1217 = vunpack.c.h.b16 %v234
    %v1218 = vunpack.c.l.b16 %v235
    %v1219 = vunpack.c.h.b16 %v235
    %v1220 = vunpack.c.l.b16 %v236
    %v1221 = vunpack.c.h.b16 %v236
    %v1222 = vunpack.c.l.b16 %v237
    %v1223 = vunpack.c.h.b16 %v237
    %v1224 = vunpack.c.l.b16 %v238
    %v1225 = vunpack.c.h.b16 %v238
    %v1226 = vunpack.c.l.b16 %v239
    %v1227 = vunpack.c.h.b16 %v239
    %v1228 = vunpack.c.l.b16 %v240
    %v1229 = vunpack.c.h.b16 %v240
    %v1230 = vunpack.c.l.b16 %v241
    %v1231 = vunpack.c.h.b16 %v241
    %v1232 = vunpack.c.l.b16 %v242
    %v1233 = vunpack.c.h.b16 %v242
    %v1234 = vunpack.c.l.b16 %v243
    %v1235 = vunpack.c.h.b16 %v243
    %v1236 = vunpack.c.l.b16 %v244
    %v1237 = vunpack.c.h.b16 %v244
    %v1238 = vunpack.c.l.b16 %v245
    %v1239 = vunpack.c.h.b16 %v245
    %v1240 = vunpack.c.l.b16 %v246
    %v1241 = vunpack.c.h.b16 %v246
    %v1242 = vunpack.c.l.b16 %v247
    %v1243 = vunpack.c.h.b16 %v247
    %v1244 = vunpack.c.l.b16 %v248
    %v1245 = vunpack.c.h.b16 %v248
    %v1246 = vunpack.c.l.b16 %v249
    %v1247 = vunpack.c.h.b16 %v249
    %v1248 = vunpack.c.l.b16 %v250
    %v1249 = vunpack.c.h.b16 %v250
    %v1250 = vunpack.c.l.b16 %v251
    %v1251 = vunpack.c.h.b16 %v251
    %v1252 = vunpack.c.l.b16 %v252
    %v1253 = vunpack.c.h.b16 %v252
    %v1254 = vunpack.c.l.b16 %v253
    %v1255 = vunpack.c.h.b16 %v253
    %v1256 = vunpack.c.l.b16 %v254
    %v1257 = vunpack.c.h.b16 %v254
    %v1258 = vunpack.c.l.b16 %v255
    %v1259 = vunpack.c.h.b16 %v255
    %v1260 = vunpack.c.l.b16 %v256
    %v1261 = vunpack.c.h.b16 %v256
    %v1262 = vunpack.c.l.b16 %v257
    %v1263 = vunpack.c.h.b16 %v257
    %v1264 = vunpack.c.l.b16 %v258
    %v1265 = vunpack.c.h.b16 %v258
    %v1266 = vunpack.c.l.b16 %v259
    %v1267 = vunpack.c.h.b16 %v259
    %v1268 = vunpack.c.l.b16 %v260
    %v1269 = vunpack.c.h.b16 %v260
    %v1270 = vunpack.c.l.b16 %v261
    %v1271 = vunpack.c.h.b16 %v261
    %v1272 = vunpack.c.l.b16 %v262
    %v1273 = vunpack.c.h.b16 %v262
    %v1274 = vunpack.c.l.b16 %v263
    %v1275 = vunpack.c.h.b16 %v263
    %v1276 = vunpack.c.l.b16 %v264
    %v1277 = vunpack.c.h.b16 %v264
    %v1278 = vunpack.c.l.b16 %v265
    %v1279 = vunpack.c.h.b16 %v265
    %v1280 = vunpack.c.l.b16 %v266
    %v1281 = vunpack.c.h.b16 %v266
    %v1282 = vunpack.c.l.b16 %v267
    %v1283 = vunpack.c.h.b16 %v267
    %v1284 = vunpack.c.l.b16 %v268
    %v1285 = vunpack.c.h.b16 %v268
    %v1286 = vunpack.c.l.b16 %v269
    %v1287 = vunpack.c.h.b16 %v269
    %v1288 = vunpack.c.l.b16 %v270
    %v1289 = vunpack.c.h.b16 %v270
    %v1290 = vunpack.c.l.b16 %v271
    %v1291 = vunpack.c.h.b16 %v271
    %v1292 = vunpack.c.l.b16 %v272
    %v1293 = vunpack.c.h.b16 %v272
    %v1294 = vunpack.c.l.b16 %v273
    %v1295 = vunpack.c.h.b16 %v273
    %v1296 = vunpack.c.l.b16 %v274
    %v1297 = vunpack.c.h.b16 %v274
    %v1298 = vunpack.c.l.b16 %v275
    %v1299 = vunpack.c.h.b16 %v275
    %v1300 = vunpack.c.l.b16 %v276
    %v1301 = vunpack.c.h.b16 %v276
    %v1302 = vunpack.c.l.b16 %v277
    %v1303 = vunpack.c.h.b16 %v277
    %v1304 = vunpack.c.l.b16 %v278
    %v1305 = vunpack.c.h.b16 %v278
    %v1306 = vunpack.c.l.b16 %v279
    %v1307 = vunpack.c.h.b16 %v279
    %v1308 = vunpack.c.l.b16 %v280
    %v1309 = vunpack.c.h.b16 %v280
    %v1310 = vunpack.c.l.b16 %v281
    %v1311 = vunpack.c.h.b16 %v281
    %v1312 = vunpack.c.l.b16 %v282
    %v1313 = vunpack.c.h.b16 %v282
    %v1314 = vunpack.c.l.b16 %v283
    %v1315 = vunpack.c.h.b16 %v283
    %v1316 = vunpack.c.l.b16 %v284
    %v1317 = vunpack.c.h.b16 %v284
    %v1318 = vunpack.c.l.b16 %v285
    %v1319 = vunpack.c.h.b16 %v285
    %v1320 = vunpack.c.l.b16 %v286
    %v1321 = vunpack.c.h.b16 %v286
    %v1322 = vunpack.c.l.b16 %v287
    %v1323 = vunpack.c.h.b16 %v287
    %v1324 = vunpack.c.l.b16 %v288
    %v1325 = vunpack.c.h.b16 %v288
    %v1326 = vunpack.c.l.b16 %v289
    %v1327 = vunpack.c.h.b16 %v289
    %v1328 = vunpack.c.l.b16 %v290
    %v1329 = vunpack.c.h.b16 %v290
    %v1330 = vunpack.c.l.b16 %v291
    %v1331 = vunpack.c.h.b16 %v291
    %v1332 = vunpack.c.l.b16 %v292
    %v1333 = vunpack.c.h.b16 %v292
    %v1334 = vunpack.c.l.b16 %v293
    %v1335 = vunpack.c.h.b16 %v293
    %v1336 = vunpack.c.l.b16 %v294
    %v1337 = vunpack.c.h.b16 %v294
    %v1338 = vunpack.c.l.b16 %v295
    %v1339 = vunpack.c.h.b16 %v295
    %v1340 = vunpack.c.l.b16 %v296
    %v1341 = vunpack.c.h.b16 %v296
    %v1342 = vunpack.c.l.b16 %v297
    %v1343 = vunpack.c.h.b16 %v297
    %v1344 = vunpack.c.l.b16 %v298
    %v1345 = vunpack.c.h.b16 %v298
    %v1346 = vunpack.c.l.b16 %v299
    %v1347 = vunpack.c.h.b16 %v299
    %v1348 = vunpack.c.l.b16 %v300
    %v1349 = vunpack.c.h.b16 %v300
    %v1350 = vunpack.c.l.b16 %v301
    %v1351 = vunpack.c.h.b16 %v301
    %v1352 = vunpack.c.l.b16 %v302
    %v1353 = vunpack.c.h.b16 %v302
    %v1354 = vunpack.c.l.b16 %v303
    %v1355 = vunpack.c.h.b16 %v303
    %v1356 = vunpack.c.l.b16 %v304
    %v1357 = vunpack.c.h.b16 %v304
    %v1358 = vunpack.c.l.b16 %v305
    %v1359 = vunpack.c.h.b16 %v305
    %v1360 = vunpack.c.l.b16 %v306
    %v1361 = vunpack.c.h.b16 %v306
    %v1362 = vunpack.c.l.b16 %v307
    %v1363 = vunpack.c.h.b16 %v307
    %v1364 = vunpack.c.l.b16 %v308
    %v1365 = vunpack.c.h.b16 %v308
    %v1366 = vunpack.c.l.b16 %v309
    %v1367 = vunpack.c.h.b16 %v309
    %v1368 = vunpack.c.l.b16 %v310
    %v1369 = vunpack.c.h.b16 %v310
    %v1370 = vunpack.c.l.b16 %v311
    %v1371 = vunpack.c.h.b16 %v311
    %v1372 = vunpack.c.l.b16 %v312
    %v1373 = vunpack.c.h.b16 %v312
    %v1374 = vunpack.c.l.b16 %v313
    %v1375 = vunpack.c.h.b16 %v313
    %v1376 = vunpack.c.l.b16 %v314
    %v1377 = vunpack.c.h.b16 %v314
    %v1378 = vunpack.c.l.b16 %v315
    %v1379 = vunpack.c.h.b16 %v315
    %v1380 = vunpack.c.l.b16 %v316
    %v1381 = vunpack.c.h.b16 %v316
    %v1382 = vunpack.c.l.b16 %v317
    %v1383 = vunpack.c.h.b16 %v317
    %v1384 = vunpack.c.l.b16 %v318
    %v1385 = vunpack.c.h.b16 %v318
    %v1386 = vunpack.c.l.b16 %v319
    %v1387 = vunpack.c.h.b16 %v319
    %v1388 = vunpack.c.l.b16 %v320
    %v1389 = vunpack.c.h.b16 %v320
    %v1390 = vunpack.c.l.b16 %v321
    %v1391 = vunpack.c.h.b16 %v321
    %v1392 = vunpack.c.l.b16 %v322
    %v1393 = vunpack.c.h.b16 %v322
    %v1394 = vunpack.c.l.b16 %v323
    %v1395 = vunpack.c.h.b16 %v323
    %v1396 = vunpack.c.l.b16 %v324
    %v1397 = vunpack.c.h.b16 %v324
    %v1398 = vunpack.c.l.b16 %v325
    %v1399 = vunpack.c.h.b16 %v325
    %v1400 = vunpack.c.l.b16 %v326
    %v1401 = vunpack.c.h.b16 %v326
    %v1402 = vunpack.c.l.b16 %v327
    %v1403 = vunpack.c.h.b16 %v327
    %v1404 = vunpack.c.l.b16 %v328
    %v1405 = vunpack.c.h.b16 %v328
    %v1406 = vunpack.c.l.b16 %v329
    %v1407 = vunpack.c.h.b16 %v329
    %v1408 = vunpack.c.l.b16 %v330
    %v1409 = vunpack.c.h.b16 %v330
    %v1410 = vunpack.c.l.b16 %v331
    %v1411 = vunpack.c.h.b16 %v331
    %v1412 = vunpack.c.l.b16 %v332
    %v1413 = vunpack.c.h.b16 %v332
    %v1414 = vunpack.c.l.b16 %v333
    %v1415 = vunpack.c.h.b16 %v333
    %v1416 = vunpack.c.l.b16 %v334
    %v1417 = vunpack.c.h.b16 %v334
    %v1418 = vunpack.c.l.b16 %v335
    %v1419 = vunpack.c.h.b16 %v335
    %v1420 = vunpack.c.l.b16 %v336
    %v1421 = vunpack.c.h.b16 %v336
    %v1422 = vunpack.c.l.b16 %v337
    %v1423 = vunpack.c.h.b16 %v337
    %v1424 = vunpack.c.l.b16 %v338
    %v1425 = vunpack.c.h.b16 %v338
    %v1426 = vunpack.c.l.b16 %v339
    %v1427 = vunpack.c.h.b16 %v339
    %v1428 = vunpack.c.l.b16 %v340
    %v1429 = vunpack.c.h.b16 %v340
    %v1430 = vunpack.c.l.b16 %v341
    %v1431 = vunpack.c.h.b16 %v341
    %v1432 = vunpack.c.l.b16 %v342
    %v1433 = vunpack.c.h.b16 %v342
    %v1434 = vunpack.c.l.b16 %v343
    %v1435 = vunpack.c.h.b16 %v343
    %v1436 = vunpack.c.l.b16 %v344
    %v1437 = vunpack.c.h.b16 %v344
    %v1438 = vunpack.c.l.b16 %v345
    %v1439 = vunpack.c.h.b16 %v345
    %v1440 = vunpack.c.l.b16 %v346
    %v1441 = vunpack.c.h.b16 %v346
    %v1442 = vunpack.c.l.b16 %v347
    %v1443 = vunpack.c.h.b16 %v347
    %v1444 = vunpack.c.l.b16 %v348
    %v1445 = vunpack.c.h.b16 %v348
    %v1446 = vunpack.c.l.b16 %v349
    %v1447 = vunpack.c.h.b16 %v349
    %v1448 = vunpack.c.l.b16 %v350
    %v1449 = vunpack.c.h.b16 %v350
    %v1450 = vunpack.c.l.b16 %v351
    %v1451 = vunpack.c.h.b16 %v351
    %v1452 = vunpack.c.l.b16 %v352
    %v1453 = vunpack.c.h.b16 %v352
    %v1454 = vunpack.c.l.b16 %v353
    %v1455 = vunpack.c.h.b16 %v353
    %v1456 = vunpack.c.l.b16 %v354
    %v1457 = vunpack.c.h.b16 %v354
    %v1458 = vunpack.c.l.b16 %v355
    %v1459 = vunpack.c.h.b16 %v355
    %v1460 = vunpack.c.l.b16 %v356
    %v1461 = vunpack.c.h.b16 %v356
    %v1462 = vunpack.c.l.b16 %v357
    %v1463 = vunpack.c.h.b16 %v357
    %v1464 = vunpack.c.l.b16 %v358
    %v1465 = vunpack.c.h.b16 %v358
    %v1466 = vunpack.c.l.b16 %v359
    %v1467 = vunpack.c.h.b16 %v359
    %v1468 = vunpack.c.l.b16 %v360
    %v1469 = vunpack.c.h.b16 %v360
    %v1470 = vunpack.c.l.b16 %v361
    %v1471 = vunpack.c.h.b16 %v361
    %v1472 = vunpack.c.l.b16 %v362
    %v1473 = vunpack.c.h.b16 %v362
    %v1474 = vunpack.c.l.b16 %v363
    %v1475 = vunpack.c.h.b16 %v363
    %v1476 = vunpack.c.l.b16 %v364
    %v1477 = vunpack.c.h.b16 %v364
    %v1478 = vunpack.c.l.b16 %v365
    %v1479 = vunpack.c.h.b16 %v365
    %v1480 = vunpack.c.l.b16 %v366
    %v1481 = vunpack.c.h.b16 %v366
    %v1482 = vunpack.c.l.b16 %v367
    %v1483 = vunpack.c.h.b16 %v367
    %v1484 = vunpack.c.l.b16 %v368
    %v1485 = vunpack.c.h.b16 %v368
    %v1486 = vunpack.c.l.b16 %v369
    %v1487 = vunpack.c.h.b16 %v369
    %v1488 = vunpack.c.l.b16 %v370
    %v1489 = vunpack.c.h.b16 %v370
    %v1490 = vunpack.c.l.b16 %v371
    %v1491 = vunpack.c.h.b16 %v371
    %v1492 = vunpack.c.l.b16 %v372
    %v1493 = vunpack.c.h.b16 %v372
    %v1494 = vunpack.c.l.b16 %v373
    %v1495 = vunpack.c.h.b16 %v373
    %v1496 = vunpack.c.l.b16 %v374
    %v1497 = vunpack.c.h.b16 %v374
    %v1498 = vunpack.c.l.b16 %v375
    %v1499 = vunpack.c.h.b16 %v375
    %v1500 = vunpack.c.l.b16 %v376
    %v1501 = vunpack.c.h.b16 %v376
    %v1502 = vunpack.c.l.b16 %v377
    %v1503 = vunpack.c.h.b16 %v377
    %v1504 = vunpack.c.l.b16 %v378
    %v1505 = vunpack.c.h.b16 %v378
    %v1506 = vunpack.c.l.b16 %v379
    %v1507 = vunpack.c.h.b16 %v379
    %v1508 = vunpack.c.l.b16 %v380
    %v1509 = vunpack.c.h.b16 %v380
    %v1510 = vunpack.c.l.b16 %v381
    %v1511 = vunpack.c.h.b16 %v381
    %v1512 = vunpack.c.l.b16 %v382
    %v1513 = vunpack.c.h.b16 %v382
    %v1514 = vunpack.c.l.b16 %v383
    %v1515 = vunpack.c.h.b16 %v383
    %v1516 = vunpack.c.l.b16 %v384
    %v1517 = vunpack.c.h.b16 %v384
    %v1518 = vunpack.c.l.b16 %v385
    %v1519 = vunpack.c.h.b16 %v385
    %v1520 = vunpack.c.l.b16 %v386
    %v1521 = vunpack.c.h.b16 %v386
    %v1522 = vunpack.c.l.b16 %v387
    %v1523 = vunpack.c.h.b16 %v387
    %v1524 = vunpack.c.l.b16 %v388
    %v1525 = vunpack.c.h.b16 %v388
    %v1526 = vunpack.c.l.b16 %v389
    %v1527 = vunpack.c.h.b16 %v389
    %v1528 = vunpack.c.l.b16 %v390
    %v1529 = vunpack.c.h.b16 %v390
    %v1530 = vunpack.c.l.b16 %v391
    %v1531 = vunpack.c.h.b16 %v391
    %v1532 = vunpack.c.l.b16 %v392
    %v1533 = vunpack.c.h.b16 %v392
    %v1534 = vunpack.c.l.b16 %v393
    %v1535 = vunpack.c.h.b16 %v393
    %v1536 = vunpack.c.l.b16 %v394
    %v1537 = vunpack.c.h.b16 %v394
    %v1538 = vunpack.c.l.b16 %v395
    %v1539 = vunpack.c.h.b16 %v395
    %v1540 = vunpack.c.l.b16 %v396
    %v1541 = vunpack.c.h.b16 %v396
    %v1542 = vunpack.c.l.b16 %v397
    %v1543 = vunpack.c.h.b16 %v397
    %v1544 = vunpack.c.l.b16 %v398
    %v1545 = vunpack.c.h.b16 %v398
    %v1546 = vunpack.c.l.b16 %v399
    %v1547 = vunpack.c.h.b16 %v399
    %v1548 = vunpack.c.l.b16 %v400
    %v1549 = vunpack.c.h.b16 %v400
    %v1550 = vunpack.c.l.b16 %v401
    %v1551 = vunpack.c.h.b16 %v401
    %v1552 = vunpack.c.l.b16 %v402
    %v1553 = vunpack.c.h.b16 %v402
    %v1554 = vunpack.c.l.b16 %v403
    %v1555 = vunpack.c.h.b16 %v403
    %v1556 = vunpack.c.l.b16 %v404
    %v1557 = vunpack.c.h.b16 %v404
    %v1558 = vunpack.c.l.b16 %v405
    %v1559 = vunpack.c.h.b16 %v405
    %v1560 = vunpack.c.l.b16 %v406
    %v1561 = vunpack.c.h.b16 %v406
    %v1562 = vunpack.c.l.b16 %v407
    %v1563 = vunpack.c.h.b16 %v407
    %v1564 = vunpack.c.l.b16 %v408
    %v1565 = vunpack.c.h.b16 %v408
    %v1566 = vunpack.c.l.b16 %v409
    %v1567 = vunpack.c.h.b16 %v409
    %v1568 = vunpack.c.l.b16 %v410
    %v1569 = vunpack.c.h.b16 %v410
    %v1570 = vunpack.c.l.b16 %v411
    %v1571 = vunpack.c.h.b16 %v411
    %v1572 = vunpack.c.l.b16 %v412
    %v1573 = vunpack.c.h.b16 %v412
    %v1574 = vunpack.c.l.b16 %v413
    %v1575 = vunpack.c.h.b16 %v413
    %v1576 = vunpack.c.l.b16 %v414
    %v1577 = vunpack.c.h.b16 %v414
    %v1578 = vunpack.c.l.b16 %v415
    %v1579 = vunpack.c.h.b16 %v415
    %v1580 = vunpack.c.l.b16 %v416
    %v1581 = vunpack.c.h.b16 %v416
    %v1582 = vunpack.c.l.b16 %v417
    %v1583 = vunpack.c.h.b16 %v417
    %v1584 = vunpack.c.l.b16 %v418
    %v1585 = vunpack.c.h.b16 %v418
    %v1586 = vunpack.c.l.b16 %v419
    %v1587 = vunpack.c.h.b16 %v419
    %v1588 = vunpack.c.l.b16 %v420
    %v1589 = vunpack.c.h.b16 %v420
    %v1590 = vunpack.c.l.b16 %v421
    %v1591 = vunpack.c.h.b16 %v421
    %v1592 = vunpack.c.l.b16 %v422
    %v1593 = vunpack.c.h.b16 %v422
    %v1594 = vunpack.c.l.b16 %v423
    %v1595 = vunpack.c.h.b16 %v423
    %v1596 = vunpack.c.l.b16 %v424
    %v1597 = vunpack.c.h.b16 %v424
    %v1598 = vunpack.c.l.b16 %v425
    %v1599 = vunpack.c.h.b16 %v425
    %v1600 = vunpack.c.l.b16 %v426
    %v1601 = vunpack.c.h.b16 %v426
    %v1602 = vunpack.c.l.b16 %v427
    %v1603 = vunpack.c.h.b16 %v427
    %v1604 = vunpack.c.l.b16 %v428
    %v1605 = vunpack.c.h.b16 %v428
    %v1606 = vunpack.c.l.b16 %v429
    %v1607 = vunpack.c.h.b16 %v429
    %v1608 = vunpack.c.l.b16 %v430
    %v1609 = vunpack.c.h.b16 %v430
    %v1610 = vunpack.c.l.b16 %v431
    %v1611 = vunpack.c.h.b16 %v431
    %v1612 = vunpack.c.l.b16 %v432
    %v1613 = vunpack.c.h.b16 %v432
    %v1614 = vunpack.c.l.b16 %v433
    %v1615 = vunpack.c.h.b16 %v433
    %v1616 = vunpack.c.l.b16 %v434
    %v1617 = vunpack.c.h.b16 %v434
    %v1618 = vunpack.c.l.b16 %v435
    %v1619 = vunpack.c.h.b16 %v435
    %v1620 = vunpack.c.l.b16 %v436
    %v1621 = vunpack.c.h.b16 %v436
    %v1622 = vunpack.c.l.b16 %v437
    %v1623 = vunpack.c.h.b16 %v437
    %v1624 = vunpack.c.l.b16 %v438
    %v1625 = vunpack.c.h.b16 %v438
    %v1626 = vunpack.c.l.b16 %v439
    %v1627 = vunpack.c.h.b16 %v439
    %v1628 = vunpack.c.l.b16 %v440
    %v1629 = vunpack.c.h.b16 %v440
    %v1630 = vunpack.c.l.b16 %v441
    %v1631 = vunpack.c.h.b16 %v441
    %v1632 = vunpack.c.l.b16 %v442
    %v1633 = vunpack.c.h.b16 %v442
    %v1634 = vunpack.c.l.b16 %v443
    %v1635 = vunpack.c.h.b16 %v443
    %v1636 = vunpack.c.l.b16 %v444
    %v1637 = vunpack.c.h.b16 %v444
    %v1638 = vunpack.c.l.b16 %v445
    %v1639 = vunpack.c.h.b16 %v445
    %v1640 = vunpack.c.l.b16 %v446
    %v1641 = vunpack.c.h.b16 %v446
    %v1642 = vunpack.c.l.b16 %v447
    %v1643 = vunpack.c.h.b16 %v447
    %v1644 = vunpack.c.l.b16 %v448
    %v1645 = vunpack.c.h.b16 %v448
    %v1646 = vunpack.c.l.b16 %v449
    %v1647 = vunpack.c.h.b16 %v449
    %v1648 = vunpack.c.l.b16 %v450
    %v1649 = vunpack.c.h.b16 %v450
    %v1650 = vunpack.c.l.b16 %v451
    %v1651 = vunpack.c.h.b16 %v451
    %v1652 = vunpack.c.l.b16 %v452
    %v1653 = vunpack.c.h.b16 %v452
    %v1654 = vunpack.c.l.b16 %v453
    %v1655 = vunpack.c.h.b16 %v453
    %v1656 = vunpack.c.l.b16 %v454
    %v1657 = vunpack.c.h.b16 %v454
    %v1658 = vunpack.c.l.b16 %v455
    %v1659 = vunpack.c.h.b16 %v455
    %v1660 = vunpack.c.l.b16 %v456
    %v1661 = vunpack.c.h.b16 %v456
    %v1662 = vunpack.c.l.b16 %v457
    %v1663 = vunpack.c.h.b16 %v457
    %v1664 = vunpack.c.l.b16 %v458
    %v1665 = vunpack.c.h.b16 %v458
    %v1666 = vunpack.c.l.b16 %v459
    %v1667 = vunpack.c.h.b16 %v459
    %v1668 = vunpack.c.l.b16 %v460
    %v1669 = vunpack.c.h.b16 %v460
    %v1670 = vunpack.c.l.b16 %v461
    %v1671 = vunpack.c.h.b16 %v461
    %v1672 = vunpack.c.l.b16 %v462
    %v1673 = vunpack.c.h.b16 %v462
    %v1674 = vunpack.c.l.b16 %v463
    %v1675 = vunpack.c.h.b16 %v463
    %v1676 = vunpack.c.l.b16 %v464
    %v1677 = vunpack.c.h.b16 %v464
    %v1678 = vunpack.c.l.b16 %v465
    %v1679 = vunpack.c.h.b16 %v465
    %v1680 = vunpack.c.l.b16 %v466
    %v1681 = vunpack.c.h.b16 %v466
    %v1682 = vunpack.c.l.b16 %v467
    %v1683 = vunpack.c.h.b16 %v467
    %v1684 = vunpack.c.l.b16 %v468
    %v1685 = vunpack.c.h.b16 %v468
    %v1686 = vunpack.c.l.b16 %v469
    %v1687 = vunpack.c.h.b16 %v469
    %v1688 = vunpack.c.l.b16 %v470
    %v1689 = vunpack.c.h.b16 %v470
    %v1690 = vunpack.c.l.b16 %v471
    %v1691 = vunpack.c.h.b16 %v471
    %v1692 = vunpack.c.l.b16 %v472
    %v1693 = vunpack.c.h.b16 %v472
    %v1694 = vunpack.c.l.b16 %v473
    %v1695 = vunpack.c.h.b16 %v473
    %v1696 = vunpack.c.l.b16 %v474
    %v1697 = vunpack.c.h.b16 %v474
    %v1698 = vunpack.c.l.b16 %v475
    %v1699 = vunpack.c.h.b16 %v475
    %v1700 = vunpack.c.l.b16 %v476
    %v1701 = vunpack.c.h.b16 %v476
    %v1702 = vunpack.c.l.b16 %v477
    %v1703 = vunpack.c.h.b16 %v477
    %v1704 = vunpack.c.l.b16 %v478
    %v1705 = vunpack.c.h.b16 %v478
    %v1706 = vunpack.c.l.b16 %v479
    %v1707 = vunpack.c.h.b16 %v479
    %v1708 = vunpack.c.l.b16 %v480
    %v1709 = vunpack.c.h.b16 %v480
    %v1710 = vunpack.c.l.b16 %v481
    %v1711 = vunpack.c.h.b16 %v481
    %v1712 = vunpack.c.l.b16 %v482
    %v1713 = vunpack.c.h.b16 %v482
    %v1714 = vunpack.c.l.b16 %v483
    %v1715 = vunpack.c.h.b16 %v483
    %v1716 = vunpack.c.l.b16 %v484
    %v1717 = vunpack.c.h.b16 %v484
    %v1718 = vunpack.c.l.b16 %v485
    %v1719 = vunpack.c.h.b16 %v485
    %v1720 = vunpack.c.l.b16 %v486
    %v1721 = vunpack.c.h.b16 %v486
    %v1722 = vunpack.c.l.b16 %v487
    %v1723 = vunpack.c.h.b16 %v487
    %v1724 = vunpack.c.l.b16 %v488
    %v1725 = vunpack.c.h.b16 %v488
    %v1726 = vunpack.c.l.b16 %v489
    %v1727 = vunpack.c.h.b16 %v489
    %v1728 = vunpack.c.l.b16 %v490
    %v1729 = vunpack.c.h.b16 %v490
    %v1730 = vunpack.c.l.b16 %v491
    %v1731 = vunpack.c.h.b16 %v491
    %v1732 = vunpack.c.l.b16 %v492
    %v1733 = vunpack.c.h.b16 %v492
    %v1734 = vunpack.c.l.b16 %v493
    %v1735 = vunpack.c.h.b16 %v493
    %v1736 = vunpack.c.l.b16 %v494
    %v1737 = vunpack.c.h.b16 %v494
    %v1738 = vunpack.c.l.b16 %v495
    %v1739 = vunpack.c.h.b16 %v495
    %v1740 = vunpack.c.l.b16 %v496
    %v1741 = vunpack.c.h.b16 %v496
    %v1742 = vunpack.c.l.b16 %v497
    %v1743 = vunpack.c.h.b16 %v497
    %v1744 = vunpack.c.l.b16 %v498
    %v1745 = vunpack.c.h.b16 %v498
    %v1746 = vunpack.c.l.b16 %v499
    %v1747 = vunpack.c.h.b16 %v499
    %v1748 = vunpack.c.l.b16 %v500
    %v1749 = vunpack.c.h.b16 %v500
    %v1750 = vunpack.c.l.b16 %v501
    %v1751 = vunpack.c.h.b16 %v501
    %v1752 = vunpack.c.l.b16 %v502
    %v1753 = vunpack.c.h.b16 %v502
    %v1754 = vunpack.c.l.b16 %v503
    %v1755 = vunpack.c.h.b16 %v503
    %v1756 = vunpack.c.l.b16 %v504
    %v1757 = vunpack.c.h.b16 %v504
    %v1758 = vunpack.c.l.b16 %v505
    %v1759 = vunpack.c.h.b16 %v505
    %v1760 = vunpack.c.l.b16 %v506
    %v1761 = vunpack.c.h.b16 %v506
    %v1762 = vunpack.c.l.b16 %v507
    %v1763 = vunpack.c.h.b16 %v507
    %v1764 = vunpack.c.l.b16 %v508
    %v1765 = vunpack.c.h.b16 %v508
    %v1766 = vunpack.c.l.b16 %v509
    %v1767 = vunpack.c.h.b16 %v509
    %v1768 = vunpack.c.l.b16 %v510
    %v1769 = vunpack.c.h.b16 %v510
    %v1770 = vunpack.c.l.b16 %v511
    %v1771 = vunpack.c.h.b16 %v511
    %v1772 = vunpack.c.l.b16 %v512
    %v1773 = vunpack.c.h.b16 %v512
    %v1774 = vunpack.c.l.b16 %v513
    %v1775 = vunpack.c.h.b16 %v513
    %v1776 = vunpack.c.l.b16 %v514
    %v1777 = vunpack.c.h.b16 %v514
    %v1778 = vunpack.c.l.b16 %v515
    %v1779 = vunpack.c.h.b16 %v515
    %v1780 = vunpack.c.l.b16 %v516
    %v1781 = vunpack.c.h.b16 %v516
    %v1782 = vunpack.c.l.b16 %v517
    %v1783 = vunpack.c.h.b16 %v517
    %v1784 = vunpack.c.l.b16 %v518
    %v1785 = vunpack.c.h.b16 %v518
    %v1786 = vunpack.c.l.b16 %v519
    %v1787 = vunpack.c.h.b16 %v519
    %v1788 = vunpack.c.l.b16 %v520
    %v1789 = vunpack.c.h.b16 %v520
    %v1790 = vunpack.c.l.b16 %v521
    %v1791 = vunpack.c.h.b16 %v521
    %v1792 = vunpack.c.l.b16 %v522
    %v1793 = vunpack.c.h.b16 %v522
    %v1794 = vunpack.c.l.b16 %v523
    %v1795 = vunpack.c.h.b16 %v523
    %v1796 = vunpack.c.l.b16 %v524
    %v1797 = vunpack.c.h.b16 %v524
    %v1798 = vunpack.c.l.b16 %v525
    %v1799 = vunpack.c.h.b16 %v525
    %v1800 = vunpack.c.l.b16 %v526
    %v1801 = vunpack.c.h.b16 %v526
    %v1802 = vunpack.c.l.b16 %v527
    %v1803 = vunpack.c.h.b16 %v527
    %v1804 = vunpack.c.l.b16 %v528
    %v1805 = vunpack.c.h.b16 %v528
    %v1806 = vunpack.c.l.b16 %v529
    %v1807 = vunpack.c.h.b16 %v529
    %v1808 = vunpack.c.l.b16 %v530
    %v1809 = vunpack.c.h.b16 %v530
    %v1810 = vunpack.c.l.b16 %v531
    %v1811 = vunpack.c.h.b16 %v531
    %v1812 = vunpack.c.l.b16 %v532
    %v1813 = vunpack.c.h.b16 %v532
    %v1814 = vunpack.c.l.b16 %v533
    %v1815 = vunpack.c.h.b16 %v533
    %v1816 = vunpack.c.l.b16 %v534
    %v1817 = vunpack.c.h.b16 %v534
    %v1818 = vunpack.c.l.b16 %v535
    %v1819 = vunpack.c.h.b16 %v535
    %v1820 = vunpack.c.l.b16 %v536
    %v1821 = vunpack.c.h.b16 %v536
    %v1822 = vunpack.c.l.b16 %v537
    %v1823 = vunpack.c.h.b16 %v537
    %v1824 = vunpack.c.l.b16 %v538
    %v1825 = vunpack.c.h.b16 %v538
    %v1826 = vunpack.c.l.b16 %v539
    %v1827 = vunpack.c.h.b16 %v539
    %v1828 = vunpack.c.l.b16 %v540
    %v1829 = vunpack.c.h.b16 %v540
    %v1830 = vunpack.c.l.b16 %v541
    %v1831 = vunpack.c.h.b16 %v541
    %v1832 = vunpack.c.l.b16 %v542
    %v1833 = vunpack.c.h.b16 %v542
    %v1834 = vunpack.c.l.b16 %v543
    %v1835 = vunpack.c.h.b16 %v543
    %v1836 = vunpack.c.l.b16 %v544
    %v1837 = vunpack.c.h.b16 %v544
    %v1838 = vunpack.c.l.b16 %v545
    %v1839 = vunpack.c.h.b16 %v545
    %v1840 = vunpack.c.l.b16 %v546
    %v1841 = vunpack.c.h.b16 %v546
    %v1842 = vunpack.c.l.b16 %v547
    %v1843 = vunpack.c.h.b16 %v547
    %v1844 = vunpack.c.l.b16 %v548
    %v1845 = vunpack.c.h.b16 %v548
    %v1846 = vunpack.c.l.b16 %v549
    %v1847 = vunpack.c.h.b16 %v549
    %v1848 = vunpack.c.l.b16 %v550
    %v1849 = vunpack.c.h.b16 %v550
    %v1850 = vunpack.c.l.b16 %v551
    %v1851 = vunpack.c.h.b16 %v551
    %v1852 = vunpack.c.l.b16 %v552
    %v1853 = vunpack.c.h.b16 %v552
    %v1854 = vunpack.c.l.b16 %v553
    %v1855 = vunpack.c.h.b16 %v553
    %v1856 = vunpack.c.l.b16 %v554
    %v1857 = vunpack.c.h.b16 %v554
    %v1858 = vunpack.c.l.b16 %v555
    %v1859 = vunpack.c.h.b16 %v555
    %v1860 = vunpack.c.l.b16 %v556
    %v1861 = vunpack.c.h.b16 %v556
    %v1862 = vunpack.c.l.b16 %v557
    %v1863 = vunpack.c.h.b16 %v557
    %v1864 = vunpack.c.l.b16 %v558
    %v1865 = vunpack.c.h.b16 %v558
    %v1866 = vunpack.c.l.b16 %v559
    %v1867 = vunpack.c.h.b16 %v559
    %v1868 = vunpack.c.l.b16 %v560
    %v1869 = vunpack.c.h.b16 %v560
    %v1870 = vunpack.c.l.b16 %v561
    %v1871 = vunpack.c.h.b16 %v561
    %v1872 = vunpack.c.l.b16 %v562
    %v1873 = vunpack.c.h.b16 %v562
    %v1874 = vunpack.c.l.b16 %v563
    %v1875 = vunpack.c.h.b16 %v563
    %v1876 = vunpack.c.l.b16 %v564
    %v1877 = vunpack.c.h.b16 %v564
    %v1878 = vunpack.c.l.b16 %v565
    %v1879 = vunpack.c.h.b16 %v565
    %v1880 = vunpack.c.l.b16 %v566
    %v1881 = vunpack.c.h.b16 %v566
    %v1882 = vunpack.c.l.b16 %v567
    %v1883 = vunpack.c.h.b16 %v567
    %v1884 = vunpack.c.l.b16 %v568
    %v1885 = vunpack.c.h.b16 %v568
    %v1886 = vunpack.c.l.b16 %v569
    %v1887 = vunpack.c.h.b16 %v569
    %v1888 = vunpack.c.l.b16 %v570
    %v1889 = vunpack.c.h.b16 %v570
    %v1890 = vunpack.c.l.b16 %v571
    %v1891 = vunpack.c.h.b16 %v571
    %v1892 = vunpack.c.l.b16 %v572
    %v1893 = vunpack.c.h.b16 %v572
    %v1894 = vunpack.c.l.b16 %v573
    %v1895 = vunpack.c.h.b16 %v573
    %v1896 = vunpack.c.l.b16 %v574
    %v1897 = vunpack.c.h.b16 %v574
    %v1898 = vunpack.c.l.b16 %v575
    %v1899 = vunpack.c.h.b16 %v575
    %v1900 = vunpack.c.l.b16 %v576
    %v1901 = vunpack.c.h.b16 %v576
    %v1902 = vunpack.c.l.b16 %v577
    %v1903 = vunpack.c.h.b16 %v577
    %v1904 = vunpack.c.l.b16 %v578
    %v1905 = vunpack.c.h.b16 %v578
    %v1906 = vunpack.c.l.b16 %v579
    %v1907 = vunpack.c.h.b16 %v579
    %v1908 = vunpack.c.l.b16 %v580
    %v1909 = vunpack.c.h.b16 %v580
    %v1910 = vunpack.c.l.b16 %v581
    %v1911 = vunpack.c.h.b16 %v581
    %v1912 = vunpack.c.l.b16 %v582
    %v1913 = vunpack.c.h.b16 %v582
    %v1914 = vunpack.c.l.b16 %v583
    %v1915 = vunpack.c.h.b16 %v583
    %v1916 = vunpack.c.l.b16 %v584
    %v1917 = vunpack.c.h.b16 %v584
    %v1918 = vunpack.c.l.b16 %v585
    %v1919 = vunpack.c.h.b16 %v585
    %v1920 = vunpack.c.l.b16 %v586
    %v1921 = vunpack.c.h.b16 %v586
    %v1922 = vunpack.c.l.b16 %v587
    %v1923 = vunpack.c.h.b16 %v587
    %v1924 = vunpack.c.l.b16 %v588
    %v1925 = vunpack.c.h.b16 %v588
    %v1926 = vunpack.c.l.b16 %v589
    %v1927 = vunpack.c.h.b16 %v589
    %v1928 = vunpack.c.l.b16 %v590
    %v1929 = vunpack.c.h.b16 %v590
    %v1930 = vunpack.c.l.b16 %v591
    %v1931 = vunpack.c.h.b16 %v591
    %v1932 = vunpack.c.l.b16 %v592
    %v1933 = vunpack.c.h.b16 %v592
    %v1934 = vunpack.c.l.b16 %v593
    %v1935 = vunpack.c.h.b16 %v593
    %v1936 = vunpack.c.l.b16 %v594
    %v1937 = vunpack.c.h.b16 %v594
    %v1938 = vunpack.c.l.b16 %v595
    %v1939 = vunpack.c.h.b16 %v595
    %v1940 = vunpack.c.l.b16 %v596
    %v1941 = vunpack.c.h.b16 %v596
    %v1942 = vunpack.c.l.b16 %v597
    %v1943 = vunpack.c.h.b16 %v597
    %v1944 = vunpack.c.l.b16 %v598
    %v1945 = vunpack.c.h.b16 %v598
    %v1946 = vunpack.c.l.b16 %v599
    %v1947 = vunpack.c.h.b16 %v599
    %v1948 = vunpack.c.l.b16 %v600
    %v1949 = vunpack.c.h.b16 %v600
    %v1950 = vunpack.c.l.b16 %v601
    %v1951 = vunpack.c.h.b16 %v601
    %v1952 = vunpack.c.l.b16 %v602
    %v1953 = vunpack.c.h.b16 %v602
    %v1954 = vunpack.c.l.b16 %v603
    %v1955 = vunpack.c.h.b16 %v603
    %v1956 = vunpack.c.l.b16 %v604
    %v1957 = vunpack.c.h.b16 %v604
    %v1958 = vunpack.c.l.b16 %v605
    %v1959 = vunpack.c.h.b16 %v605
    %v1960 = vunpack.c.l.b16 %v606
    %v1961 = vunpack.c.h.b16 %v606
    %v1962 = vunpack.c.l.b16 %v607
    %v1963 = vunpack.c.h.b16 %v607
    %v1964 = vunpack.c.l.b16 %v608
    %v1965 = vunpack.c.h.b16 %v608
    %v1966 = vunpack.c.l.b16 %v609
    %v1967 = vunpack.c.h.b16 %v609
    %v1968 = vunpack.c.l.b16 %v610
    %v1969 = vunpack.c.h.b16 %v610
    %v1970 = vunpack.c.l.b16 %v611
    %v1971 = vunpack.c.h.b16 %v611
    %v1972 = vunpack.c.l.b16 %v612
    %v1973 = vunpack.c.h.b16 %v612
    %v1974 = vunpack.c.l.b16 %v613
    %v1975 = vunpack.c.h.b16 %v613
    %v1976 = vunpack.c.l.b16 %v614
    %v1977 = vunpack.c.h.b16 %v614
    %v1978 = vunpack.c.l.b16 %v615
    %v1979 = vunpack.c.h.b16 %v615
    %v1980 = vunpack.c.l.b16 %v616
    %v1981 = vunpack.c.h.b16 %v616
    %v1982 = vunpack.c.l.b16 %v617
    %v1983 = vunpack.c.h.b16 %v617
    %v1984 = vunpack.c.l.b16 %v618
    %v1985 = vunpack.c.h.b16 %v618
    %v1986 = vunpack.c.l.b16 %v619
    %v1987 = vunpack.c.h.b16 %v619
    %v1988 = vunpack.c.l.b16 %v620
    %v1989 = vunpack.c.h.b16 %v620
    %v1990 = vunpack.c.l.b16 %v621
    %v1991 = vunpack.c.h.b16 %v621
    %v1992 = vunpack.c.l.b16 %v622
    %v1993 = vunpack.c.h.b16 %v622
    %v1994 = vunpack.c.l.b16 %v623
    %v1995 = vunpack.c.h.b16 %v623
    %v1996 = vunpack.c.l.b16 %v624
    %v1997 = vunpack.c.h.b16 %v624
    %v1998 = vunpack.c.l.b16 %v625
    %v1999 = vunpack.c.h.b16 %v625
    %v2000 = vunpack.c.l.b16 %v626
    %v2001 = vunpack.c.h.b16 %v626
    %v2002 = vunpack.c.l.b16 %v627
    %v2003 = vunpack.c.h.b16 %v627
    %v2004 = vunpack.c.l.b16 %v628
    %v2005 = vunpack.c.h.b16 %v628
    %v2006 = vunpack.c.l.b16 %v629
    %v2007 = vunpack.c.h.b16 %v629
    %v2008 = vunpack.c.l.b16 %v630
    %v2009 = vunpack.c.h.b16 %v630
    %v2010 = vunpack.c.l.b16 %v631
    %v2011 = vunpack.c.h.b16 %v631
    %v2012 = vunpack.c.l.b16 %v632
    %v2013 = vunpack.c.h.b16 %v632
    %v2014 = vunpack.c.l.b16 %v633
    %v2015 = vunpack.c.h.b16 %v633
    %v2016 = vunpack.c.l.b16 %v634
    %v2017 = vunpack.c.h.b16 %v634
    %v2018 = vunpack.c.l.b16 %v635
    %v2019 = vunpack.c.h.b16 %v635
    %v2020 = vunpack.c.l.b16 %v636
    %v2021 = vunpack.c.h.b16 %v636
    %v2022 = vunpack.c.l.b16 %v637
    %v2023 = vunpack.c.h.b16 %v637
    %v2024 = vunpack.c.l.b16 %v638
    %v2025 = vunpack.c.h.b16 %v638
    %v2026 = vunpack.c.l.b16 %v639
    %v2027 = vunpack.c.h.b16 %v639
    %v2028 = vunpack.c.l.b16 %v640
    %v2029 = vunpack.c.h.b16 %v640
    %v2030 = vunpack.c.l.b16 %v641
    %v2031 = vunpack.c.h.b16 %v641
    %v2032 = vunpack.c.l.b16 %v642
    %v2033 = vunpack.c.h.b16 %v642
    %v2034 = vunpack.c.l.b16 %v643
    %v2035 = vunpack.c.h.b16 %v643
    %v2036 = vunpack.c.l.b16 %v644
    %v2037 = vunpack.c.h.b16 %v644
    %v2038 = vunpack.c.l.b16 %v645
    %v2039 = vunpack.c.h.b16 %v645
    %v2040 = vunpack.c.l.b16 %v646
    %v2041 = vunpack.c.h.b16 %v646
    %v2042 = vunpack.c.l.b16 %v647
    %v2043 = vunpack.c.h.b16 %v647
    %v2044 = vunpack.c.l.b16 %v648
    %v2045 = vunpack.c.h.b16 %v648
    %v2046 = vunpack.c.l.b16 %v649
    %v2047 = vunpack.c.h.b16 %v649
    %v2048 = vunpack.c.l.b16 %v650
    %v2049 = vunpack.c.h.b16 %v650
    %v2050 = vunpack.c.l.b16 %v651
    %v2051 = vunpack.c.h.b16 %v651
    %v2052 = vunpack.c.l.b16 %v652
    %v2053 = vunpack.c.h.b16 %v652
    %v2054 = vunpack.c.l.b16 %v653
    %v2055 = vunpack.c.h.b16 %v653
    %v2056 = vunpack.c.l.b16 %v654
    %v2057 = vunpack.c.h.b16 %v654
    %v2058 = vunpack.c.l.b16 %v655
    %v2059 = vunpack.c.h.b16 %v655
    %v2060 = vunpack.c.l.b16 %v656
    %v2061 = vunpack.c.h.b16 %v656
    %v2062 = vunpack.c.l.b16 %v657
    %v2063 = vunpack.c.h.b16 %v657
    %v2064 = vunpack.c.l.b16 %v658
    %v2065 = vunpack.c.h.b16 %v658
    %v2066 = vpack.c.b16 %v1138, %v1136
    %v2067 = vpack.c.b16 %v1139, %v1137
    %v2068 = vpack.c.b16 %v1142, %v1140
    %v2069 = vpack.c.b16 %v1143, %v1141
    %v2070 = vpack.c.b16 %v1146, %v1144
    %v2071 = vpack.c.b16 %v1147, %v1145
    %v2072 = vpack.c.b16 %v1150, %v1148
    %v2073 = vpack.c.b16 %v1151, %v1149
    %v2074 = vpack.c.b16 %v1154, %v1152
    %v2075 = vpack.c.b16 %v1155, %v1153
    %v2076 = vpack.c.b16 %v1158, %v1156
    %v2077 = vpack.c.b16 %v1159, %v1157
    %v2078 = vpack.c.b16 %v1162, %v1160
    %v2079 = vpack.c.b16 %v1163, %v1161
    %v2080 = vpack.c.b16 %v1166, %v1164
    %v2081 = vpack.c.b16 %v1167, %v1165
    %v2082 = vpack.c.b16 %v1170, %v1168
    %v2083 = vpack.c.b16 %v1171, %v1169
    %v2084 = vpack.c.b16 %v1174, %v1172
    %v2085 = vpack.c.b16 %v1175, %v1173
    %v2086 = vpack.c.b16 %v1178, %v1176
    %v2087 = vpack.c.b16 %v1179, %v1177
    %v2088 = vpack.c.b16 %v1182, %v1180
    %v2089 = vpack.c.b16 %v1183, %v1181
    %v2090 = vpack.c.b16 %v1186, %v1184
    %v2091 = vpack.c.b16 %v1187, %v1185
    %v2092 = vpack.c.b16 %v1190, %v1188
    %v2093 = vpack.c.b16 %v1191, %v1189
    %v2094 = vpack.c.b16 %v1194, %v1192
    %v2095 = vpack.c.b16 %v1195, %v1193
    %v2096 = vpack.c.b16 %v1198, %v1196
    %v2097 = vpack.c.b16 %v1199, %v1197
    %v2098 = vpack.c.b16 %v1202, %v1200
    %v2099 = vpack.c.b16 %v1203, %v1201
    %v2100 = vpack.c.b16 %v1206, %v1204
    %v2101 = vpack.c.b16 %v1207, %v1205
    %v2102 = vpack.c.b16 %v1210, %v1208
    %v2103 = vpack.c.b16 %v1211, %v1209
    %v2104 = vpack.c.b16 %v1214, %v1212
    %v2105 = vpack.c.b16 %v1215, %v1213
    %v2106 = vpack.c.b16 %v1218, %v1216
    %v2107 = vpack.c.b16 %v1219, %v1217
    %v2108 = vpack.c.b16 %v1222, %v1220
    %v2109 = vpack.c.b16 %v1223, %v1221
    %v2110 = vpack.c.b16 %v1226, %v1224
    %v2111 = vpack.c.b16 %v1227, %v1225
    %v2112 = vpack.c.b16 %v1230, %v1228
    %v2113 = vpack.c.b16 %v1231, %v1229
    %v2114 = vpack.c.b16 %v1234, %v1232
    %v2115 = vpack.c.b16 %v1235, %v1233
    %v2116 = vpack.c.b16 %v1238, %v1236
    %v2117 = vpack.c.b16 %v1239, %v1237
    %v2118 = vpack.c.b16 %v1242, %v1240
    %v2119 = vpack.c.b16 %v1243, %v1241
    %v2120 = vpack.c.b16 %v1246, %v1244
    %v2121 = vpack.c.b16 %v1247, %v1245
    %v2122 = vpack.c.b16 %v1250, %v1248
    %v2123 = vpack.c.b16 %v1251, %v1249
    %v2124 = vpack.c.b16 %v1254, %v1252
    %v2125 = vpack.c.b16 %v1255, %v1253
    %v2126 = vpack.c.b16 %v1258, %v1256
    %v2127 = vpack.c.b16 %v1259, %v1257
    %v2128 = vpack.c.b16 %v1262, %v1260
    %v2129 = vpack.c.b16 %v1263, %v1261
    %v2130 = vpack.c.b16 %v1266, %v1264
    %v2131 = vpack.c.b16 %v1267, %v1265
    %v2132 = vpack.c.b16 %v1270, %v1268
    %v2133 = vpack.c.b16 %v1271, %v1269
    %v2134 = vpack.c.b16 %v1274, %v1272
    %v2135 = vpack.c.b16 %v1275, %v1273
    %v2136 = vpack.c.b16 %v1278, %v1276
    %v2137 = vpack.c.b16 %v1279, %v1277
    %v2138 = vpack.c.b16 %v1282, %v1280
    %v2139 = vpack.c.b16 %v1283, %v1281
    %v2140 = vpack.c.b16 %v1286, %v1284
    %v2141 = vpack.c.b16 %v1287, %v1285
    %v2142 = vpack.c.b16 %v1290, %v1288
    %v2143 = vpack.c.b16 %v1291, %v1289
    %v2144 = vpack.c.b16 %v1294, %v1292
    %v2145 = vpack.c.b16 %v1295, %v1293
    %v2146 = vpack.c.b16 %v1298, %v1296
    %v2147 = vpack.c.b16 %v1299, %v1297
    %v2148 = vpack.c.b16 %v1302, %v1300
    %v2149 = vpack.c.b16 %v1303, %v1301
    %v2150 = vpack.c.b16 %v1306, %v1304
    %v2151 = vpack.c.b16 %v1307, %v1305
    %v2152 = vpack.c.b16 %v1310, %v1308
    %v2153 = vpack.c.b16 %v1311, %v1309
    %v2154 = vpack.c.b16 %v1314, %v1312
    %v2155 = vpack.c.b16 %v1315, %v1313
    %v2156 = vpack.c.b16 %v1318, %v1316
    %v2157 = vpack.c.b16 %v1319, %v1317
    %v2158 = vpack.c.b16 %v1322, %v1320
    %v2159 = vpack.c.b16 %v1323, %v1321
    %v2160 = vpack.c.b16 %v1326, %v1324
    %v2161 = vpack.c.b16 %v1327, %v1325
    %v2162 = vpack.c.b16 %v1330, %v1328
    %v2163 = vpack.c.b16 %v1331, %v1329
    %v2164 = vpack.c.b16 %v1334, %v1332
    %v2165 = vpack.c.b16 %v1335, %v1333
    %v2166 = vpack.c.b16 %v1338, %v1336
    %v2167 = vpack.c.b16 %v1339, %v1337
    %v2168 = vpack.c.b16 %v1342, %v1340
    %v2169 = vpack.c.b16 %v1343, %v1341
    %v2170 = vpack.c.b16 %v1346, %v1344
    %v2171 = vpack.c.b16 %v1347, %v1345
    %v2172 = vpack.c.b16 %v1350, %v1348
    %v2173 = vpack.c.b16 %v1351, %v1349
    %v2174 = vpack.c.b16 %v1354, %v1352
    %v2175 = vpack.c.b16 %v1355, %v1353
    %v2176 = vpack.c.b16 %v1358, %v1356
    %v2177 = vpack.c.b16 %v1359, %v1357
    %v2178 = vpack.c.b16 %v1362, %v1360
    %v2179 = vpack.c.b16 %v1363, %v1361
    %v2180 = vpack.c.b16 %v1366, %v1364
    %v2181 = vpack.c.b16 %v1367, %v1365
    %v2182 = vpack.c.b16 %v1370, %v1368
    %v2183 = vpack.c.b16 %v1371, %v1369
    %v2184 = vpack.c.b16 %v1374, %v1372
    %v2185 = vpack.c.b16 %v1375, %v1373
    %v2186 = vpack.c.b16 %v1378, %v1376
    %v2187 = vpack.c.b16 %v1379, %v1377
    %v2188 = vpack.c.b16 %v1382, %v1380
    %v2189 = vpack.c.b16 %v1383, %v1381
    %v2190 = vpack.c.b16 %v1386, %v1384
    %v2191 = vpack.c.b16 %v1387, %v1385
    %v2192 = vpack.c.b16 %v1390, %v1388
    %v2193 = vpack.c.b16 %v1391, %v1389
    %v2194 = vpack.c.b16 %v1394, %v1392
    %v2195 = vpack.c.b16 %v1395, %v1393
    %v2196 = vpack.c.b16 %v1398, %v1396
    %v2197 = vpack.c.b16 %v1399, %v1397
    %v2198 = vpack.c.b16 %v1402, %v1400
    %v2199 = vpack.c.b16 %v1403, %v1401
    %v2200 = vpack.c.b16 %v1406, %v1404
    %v2201 = vpack.c.b16 %v1407, %v1405
    %v2202 = vpack.c.b16 %v1410, %v1408
    %v2203 = vpack.c.b16 %v1411, %v1409
    %v2204 = vpack.c.b16 %v1414, %v1412
    %v2205 = vpack.c.b16 %v1415, %v1413
    %v2206 = vpack.c.b16 %v1418, %v1416
    %v2207 = vpack.c.b16 %v1419, %v1417
    %v2208 = vpack.c.b16 %v1422, %v1420
    %v2209 = vpack.c.b16 %v1423, %v1421
    %v2210 = vpack.c.b16 %v1426, %v1424
    %v2211 = vpack.c.b16 %v1427, %v1425
    %v2212 = vpack.c.b16 %v1430, %v1428
    %v2213 = vpack.c.b16 %v1431, %v1429
    %v2214 = vpack.c.b16 %v1434, %v1432
    %v2215 = vpack.c.b16 %v1435, %v1433
    %v2216 = vpack.c.b16 %v1438, %v1436
    %v2217 = vpack.c.b16 %v1439, %v1437
    %v2218 = vpack.c.b16 %v1442, %v1440
    %v2219 = vpack.c.b16 %v1443, %v1441
    %v2220 = vpack.c.b16 %v1446, %v1444
    %v2221 = vpack.c.b16 %v1447, %v1445
    %v2222 = vpack.c.b16 %v1450, %v1448
    %v2223 = vpack.c.b16 %v1451, %v1449
    %v2224 = vpack.c.b16 %v1454, %v1452
    %v2225 = vpack.c.b16 %v1455, %v1453
    %v2226 = vpack.c.b16 %v1458, %v1456
    %v2227 = vpack.c.b16 %v1459, %v1457
    %v2228 = vpack.c.b16 %v1462, %v1460
    %v2229 = vpack.c.b16 %v1463, %v1461
    %v2230 = vpack.c.b16 %v1466, %v1464
    %v2231 = vpack.c.b16 %v1467, %v1465
    %v2232 = vpack.c.b16 %v1470, %v1468
    %v2233 = vpack.c.b16 %v1471, %v1469
    %v2234 = vpack.c.b16 %v1474, %v1472
    %v2235 = vpack.c.b16 %v1475, %v1473
    %v2236 = vpack.c.b16 %v1478, %v1476
    %v2237 = vpack.c.b16 %v1479, %v1477
    %v2238 = vpack.c.b16 %v1482, %v1480
    %v2239 = vpack.c.b16 %v1483, %v1481
    %v2240 = vpack.c.b16 %v1486, %v1484
    %v2241 = vpack.c.b16 %v1487, %v1485
    %v2242 = vpack.c.b16 %v1490, %v1488
    %v2243 = vpack.c.b16 %v1491, %v1489
    %v2244 = vpack.c.b16 %v1494, %v1492
    %v2245 = vpack.c.b16 %v1495, %v1493
    %v2246 = vpack.c.b16 %v1498, %v1496
    %v2247 = vpack.c.b16 %v1499, %v1497
    %v2248 = vpack.c.b16 %v1502, %v1500
    %v2249 = vpack.c.b16 %v1503, %v1501
    %v2250 = vpack.c.b16 %v1506, %v1504
    %v2251 = vpack.c.b16 %v1507, %v1505
    %v2252 = vpack.c.b16 %v1510, %v1508
    %v2253 = vpack.c.b16 %v1511, %v1509
    %v2254 = vpack.c.b16 %v1514, %v1512
    %v2255 = vpack.c.b16 %v1515, %v1513
    %v2256 = vpack.c.b16 %v1518, %v1516
    %v2257 = vpack.c.b16 %v1519, %v1517
    %v2258 = vpack.c.b16 %v1522, %v1520
    %v2259 = vpack.c.b16 %v1523, %v1521
    %v2260 = vpack.c.b16 %v1526, %v1524
    %v2261 = vpack.c.b16 %v1527, %v1525
    %v2262 = vpack.c.b16 %v1530, %v1528
    %v2263 = vpack.c.b16 %v1531, %v1529
    %v2264 = vpack.c.b16 %v1534, %v1532
    %v2265 = vpack.c.b16 %v1535, %v1533
    %v2266 = vpack.c.b16 %v1538, %v1536
    %v2267 = vpack.c.b16 %v1539, %v1537
    %v2268 = vpack.c.b16 %v1542, %v1540
    %v2269 = vpack.c.b16 %v1543, %v1541
    %v2270 = vpack.c.b16 %v1546, %v1544
    %v2271 = vpack.c.b16 %v1547, %v1545
    %v2272 = vpack.c.b16 %v1550, %v1548
    %v2273 = vpack.c.b16 %v1551, %v1549
    %v2274 = vpack.c.b16 %v1554, %v1552
    %v2275 = vpack.c.b16 %v1555, %v1553
    %v2276 = vpack.c.b16 %v1558, %v1556
    %v2277 = vpack.c.b16 %v1559, %v1557
    %v2278 = vpack.c.b16 %v1562, %v1560
    %v2279 = vpack.c.b16 %v1563, %v1561
    %v2280 = vpack.c.b16 %v1566, %v1564
    %v2281 = vpack.c.b16 %v1567, %v1565
    %v2282 = vpack.c.b16 %v1570, %v1568
    %v2283 = vpack.c.b16 %v1571, %v1569
    %v2284 = vpack.c.b16 %v1574, %v1572
    %v2285 = vpack.c.b16 %v1575, %v1573
    %v2286 = vpack.c.b16 %v1578, %v1576
    %v2287 = vpack.c.b16 %v1579, %v1577
    %v2288 = vpack.c.b16 %v1582, %v1580
    %v2289 = vpack.c.b16 %v1583, %v1581
    %v2290 = vpack.c.b16 %v1586, %v1584
    %v2291 = vpack.c.b16 %v1587, %v1585
    %v2292 = vpack.c.b16 %v1590, %v1588
    %v2293 = vpack.c.b16 %v1591, %v1589
    %v2294 = vpack.c.b16 %v1594, %v1592
    %v2295 = vpack.c.b16 %v1595, %v1593
    %v2296 = vpack.c.b16 %v1598, %v1596
    %v2297 = vpack.c.b16 %v1599, %v1597
    %v2298 = vpack.c.b16 %v1602, %v1600
    %v2299 = vpack.c.b16 %v1603, %v1601
    %v2300 = vpack.c.b16 %v1606, %v1604
    %v2301 = vpack.c.b16 %v1607, %v1605
    %v2302 = vpack.c.b16 %v1610, %v1608
    %v2303 = vpack.c.b16 %v1611, %v1609
    %v2304 = vpack.c.b16 %v1614, %v1612
    %v2305 = vpack.c.b16 %v1615, %v1613
    %v2306 = vpack.c.b16 %v1618, %v1616
    %v2307 = vpack.c.b16 %v1619, %v1617
    %v2308 = vpack.c.b16 %v1622, %v1620
    %v2309 = vpack.c.b16 %v1623, %v1621
    %v2310 = vpack.c.b16 %v1626, %v1624
    %v2311 = vpack.c.b16 %v1627, %v1625
    %v2312 = vpack.c.b16 %v1630, %v1628
    %v2313 = vpack.c.b16 %v1631, %v1629
    %v2314 = vpack.c.b16 %v1634, %v1632
    %v2315 = vpack.c.b16 %v1635, %v1633
    %v2316 = vpack.c.b16 %v1638, %v1636
    %v2317 = vpack.c.b16 %v1639, %v1637
    %v2318 = vpack.c.b16 %v1642, %v1640
    %v2319 = vpack.c.b16 %v1643, %v1641
    %v2320 = vpack.c.b16 %v1646, %v1644
    %v2321 = vpack.c.b16 %v1647, %v1645
    %v2322 = vpack.c.b16 %v1650, %v1648
    %v2323 = vpack.c.b16 %v1651, %v1649
    %v2324 = vpack.c.b16 %v1654, %v1652
    %v2325 = vpack.c.b16 %v1655, %v1653
    %v2326 = vpack.c.b16 %v1658, %v1656
    %v2327 = vpack.c.b16 %v1659, %v1657
    %v2328 = vpack.c.b16 %v1662, %v1660
    %v2329 = vpack.c.b16 %v1663, %v1661
    %v2330 = vpack.c.b16 %v1666, %v1664
    %v2331 = vpack.c.b16 %v1667, %v1665
    %v2332 = vpack.c.b16 %v1670, %v1668
    %v2333 = vpack.c.b16 %v1671, %v1669
    %v2334 = vpack.c.b16 %v1674, %v1672
    %v2335 = vpack.c.b16 %v1675, %v1673
    %v2336 = vpack.c.b16 %v1678, %v1676
    %v2337 = vpack.c.b16 %v1679, %v1677
    %v2338 = vpack.c.b16 %v1682, %v1680
    %v2339 = vpack.c.b16 %v1683, %v1681
    %v2340 = vpack.c.b16 %v1686, %v1684
    %v2341 = vpack.c.b16 %v1687, %v1685
    %v2342 = vpack.c.b16 %v1690, %v1688
    %v2343 = vpack.c.b16 %v1691, %v1689
    %v2344 = vpack.c.b16 %v1694, %v1692
    %v2345 = vpack.c.b16 %v1695, %v1693
    %v2346 = vpack.c.b16 %v1698, %v1696
    %v2347 = vpack.c.b16 %v1699, %v1697
    %v2348 = vpack.c.b16 %v1702, %v1700
    %v2349 = vpack.c.b16 %v1703, %v1701
    %v2350 = vpack.c.b16 %v1706, %v1704
    %v2351 = vpack.c.b16 %v1707, %v1705
    %v2352 = vpack.c.b16 %v1710, %v1708
    %v2353 = vpack.c.b16 %v1711, %v1709
    %v2354 = vpack.c.b16 %v1714, %v1712
    %v2355 = vpack.c.b16 %v1715, %v1713
    %v2356 = vpack.c.b16 %v1718, %v1716
    %v2357 = vpack.c.b16 %v1719, %v1717
    %v2358 = vpack.c.b16 %v1722, %v1720
    %v2359 = vpack.c.b16 %v1723, %v1721
    %v2360 = vpack.c.b16 %v1726, %v1724
    %v2361 = vpack.c.b16 %v1727, %v1725
    %v2362 = vpack.c.b16 %v1730, %v1728
    %v2363 = vpack.c.b16 %v1731, %v1729
    %v2364 = vpack.c.b16 %v1734, %v1732
    %v2365 = vpack.c.b16 %v1735, %v1733
    %v2366 = vpack.c.b16 %v1738, %v1736
    %v2367 = vpack.c.b16 %v1739, %v1737
    %v2368 = vpack.c.b16 %v1742, %v1740
    %v2369 = vpack.c.b16 %v1743, %v1741
    %v2370 = vpack.c.b16 %v1746, %v1744
    %v2371 = vpack.c.b16 %v1747, %v1745
    %v2372 = vpack.c.b16 %v1750, %v1748
    %v2373 = vpack.c.b16 %v1751, %v1749
    %v2374 = vpack.c.b16 %v1754, %v1752
    %v2375 = vpack.c.b16 %v1755, %v1753
    %v2376 = vpack.c.b16 %v1758, %v1756
    %v2377 = vpack.c.b16 %v1759, %v1757
    %v2378 = vpack.c.b16 %v1762, %v1760
    %v2379 = vpack.c.b16 %v1763, %v1761
    %v2380 = vpack.c.b16 %v1766, %v1764
    %v2381 = vpack.c.b16 %v1767, %v1765
    %v2382 = vpack.c.b16 %v1770, %v1768
    %v2383 = vpack.c.b16 %v1771, %v1769
    %v2384 = vpack.c.b16 %v1774, %v1772
    %v2385 = vpack.c.b16 %v1775, %v1773
    %v2386 = vpack.c.b16 %v1778, %v1776
    %v2387 = vpack.c.b16 %v1779, %v1777
    %v2388 = vpack.c.b16 %v1782, %v1780
    %v2389 = vpack.c.b16 %v1783, %v1781
    %v2390 = vpack.c.b16 %v1786, %v1784
    %v2391 = vpack.c.b16 %v1787, %v1785
    %v2392 = vpack.c.b16 %v1790, %v1788
    %v2393 = vpack.c.b16 %v1791, %v1789
    %v2394 = vpack.c.b16 %v1794, %v1792
    %v2395 = vpack.c.b16 %v1795, %v1793
    %v2396 = vpack.c.b16 %v1798, %v1796
    %v2397 = vpack.c.b16 %v1799, %v1797
    %v2398 = vpack.c.b16 %v1802, %v1800
    %v2399 = vpack.c.b16 %v1803, %v1801
    %v2400 = vpack.c.b16 %v1806, %v1804
    %v2401 = vpack.c.b16 %v1807, %v1805
    %v2402 = vpack.c.b16 %v1810, %v1808
    %v2403 = vpack.c.b16 %v1811, %v1809
    %v2404 = vpack.c.b16 %v1814, %v1812
    %v2405 = vpack.c.b16 %v1815, %v1813
    %v2406 = vpack.c.b16 %v1818, %v1816
    %v2407 = vpack.c.b16 %v1819, %v1817
    %v2408 = vpack.c.b16 %v1822, %v1820
    %v2409 = vpack.c.b16 %v1823, %v1821
    %v2410 = vpack.c.b16 %v1826, %v1824
    %v2411 = vpack.c.b16 %v1827, %v1825
    %v2412 = vpack.c.b16 %v1830, %v1828
    %v2413 = vpack.c.b16 %v1831, %v1829
    %v2414 = vpack.c.b16 %v1834, %v1832
    %v2415 = vpack.c.b16 %v1835, %v1833
    %v2416 = vpack.c.b16 %v1838, %v1836
    %v2417 = vpack.c.b16 %v1839, %v1837
    %v2418 = vpack.c.b16 %v1842, %v1840
    %v2419 = vpack.c.b16 %v1843, %v1841
    %v2420 = vpack.c.b16 %v1846, %v1844
    %v2421 = vpack.c.b16 %v1847, %v1845
    %v2422 = vpack.c.b16 %v1850, %v1848
    %v2423 = vpack.c.b16 %v1851, %v1849
    %v2424 = vpack.c.b16 %v1854, %v1852
    %v2425 = vpack.c.b16 %v1855, %v1853
    %v2426 = vpack.c.b16 %v1858, %v1856
    %v2427 = vpack.c.b16 %v1859, %v1857
    %v2428 = vpack.c.b16 %v1862, %v1860
    %v2429 = vpack.c.b16 %v1863, %v1861
    %v2430 = vpack.c.b16 %v1866, %v1864
    %v2431 = vpack.c.b16 %v1867, %v1865
    %v2432 = vpack.c.b16 %v1870, %v1868
    %v2433 = vpack.c.b16 %v1871, %v1869
    %v2434 = vpack.c.b16 %v1874, %v1872
    %v2435 = vpack.c.b16 %v1875, %v1873
    %v2436 = vpack.c.b16 %v1878, %v1876
    %v2437 = vpack.c.b16 %v1879, %v1877
    %v2438 = vpack.c.b16 %v1882, %v1880
    %v2439 = vpack.c.b16 %v1883, %v1881
    %v2440 = vpack.c.b16 %v1886, %v1884
    %v2441 = vpack.c.b16 %v1887, %v1885
    %v2442 = vpack.c.b16 %v1890, %v1888
    %v2443 = vpack.c.b16 %v1891, %v1889
    %v2444 = vpack.c.b16 %v1894, %v1892
    %v2445 = vpack.c.b16 %v1895, %v1893
    %v2446 = vpack.c.b16 %v1898, %v1896
    %v2447 = vpack.c.b16 %v1899, %v1897
    %v2448 = vpack.c.b16 %v1902, %v1900
    %v2449 = vpack.c.b16 %v1903, %v1901
    %v2450 = vpack.c.b16 %v1906, %v1904
    %v2451 = vpack.c.b16 %v1907, %v1905
    %v2452 = vpack.c.b16 %v1910, %v1908
    %v2453 = vpack.c.b16 %v1911, %v1909
    %v2454 = vpack.c.b16 %v1914, %v1912
    %v2455 = vpack.c.b16 %v1915, %v1913
    %v2456 = vpack.c.b16 %v1918, %v1916
    %v2457 = vpack.c.b16 %v1919, %v1917
    %v2458 = vpack.c.b16 %v1922, %v1920
    %v2459 = vpack.c.b16 %v1923, %v1921
    %v2460 = vpack.c.b16 %v1926, %v1924
    %v2461 = vpack.c.b16 %v1927, %v1925
    %v2462 = vpack.c.b16 %v1930, %v1928
    %v2463 = vpack.c.b16 %v1931, %v1929
    %v2464 = vpack.c.b16 %v1934, %v1932
    %v2465 = vpack.c.b16 %v1935, %v1933
    %v2466 = vpack.c.b16 %v1938, %v1936
    %v2467 = vpack.c.b16 %v1939, %v1937
    %v2468 = vpack.c.b16 %v1942, %v1940
    %v2469 = vpack.c.b16 %v1943, %v1941
    %v2470 = vpack.c.b16 %v1946, %v1944
    %v2471 = vpack.c.b16 %v1947, %v1945
    %v2472 = vpack.c.b16 %v1950, %v1948
    %v2473 = vpack.c.b16 %v1951, %v1949
    %v2474 = vpack.c.b16 %v1954, %v1952
    %v2475 = vpack.c.b16 %v1955, %v1953
    %v2476 = vpack.c.b16 %v1958, %v1956
    %v2477 = vpack.c.b16 %v1959, %v1957
    %v2478 = vpack.c.b16 %v1962, %v1960
    %v2479 = vpack.c.b16 %v1963, %v1961
    %v2480 = vpack.c.b16 %v1966, %v1964
    %v2481 = vpack.c.b16 %v1967, %v1965
    %v2482 = vpack.c.b16 %v1970, %v1968
    %v2483 = vpack.c.b16 %v1971, %v1969
    %v2484 = vpack.c.b16 %v1974, %v1972
    %v2485 = vpack.c.b16 %v1975, %v1973
    %v2486 = vpack.c.b16 %v1978, %v1976
    %v2487 = vpack.c.b16 %v1979, %v1977
    %v2488 = vpack.c.b16 %v1982, %v1980
    %v2489 = vpack.c.b16 %v1983, %v1981
    %v2490 = vpack.c.b16 %v1986, %v1984
    %v2491 = vpack.c.b16 %v1987, %v1985
    %v2492 = vpack.c.b16 %v1990, %v1988
    %v2493 = vpack.c.b16 %v1991, %v1989
    %v2494 = vpack.c.b16 %v1994, %v1992
    %v2495 = vpack.c.b16 %v1995, %v1993
    %v2496 = vpack.c.b16 %v1998, %v1996
    %v2497 = vpack.c.b16 %v1999, %v1997
    %v2498 = vpack.c.b16 %v2002, %v2000
    %v2499 = vpack.c.b16 %v2003, %v2001
    %v2500 = vpack.c.b16 %v2006, %v2004
    %v2501 = vpack.c.b16 %v2007, %v2005
    %v2502 = vpack.c.b16 %v2010, %v2008
    %v2503 = vpack.c.b16 %v2011, %v2009
    %v2504 = vpack.c.b16 %v2014, %v2012
    %v2505 = vpack.c.b16 %v2015, %v2013
    %v2506 = vpack.c.b16 %v2018, %v2016
    %v2507 = vpack.c.b16 %v2019, %v2017
    %v2508 = vpack.c.b16 %v2022, %v2020
    %v2509 = vpack.c.b16 %v2023, %v2021
    %v2510 = vpack.c.b16 %v2026, %v2024
    %v2511 = vpack.c.b16 %v2027, %v2025
    %v2512 = vpack.c.b16 %v2030, %v2028
    %v2513 = vpack.c.b16 %v2031, %v2029
    %v2514 = vpack.c.b16 %v2034, %v2032
    %v2515 = vpack.c.b16 %v2035, %v2033
    %v2516 = vpack.c.b16 %v2038, %v2036
    %v2517 = vpack.c.b16 %v2039, %v2037
    %v2518 = vpack.c.b16 %v2042, %v2040
    %v2519 = vpack.c.b16 %v2043, %v2041
    %v2520 = vpack.c.b16 %v2046, %v2044
    %v2521 = vpack.c.b16 %v2047, %v2045
    %v2522 = vpack.c.b16 %v2050, %v2048
    %v2523 = vpack.c.b16 %v2051, %v2049
    %v2524 = vpack.c.b16 %v2054, %v2052
    %v2525 = vpack.c.b16 %v2055, %v2053
    %v2526 = vpack.c.b16 %v2058, %v2056
    %v2527 = vpack.c.b16 %v2059, %v2057
    %v2528 = vpack.c.b16 %v2062, %v2060
    %v2529 = vpack.c.b16 %v2063, %v2061
    %v2530 = vpack.c.b16 %v2064, %v2064
    %v2531 = vpack.c.b16 %v2065, %v2065
    %vm2996 = vcmask 64512
    %v2998 = vsel %vm2996, %v193, 0
    %vm3000 = vcmask 1043456
    %v3002 = vsel %vm3000, %v2530, 0
    %v3005 = vsel %vm3000, %v2531, 0
    %3007 = vmatprep.subr.bf16.mxu0 %v2067
    %3008 = vmatpush1.bf16.msra.mxu0 %v2066
    %3009 = vmatprep.subr.bf16.mxu0 %v2069
    %3010 = vmatpush1.bf16.msra.mxu0 %v2068
    %3011 = vmatprep.subr.bf16.mxu0 %v2071
    %3012 = vmatpush1.bf16.msra.mxu0 %v2070
    %3013 = vmatprep.subr.bf16.mxu0 %v2073
    %3014 = vmatpush1.bf16.msra.mxu0 %v2072
    %3015 = vmatprep.subr.bf16.mxu0 %v2075
    %3016 = vmatpush1.bf16.msra.mxu0 %v2074
    %3017 = vmatprep.subr.bf16.mxu0 %v2077
    %3018 = vmatpush1.bf16.msra.mxu0 %v2076
    %3019 = vmatprep.subr.bf16.mxu0 %v2079
    %3020 = vmatpush1.bf16.msra.mxu0 %v2078
    %3021 = vmatprep.subr.bf16.mxu0 %v2081
    %3022 = vmatpush1.bf16.msra.mxu0 %v2080
    %3023 = vmatprep.subr.bf16.mxu0 %v2083
    %3024 = vmatpush1.bf16.msra.mxu0 %v2082
    %3025 = vmatprep.subr.bf16.mxu0 %v2085
    %3026 = vmatpush1.bf16.msra.mxu0 %v2084
    %3027 = vmatprep.subr.bf16.mxu0 %v2087
    %3028 = vmatpush1.bf16.msra.mxu0 %v2086
    %3029 = vmatprep.subr.bf16.mxu0 %v2089
    %3030 = vmatpush1.bf16.msra.mxu0 %v2088
    %3031 = vmatprep.subr.bf16.mxu0 %v2091
    %3032 = vmatpush1.bf16.msra.mxu0 %v2090
    %3033 = vmatprep.subr.bf16.mxu0 %v2093
    %3034 = vmatpush1.bf16.msra.mxu0 %v2092
    %3035 = vmatprep.subr.bf16.mxu0 %v2095
    %3036 = vmatpush1.bf16.msra.mxu0 %v2094
    %3037 = vmatprep.subr.bf16.mxu0 %v2097
    %3038 = vmatpush1.bf16.msra.mxu0 %v2096
    %3039 = vmatprep.mubr.bf16.mxu0 %v165
    %3040 = vmatmul.mubr.bf16.gmra.mrb[0].mxu0 %v164
    %v3041 = vpop.f32.mrb[0].mxu0
    %v3042 = vadd.f32 %v664, %v3041
    %v3043 = vpop.f32.mrb[0].mxu0
    %v3044 = vadd.f32 %v668, %v3043
    %v3045 = vpop.f32.mrb[0].mxu0
    %v3046 = vadd.f32 %v664, %v3045
    %v3047 = vpop.f32.mrb[0].mxu0
    %v3048 = vadd.f32 %v668, %v3047
    %3049 = vdwg.mxu0
    %3050 = vmatprep.subr.bf16.mxu0 %v2099
    %3051 = vmatpush1.bf16.msra.mxu0 %v2098
    %3052 = vmatprep.subr.bf16.mxu0 %v2101
    %3053 = vmatpush1.bf16.msra.mxu0 %v2100
    %3054 = vmatprep.subr.bf16.mxu0 %v2103
    %3055 = vmatpush1.bf16.msra.mxu0 %v2102
    %3056 = vmatprep.subr.bf16.mxu0 %v2105
    %3057 = vmatpush1.bf16.msra.mxu0 %v2104
    %3058 = vmatprep.subr.bf16.mxu0 %v2107
    %3059 = vmatpush1.bf16.msra.mxu0 %v2106
    %3060 = vmatprep.subr.bf16.mxu0 %v2109
    %3061 = vmatpush1.bf16.msra.mxu0 %v2108
    %3062 = vmatprep.subr.bf16.mxu0 %v2111
    %3063 = vmatpush1.bf16.msra.mxu0 %v2110
    %3064 = vmatprep.subr.bf16.mxu0 %v2113
    %3065 = vmatpush1.bf16.msra.mxu0 %v2112
    %3066 = vmatprep.subr.bf16.mxu0 %v2115
    %3067 = vmatpush1.bf16.msra.mxu0 %v2114
    %3068 = vmatprep.subr.bf16.mxu0 %v2117
    %3069 = vmatpush1.bf16.msra.mxu0 %v2116
    %3070 = vmatprep.subr.bf16.mxu0 %v2119
    %3071 = vmatpush1.bf16.msra.mxu0 %v2118
    %3072 = vmatprep.subr.bf16.mxu0 %v2121
    %3073 = vmatpush1.bf16.msra.mxu0 %v2120
    %3074 = vmatprep.subr.bf16.mxu0 %v2123
    %3075 = vmatpush1.bf16.msra.mxu0 %v2122
    %3076 = vmatprep.subr.bf16.mxu0 %v2125
    %3077 = vmatpush1.bf16.msra.mxu0 %v2124
    %3078 = vmatprep.subr.bf16.mxu0 %v2127
    %3079 = vmatpush1.bf16.msra.mxu0 %v2126
    %3080 = vmatprep.subr.bf16.mxu0 %v2129
    %3081 = vmatpush1.bf16.msra.mxu0 %v2128
    %3082 = vmatprep.mubr.bf16.mxu0 %v167
    %3083 = vmatmul.mubr.bf16.gmra.mrb[0].mxu0 %v166
    %v3084 = vpop.f32.mrb[0].mxu0
    %v3085 = vadd.f32 %v3042, %v3084
    %v3086 = vpop.f32.mrb[0].mxu0
    %v3087 = vadd.f32 %v3044, %v3086
    %v3088 = vpop.f32.mrb[0].mxu0
    %v3089 = vadd.f32 %v3046, %v3088
    %v3090 = vpop.f32.mrb[0].mxu0
    %v3091 = vadd.f32 %v3048, %v3090
    %3092 = vdwg.mxu0
    %3093 = vmatprep.subr.bf16.mxu0 %v2131
    %3094 = vmatpush1.bf16.msra.mxu0 %v2130
    %3095 = vmatprep.subr.bf16.mxu0 %v2133
    %3096 = vmatpush1.bf16.msra.mxu0 %v2132
    %3097 = vmatprep.subr.bf16.mxu0 %v2135
    %3098 = vmatpush1.bf16.msra.mxu0 %v2134
    %3099 = vmatprep.subr.bf16.mxu0 %v2137
    %3100 = vmatpush1.bf16.msra.mxu0 %v2136
    %3101 = vmatprep.subr.bf16.mxu0 %v2139
    %3102 = vmatpush1.bf16.msra.mxu0 %v2138
    %3103 = vmatprep.subr.bf16.mxu0 %v2141
    %3104 = vmatpush1.bf16.msra.mxu0 %v2140
    %3105 = vmatprep.subr.bf16.mxu0 %v2143
    %3106 = vmatpush1.bf16.msra.mxu0 %v2142
    %3107 = vmatprep.subr.bf16.mxu0 %v2145
    %3108 = vmatpush1.bf16.msra.mxu0 %v2144
    %3109 = vmatprep.subr.bf16.mxu0 %v2147
    %3110 = vmatpush1.bf16.msra.mxu0 %v2146
    %3111 = vmatprep.subr.bf16.mxu0 %v2149
    %3112 = vmatpush1.bf16.msra.mxu0 %v2148
    %3113 = vmatprep.subr.bf16.mxu0 %v2151
    %3114 = vmatpush1.bf16.msra.mxu0 %v2150
    %3115 = vmatprep.subr.bf16.mxu0 %v2153
    %3116 = vmatpush1.bf16.msra.mxu0 %v2152
    %3117 = vmatprep.subr.bf16.mxu0 %v2155
    %3118 = vmatpush1.bf16.msra.mxu0 %v2154
    %3119 = vmatprep.subr.bf16.mxu0 %v2157
    %3120 = vmatpush1.bf16.msra.mxu0 %v2156
    %3121 = vmatprep.subr.bf16.mxu0 %v2159
    %3122 = vmatpush1.bf16.msra.mxu0 %v2158
    %3123 = vmatprep.subr.bf16.mxu0 %v2161
    %3124 = vmatpush1.bf16.msra.mxu0 %v2160
    %3125 = vmatprep.mubr.bf16.mxu0 %v169
    %3126 = vmatmul.mubr.bf16.gmra.mrb[0].mxu0 %v168
    %v3127 = vpop.f32.mrb[0].mxu0
    %v3128 = vadd.f32 %v3085, %v3127
    %v3129 = vpop.f32.mrb[0].mxu0
    %v3130 = vadd.f32 %v3087, %v3129
    %v3131 = vpop.f32.mrb[0].mxu0
    %v3132 = vadd.f32 %v3089, %v3131
    %v3133 = vpop.f32.mrb[0].mxu0
    %v3134 = vadd.f32 %v3091, %v3133
    %3135 = vdwg.mxu0
    %3136 = vmatprep.subr.bf16.mxu0 %v2163
    %3137 = vmatpush1.bf16.msra.mxu0 %v2162
    %3138 = vmatprep.subr.bf16.mxu0 %v2165
    %3139 = vmatpush1.bf16.msra.mxu0 %v2164
    %3140 = vmatprep.subr.bf16.mxu0 %v2167
    %3141 = vmatpush1.bf16.msra.mxu0 %v2166
    %3142 = vmatprep.subr.bf16.mxu0 %v2169
    %3143 = vmatpush1.bf16.msra.mxu0 %v2168
    %3144 = vmatprep.subr.bf16.mxu0 %v2171
    %3145 = vmatpush1.bf16.msra.mxu0 %v2170
    %3146 = vmatprep.subr.bf16.mxu0 %v2173
    %3147 = vmatpush1.bf16.msra.mxu0 %v2172
    %3148 = vmatprep.subr.bf16.mxu0 %v2175
    %3149 = vmatpush1.bf16.msra.mxu0 %v2174
    %3150 = vmatprep.subr.bf16.mxu0 %v2177
    %3151 = vmatpush1.bf16.msra.mxu0 %v2176
    %3152 = vmatprep.subr.bf16.mxu0 %v2179
    %3153 = vmatpush1.bf16.msra.mxu0 %v2178
    %3154 = vmatprep.subr.bf16.mxu0 %v2181
    %3155 = vmatpush1.bf16.msra.mxu0 %v2180
    %3156 = vmatprep.subr.bf16.mxu0 %v2183
    %3157 = vmatpush1.bf16.msra.mxu0 %v2182
    %3158 = vmatprep.subr.bf16.mxu0 %v2185
    %3159 = vmatpush1.bf16.msra.mxu0 %v2184
    %3160 = vmatprep.subr.bf16.mxu0 %v2187
    %3161 = vmatpush1.bf16.msra.mxu0 %v2186
    %3162 = vmatprep.subr.bf16.mxu0 %v2189
    %3163 = vmatpush1.bf16.msra.mxu0 %v2188
    %3164 = vmatprep.subr.bf16.mxu0 %v2191
    %3165 = vmatpush1.bf16.msra.mxu0 %v2190
    %3166 = vmatprep.subr.bf16.mxu0 %v2193
    %3167 = vmatpush1.bf16.msra.mxu0 %v2192
    %3168 = vmatprep.mubr.bf16.mxu0 %v171
    %3169 = vmatmul.mubr.bf16.gmra.mrb[0].mxu0 %v170
    %v3170 = vpop.f32.mrb[0].mxu0
    %v3171 = vadd.f32 %v3128, %v3170
    %v3172 = vpop.f32.mrb[0].mxu0
    %v3173 = vadd.f32 %v3130, %v3172
    %v3174 = vpop.f32.mrb[0].mxu0
    %v3175 = vadd.f32 %v3132, %v3174
    %v3176 = vpop.f32.mrb[0].mxu0
    %v3177 = vadd.f32 %v3134, %v3176
    %3178 = vdwg.mxu0
    %3179 = vmatprep.subr.bf16.mxu0 %v2195
    %3180 = vmatpush1.bf16.msra.mxu0 %v2194
    %3181 = vmatprep.subr.bf16.mxu0 %v2197
    %3182 = vmatpush1.bf16.msra.mxu0 %v2196
    %3183 = vmatprep.subr.bf16.mxu0 %v2199
    %3184 = vmatpush1.bf16.msra.mxu0 %v2198
    %3185 = vmatprep.subr.bf16.mxu0 %v2201
    %3186 = vmatpush1.bf16.msra.mxu0 %v2200
    %3187 = vmatprep.subr.bf16.mxu0 %v2203
    %3188 = vmatpush1.bf16.msra.mxu0 %v2202
    %3189 = vmatprep.subr.bf16.mxu0 %v2205
    %3190 = vmatpush1.bf16.msra.mxu0 %v2204
    %3191 = vmatprep.subr.bf16.mxu0 %v2207
    %3192 = vmatpush1.bf16.msra.mxu0 %v2206
    %3193 = vmatprep.subr.bf16.mxu0 %v2209
    %3194 = vmatpush1.bf16.msra.mxu0 %v2208
    %3195 = vmatprep.subr.bf16.mxu0 %v2211
    %3196 = vmatpush1.bf16.msra.mxu0 %v2210
    %3197 = vmatprep.subr.bf16.mxu0 %v2213
    %3198 = vmatpush1.bf16.msra.mxu0 %v2212
    %3199 = vmatprep.subr.bf16.mxu0 %v2215
    %3200 = vmatpush1.bf16.msra.mxu0 %v2214
    %3201 = vmatprep.subr.bf16.mxu0 %v2217
    %3202 = vmatpush1.bf16.msra.mxu0 %v2216
    %3203 = vmatprep.subr.bf16.mxu0 %v2219
    %3204 = vmatpush1.bf16.msra.mxu0 %v2218
    %3205 = vmatprep.subr.bf16.mxu0 %v2221
    %3206 = vmatpush1.bf16.msra.mxu0 %v2220
    %3207 = vmatprep.subr.bf16.mxu0 %v2223
    %3208 = vmatpush1.bf16.msra.mxu0 %v2222
    %3209 = vmatprep.subr.bf16.mxu0 %v2225
    %3210 = vmatpush1.bf16.msra.mxu0 %v2224
    %3211 = vmatprep.mubr.bf16.mxu0 %v173
    %3212 = vmatmul.mubr.bf16.gmra.mrb[0].mxu0 %v172
    %v3213 = vpop.f32.mrb[0].mxu0
    %v3214 = vadd.f32 %v3171, %v3213
    %v3215 = vpop.f32.mrb[0].mxu0
    %v3216 = vadd.f32 %v3173, %v3215
    %v3217 = vpop.f32.mrb[0].mxu0
    %v3218 = vadd.f32 %v3175, %v3217
    %v3219 = vpop.f32.mrb[0].mxu0
    %v3220 = vadd.f32 %v3177, %v3219
    %3221 = vdwg.mxu0
    %3222 = vmatprep.subr.bf16.mxu0 %v2227
    %3223 = vmatpush1.bf16.msra.mxu0 %v2226
    %3224 = vmatprep.subr.bf16.mxu0 %v2229
    %3225 = vmatpush1.bf16.msra.mxu0 %v2228
    %3226 = vmatprep.subr.bf16.mxu0 %v2231
    %3227 = vmatpush1.bf16.msra.mxu0 %v2230
    %3228 = vmatprep.subr.bf16.mxu0 %v2233
    %3229 = vmatpush1.bf16.msra.mxu0 %v2232
    %3230 = vmatprep.subr.bf16.mxu0 %v2235
    %3231 = vmatpush1.bf16.msra.mxu0 %v2234
    %3232 = vmatprep.subr.bf16.mxu0 %v2237
    %3233 = vmatpush1.bf16.msra.mxu0 %v2236
    %3234 = vmatprep.subr.bf16.mxu0 %v2239
    %3235 = vmatpush1.bf16.msra.mxu0 %v2238
    %3236 = vmatprep.subr.bf16.mxu0 %v2241
    %3237 = vmatpush1.bf16.msra.mxu0 %v2240
    %3238 = vmatprep.subr.bf16.mxu0 %v2243
    %3239 = vmatpush1.bf16.msra.mxu0 %v2242
    %3240 = vmatprep.subr.bf16.mxu0 %v2245
    %3241 = vmatpush1.bf16.msra.mxu0 %v2244
    %3242 = vmatprep.subr.bf16.mxu0 %v2247
    %3243 = vmatpush1.bf16.msra.mxu0 %v2246
    %3244 = vmatprep.subr.bf16.mxu0 %v2249
    %3245 = vmatpush1.bf16.msra.mxu0 %v2248
    %3246 = vmatprep.subr.bf16.mxu0 %v2251
    %3247 = vmatpush1.bf16.msra.mxu0 %v2250
    %3248 = vmatprep.subr.bf16.mxu0 %v2253
    %3249 = vmatpush1.bf16.msra.mxu0 %v2252
    %3250 = vmatprep.subr.bf16.mxu0 %v2255
    %3251 = vmatpush1.bf16.msra.mxu0 %v2254
    %3252 = vmatprep.subr.bf16.mxu0 %v2257
    %3253 = vmatpush1.bf16.msra.mxu0 %v2256
    %3254 = vmatprep.mubr.bf16.mxu0 %v175
    %3255 = vmatmul.mubr.bf16.gmra.mrb[0].mxu0 %v174
    %v3256 = vpop.f32.mrb[0].mxu0
    %v3257 = vadd.f32 %v3214, %v3256
    %v3258 = vpop.f32.mrb[0].mxu0
    %v3259 = vadd.f32 %v3216, %v3258
    %v3260 = vpop.f32.mrb[0].mxu0
    %v3261 = vadd.f32 %v3218, %v3260
    %v3262 = vpop.f32.mrb[0].mxu0
    %v3263 = vadd.f32 %v3220, %v3262
    %3264 = vdwg.mxu0
    %3265 = vmatprep.subr.bf16.mxu0 %v2259
    %3266 = vmatpush1.bf16.msra.mxu0 %v2258
    %3267 = vmatprep.subr.bf16.mxu0 %v2261
    %3268 = vmatpush1.bf16.msra.mxu0 %v2260
    %3269 = vmatprep.subr.bf16.mxu0 %v2263
    %3270 = vmatpush1.bf16.msra.mxu0 %v2262
    %3271 = vmatprep.subr.bf16.mxu0 %v2265
    %3272 = vmatpush1.bf16.msra.mxu0 %v2264
    %3273 = vmatprep.subr.bf16.mxu0 %v2267
    %3274 = vmatpush1.bf16.msra.mxu0 %v2266
    %3275 = vmatprep.subr.bf16.mxu0 %v2269
    %3276 = vmatpush1.bf16.msra.mxu0 %v2268
    %3277 = vmatprep.subr.bf16.mxu0 %v2271
    %3278 = vmatpush1.bf16.msra.mxu0 %v2270
    %3279 = vmatprep.subr.bf16.mxu0 %v2273
    %3280 = vmatpush1.bf16.msra.mxu0 %v2272
    %3281 = vmatprep.subr.bf16.mxu0 %v2275
    %3282 = vmatpush1.bf16.msra.mxu0 %v2274
    %3283 = vmatprep.subr.bf16.mxu0 %v2277
    %3284 = vmatpush1.bf16.msra.mxu0 %v2276
    %3285 = vmatprep.subr.bf16.mxu0 %v2279
    %3286 = vmatpush1.bf16.msra.mxu0 %v2278
    %3287 = vmatprep.subr.bf16.mxu0 %v2281
    %3288 = vmatpush1.bf16.msra.mxu0 %v2280
    %3289 = vmatprep.subr.bf16.mxu0 %v2283
    %3290 = vmatpush1.bf16.msra.mxu0 %v2282
    %3291 = vmatprep.subr.bf16.mxu0 %v2285
    %3292 = vmatpush1.bf16.msra.mxu0 %v2284
    %3293 = vmatprep.subr.bf16.mxu0 %v2287
    %3294 = vmatpush1.bf16.msra.mxu0 %v2286
    %3295 = vmatprep.subr.bf16.mxu0 %v2289
    %3296 = vmatpush1.bf16.msra.mxu0 %v2288
    %3297 = vmatprep.mubr.bf16.mxu0 %v177
    %3298 = vmatmul.mubr.bf16.gmra.mrb[0].mxu0 %v176
    %v3299 = vpop.f32.mrb[0].mxu0
    %v3300 = vadd.f32 %v3257, %v3299
    %v3301 = vpop.f32.mrb[0].mxu0
    %v3302 = vadd.f32 %v3259, %v3301
    %v3303 = vpop.f32.mrb[0].mxu0
    %v3304 = vadd.f32 %v3261, %v3303
    %v3305 = vpop.f32.mrb[0].mxu0
    %v3306 = vadd.f32 %v3263, %v3305
    %3307 = vdwg.mxu0
    %3308 = vmatprep.subr.bf16.mxu0 %v2291
    %3309 = vmatpush1.bf16.msra.mxu0 %v2290
    %3310 = vmatprep.subr.bf16.mxu0 %v2293
    %3311 = vmatpush1.bf16.msra.mxu0 %v2292
    %3312 = vmatprep.subr.bf16.mxu0 %v2295
    %3313 = vmatpush1.bf16.msra.mxu0 %v2294
    %3314 = vmatprep.subr.bf16.mxu0 %v2297
    %3315 = vmatpush1.bf16.msra.mxu0 %v2296
    %3316 = vmatprep.subr.bf16.mxu0 %v2299
    %3317 = vmatpush1.bf16.msra.mxu0 %v2298
    %3318 = vmatprep.subr.bf16.mxu0 %v2301
    %3319 = vmatpush1.bf16.msra.mxu0 %v2300
    %3320 = vmatprep.subr.bf16.mxu0 %v2303
    %3321 = vmatpush1.bf16.msra.mxu0 %v2302
    %3322 = vmatprep.subr.bf16.mxu0 %v2305
    %3323 = vmatpush1.bf16.msra.mxu0 %v2304
    %3324 = vmatprep.subr.bf16.mxu0 %v2307
    %3325 = vmatpush1.bf16.msra.mxu0 %v2306
    %3326 = vmatprep.subr.bf16.mxu0 %v2309
    %3327 = vmatpush1.bf16.msra.mxu0 %v2308
    %3328 = vmatprep.subr.bf16.mxu0 %v2311
    %3329 = vmatpush1.bf16.msra.mxu0 %v2310
    %3330 = vmatprep.subr.bf16.mxu0 %v2313
    %3331 = vmatpush1.bf16.msra.mxu0 %v2312
    %3332 = vmatprep.subr.bf16.mxu0 %v2315
    %3333 = vmatpush1.bf16.msra.mxu0 %v2314
    %3334 = vmatprep.subr.bf16.mxu0 %v2317
    %3335 = vmatpush1.bf16.msra.mxu0 %v2316
    %3336 = vmatprep.subr.bf16.mxu0 %v2319
    %3337 = vmatpush1.bf16.msra.mxu0 %v2318
    %3338 = vmatprep.subr.bf16.mxu0 %v2321
    %3339 = vmatpush1.bf16.msra.mxu0 %v2320
    %3340 = vmatprep.mubr.bf16.mxu0 %v179
    %3341 = vmatmul.mubr.bf16.gmra.mrb[0].mxu0 %v178
    %v3342 = vpop.f32.mrb[0].mxu0
    %v3343 = vadd.f32 %v3300, %v3342
    %v3344 = vpop.f32.mrb[0].mxu0
    %v3345 = vadd.f32 %v3302, %v3344
    %v3346 = vpop.f32.mrb[0].mxu0
    %v3347 = vadd.f32 %v3304, %v3346
    %v3348 = vpop.f32.mrb[0].mxu0
    %v3349 = vadd.f32 %v3306, %v3348
    %3350 = vdwg.mxu0
    %3351 = vmatprep.subr.bf16.mxu0 %v2323
    %3352 = vmatpush1.bf16.msra.mxu0 %v2322
    %3353 = vmatprep.subr.bf16.mxu0 %v2325
    %3354 = vmatpush1.bf16.msra.mxu0 %v2324
    %3355 = vmatprep.subr.bf16.mxu0 %v2327
    %3356 = vmatpush1.bf16.msra.mxu0 %v2326
    %3357 = vmatprep.subr.bf16.mxu0 %v2329
    %3358 = vmatpush1.bf16.msra.mxu0 %v2328
    %3359 = vmatprep.subr.bf16.mxu0 %v2331
    %3360 = vmatpush1.bf16.msra.mxu0 %v2330
    %3361 = vmatprep.subr.bf16.mxu0 %v2333
    %3362 = vmatpush1.bf16.msra.mxu0 %v2332
    %3363 = vmatprep.subr.bf16.mxu0 %v2335
    %3364 = vmatpush1.bf16.msra.mxu0 %v2334
    %3365 = vmatprep.subr.bf16.mxu0 %v2337
    %3366 = vmatpush1.bf16.msra.mxu0 %v2336
    %3367 = vmatprep.subr.bf16.mxu0 %v2339
    %3368 = vmatpush1.bf16.msra.mxu0 %v2338
    %3369 = vmatprep.subr.bf16.mxu0 %v2341
    %3370 = vmatpush1.bf16.msra.mxu0 %v2340
    %3371 = vmatprep.subr.bf16.mxu0 %v2343
    %3372 = vmatpush1.bf16.msra.mxu0 %v2342
    %3373 = vmatprep.subr.bf16.mxu0 %v2345
    %3374 = vmatpush1.bf16.msra.mxu0 %v2344
    %3375 = vmatprep.subr.bf16.mxu0 %v2347
    %3376 = vmatpush1.bf16.msra.mxu0 %v2346
    %3377 = vmatprep.subr.bf16.mxu0 %v2349
    %3378 = vmatpush1.bf16.msra.mxu0 %v2348
    %3379 = vmatprep.subr.bf16.mxu0 %v2351
    %3380 = vmatpush1.bf16.msra.mxu0 %v2350
    %3381 = vmatprep.subr.bf16.mxu0 %v2353
    %3382 = vmatpush1.bf16.msra.mxu0 %v2352
    %3383 = vmatprep.mubr.bf16.mxu0 %v181
    %3384 = vmatmul.mubr.bf16.gmra.mrb[0].mxu0 %v180
    %v3385 = vpop.f32.mrb[0].mxu0
    %v3386 = vadd.f32 %v3343, %v3385
    %v3387 = vpop.f32.mrb[0].mxu0
    %v3388 = vadd.f32 %v3345, %v3387
    %v3389 = vpop.f32.mrb[0].mxu0
    %v3390 = vadd.f32 %v3347, %v3389
    %v3391 = vpop.f32.mrb[0].mxu0
    %v3392 = vadd.f32 %v3349, %v3391
    %3393 = vdwg.mxu0
    %3394 = vmatprep.subr.bf16.mxu0 %v2355
    %3395 = vmatpush1.bf16.msra.mxu0 %v2354
    %3396 = vmatprep.subr.bf16.mxu0 %v2357
    %3397 = vmatpush1.bf16.msra.mxu0 %v2356
    %3398 = vmatprep.subr.bf16.mxu0 %v2359
    %3399 = vmatpush1.bf16.msra.mxu0 %v2358
    %3400 = vmatprep.subr.bf16.mxu0 %v2361
    %3401 = vmatpush1.bf16.msra.mxu0 %v2360
    %3402 = vmatprep.subr.bf16.mxu0 %v2363
    %3403 = vmatpush1.bf16.msra.mxu0 %v2362
    %3404 = vmatprep.subr.bf16.mxu0 %v2365
    %3405 = vmatpush1.bf16.msra.mxu0 %v2364
    %3406 = vmatprep.subr.bf16.mxu0 %v2367
    %3407 = vmatpush1.bf16.msra.mxu0 %v2366
    %3408 = vmatprep.subr.bf16.mxu0 %v2369
    %3409 = vmatpush1.bf16.msra.mxu0 %v2368
    %3410 = vmatprep.subr.bf16.mxu0 %v2371
    %3411 = vmatpush1.bf16.msra.mxu0 %v2370
    %3412 = vmatprep.subr.bf16.mxu0 %v2373
    %3413 = vmatpush1.bf16.msra.mxu0 %v2372
    %3414 = vmatprep.subr.bf16.mxu0 %v2375
    %3415 = vmatpush1.bf16.msra.mxu0 %v2374
    %3416 = vmatprep.subr.bf16.mxu0 %v2377
    %3417 = vmatpush1.bf16.msra.mxu0 %v2376
    %3418 = vmatprep.subr.bf16.mxu0 %v2379
    %3419 = vmatpush1.bf16.msra.mxu0 %v2378
    %3420 = vmatprep.subr.bf16.mxu0 %v2381
    %3421 = vmatpush1.bf16.msra.mxu0 %v2380
    %3422 = vmatprep.subr.bf16.mxu0 %v2383
    %3423 = vmatpush1.bf16.msra.mxu0 %v2382
    %3424 = vmatprep.subr.bf16.mxu0 %v2385
    %3425 = vmatpush1.bf16.msra.mxu0 %v2384
    %3426 = vmatprep.mubr.bf16.mxu0 %v183
    %3427 = vmatmul.mubr.bf16.gmra.mrb[0].mxu0 %v182
    %v3428 = vpop.f32.mrb[0].mxu0
    %v3429 = vadd.f32 %v3386, %v3428
    %v3430 = vpop.f32.mrb[0].mxu0
    %v3431 = vadd.f32 %v3388, %v3430
    %v3432 = vpop.f32.mrb[0].mxu0
    %v3433 = vadd.f32 %v3390, %v3432
    %v3434 = vpop.f32.mrb[0].mxu0
    %v3435 = vadd.f32 %v3392, %v3434
    %3436 = vdwg.mxu0
    %3437 = vmatprep.subr.bf16.mxu0 %v2387
    %3438 = vmatpush1.bf16.msra.mxu0 %v2386
    %3439 = vmatprep.subr.bf16.mxu0 %v2389
    %3440 = vmatpush1.bf16.msra.mxu0 %v2388
    %3441 = vmatprep.subr.bf16.mxu0 %v2391
    %3442 = vmatpush1.bf16.msra.mxu0 %v2390
    %3443 = vmatprep.subr.bf16.mxu0 %v2393
    %3444 = vmatpush1.bf16.msra.mxu0 %v2392
    %3445 = vmatprep.subr.bf16.mxu0 %v2395
    %3446 = vmatpush1.bf16.msra.mxu0 %v2394
    %3447 = vmatprep.subr.bf16.mxu0 %v2397
    %3448 = vmatpush1.bf16.msra.mxu0 %v2396
    %3449 = vmatprep.subr.bf16.mxu0 %v2399
    %3450 = vmatpush1.bf16.msra.mxu0 %v2398
    %3451 = vmatprep.subr.bf16.mxu0 %v2401
    %3452 = vmatpush1.bf16.msra.mxu0 %v2400
    %3453 = vmatprep.subr.bf16.mxu0 %v2403
    %3454 = vmatpush1.bf16.msra.mxu0 %v2402
    %3455 = vmatprep.subr.bf16.mxu0 %v2405
    %3456 = vmatpush1.bf16.msra.mxu0 %v2404
    %3457 = vmatprep.subr.bf16.mxu0 %v2407
    %3458 = vmatpush1.bf16.msra.mxu0 %v2406
    %3459 = vmatprep.subr.bf16.mxu0 %v2409
    %3460 = vmatpush1.bf16.msra.mxu0 %v2408
    %3461 = vmatprep.subr.bf16.mxu0 %v2411
    %3462 = vmatpush1.bf16.msra.mxu0 %v2410
    %3463 = vmatprep.subr.bf16.mxu0 %v2413
    %3464 = vmatpush1.bf16.msra.mxu0 %v2412
    %3465 = vmatprep.subr.bf16.mxu0 %v2415
    %3466 = vmatpush1.bf16.msra.mxu0 %v2414
    %3467 = vmatprep.subr.bf16.mxu0 %v2417
    %3468 = vmatpush1.bf16.msra.mxu0 %v2416
    %3469 = vmatprep.mubr.bf16.mxu0 %v185
    %3470 = vmatmul.mubr.bf16.gmra.mrb[0].mxu0 %v184
    %v3471 = vpop.f32.mrb[0].mxu0
    %v3472 = vadd.f32 %v3429, %v3471
    %v3473 = vpop.f32.mrb[0].mxu0
    %v3474 = vadd.f32 %v3431, %v3473
    %v3475 = vpop.f32.mrb[0].mxu0
    %v3476 = vadd.f32 %v3433, %v3475
    %v3477 = vpop.f32.mrb[0].mxu0
    %v3478 = vadd.f32 %v3435, %v3477
    %3479 = vdwg.mxu0
    %3480 = vmatprep.subr.bf16.mxu0 %v2419
    %3481 = vmatpush1.bf16.msra.mxu0 %v2418
    %3482 = vmatprep.subr.bf16.mxu0 %v2421
    %3483 = vmatpush1.bf16.msra.mxu0 %v2420
    %3484 = vmatprep.subr.bf16.mxu0 %v2423
    %3485 = vmatpush1.bf16.msra.mxu0 %v2422
    %3486 = vmatprep.subr.bf16.mxu0 %v2425
    %3487 = vmatpush1.bf16.msra.mxu0 %v2424
    %3488 = vmatprep.subr.bf16.mxu0 %v2427
    %3489 = vmatpush1.bf16.msra.mxu0 %v2426
    %3490 = vmatprep.subr.bf16.mxu0 %v2429
    %3491 = vmatpush1.bf16.msra.mxu0 %v2428
    %3492 = vmatprep.subr.bf16.mxu0 %v2431
    %3493 = vmatpush1.bf16.msra.mxu0 %v2430
    %3494 = vmatprep.subr.bf16.mxu0 %v2433
    %3495 = vmatpush1.bf16.msra.mxu0 %v2432
    %3496 = vmatprep.subr.bf16.mxu0 %v2435
    %3497 = vmatpush1.bf16.msra.mxu0 %v2434
    %3498 = vmatprep.subr.bf16.mxu0 %v2437
    %3499 = vmatpush1.bf16.msra.mxu0 %v2436
    %3500 = vmatprep.subr.bf16.mxu0 %v2439
    %3501 = vmatpush1.bf16.msra.mxu0 %v2438
    %3502 = vmatprep.subr.bf16.mxu0 %v2441
    %3503 = vmatpush1.bf16.msra.mxu0 %v2440
    %3504 = vmatprep.subr.bf16.mxu0 %v2443
    %3505 = vmatpush1.bf16.msra.mxu0 %v2442
    %3506 = vmatprep.subr.bf16.mxu0 %v2445
    %3507 = vmatpush1.bf16.msra.mxu0 %v2444
    %3508 = vmatprep.subr.bf16.mxu0 %v2447
    %3509 = vmatpush1.bf16.msra.mxu0 %v2446
    %3510 = vmatprep.subr.bf16.mxu0 %v2449
    %3511 = vmatpush1.bf16.msra.mxu0 %v2448
    %3512 = vmatprep.mubr.bf16.mxu0 %v187
    %3513 = vmatmul.mubr.bf16.gmra.mrb[0].mxu0 %v186
    %v3514 = vpop.f32.mrb[0].mxu0
    %v3515 = vadd.f32 %v3472, %v3514
    %v3516 = vpop.f32.mrb[0].mxu0
    %v3517 = vadd.f32 %v3474, %v3516
    %v3518 = vpop.f32.mrb[0].mxu0
    %v3519 = vadd.f32 %v3476, %v3518
    %v3520 = vpop.f32.mrb[0].mxu0
    %v3521 = vadd.f32 %v3478, %v3520
    %3522 = vdwg.mxu0
    %3523 = vmatprep.subr.bf16.mxu0 %v2451
    %3524 = vmatpush1.bf16.msra.mxu0 %v2450
    %3525 = vmatprep.subr.bf16.mxu0 %v2453
    %3526 = vmatpush1.bf16.msra.mxu0 %v2452
    %3527 = vmatprep.subr.bf16.mxu0 %v2455
    %3528 = vmatpush1.bf16.msra.mxu0 %v2454
    %3529 = vmatprep.subr.bf16.mxu0 %v2457
    %3530 = vmatpush1.bf16.msra.mxu0 %v2456
    %3531 = vmatprep.subr.bf16.mxu0 %v2459
    %3532 = vmatpush1.bf16.msra.mxu0 %v2458
    %3533 = vmatprep.subr.bf16.mxu0 %v2461
    %3534 = vmatpush1.bf16.msra.mxu0 %v2460
    %3535 = vmatprep.subr.bf16.mxu0 %v2463
    %3536 = vmatpush1.bf16.msra.mxu0 %v2462
    %3537 = vmatprep.subr.bf16.mxu0 %v2465
    %3538 = vmatpush1.bf16.msra.mxu0 %v2464
    %3539 = vmatprep.subr.bf16.mxu0 %v2467
    %3540 = vmatpush1.bf16.msra.mxu0 %v2466
    %3541 = vmatprep.subr.bf16.mxu0 %v2469
    %3542 = vmatpush1.bf16.msra.mxu0 %v2468
    %3543 = vmatprep.subr.bf16.mxu0 %v2471
    %3544 = vmatpush1.bf16.msra.mxu0 %v2470
    %3545 = vmatprep.subr.bf16.mxu0 %v2473
    %3546 = vmatpush1.bf16.msra.mxu0 %v2472
    %3547 = vmatprep.subr.bf16.mxu0 %v2475
    %3548 = vmatpush1.bf16.msra.mxu0 %v2474
    %3549 = vmatprep.subr.bf16.mxu0 %v2477
    %3550 = vmatpush1.bf16.msra.mxu0 %v2476
    %3551 = vmatprep.subr.bf16.mxu0 %v2479
    %3552 = vmatpush1.bf16.msra.mxu0 %v2478
    %3553 = vmatprep.subr.bf16.mxu0 %v2481
    %3554 = vmatpush1.bf16.msra.mxu0 %v2480
    %3555 = vmatprep.mubr.bf16.mxu0 %v189
    %3556 = vmatmul.mubr.bf16.gmra.mrb[0].mxu0 %v188
    %v3557 = vpop.f32.mrb[0].mxu0
    %v3558 = vadd.f32 %v3515, %v3557
    %v3559 = vpop.f32.mrb[0].mxu0
    %v3560 = vadd.f32 %v3517, %v3559
    %v3561 = vpop.f32.mrb[0].mxu0
    %v3562 = vadd.f32 %v3519, %v3561
    %v3563 = vpop.f32.mrb[0].mxu0
    %v3564 = vadd.f32 %v3521, %v3563
    %3565 = vdwg.mxu0
    %3566 = vmatprep.subr.bf16.mxu0 %v2483
    %3567 = vmatpush1.bf16.msra.mxu0 %v2482
    %3568 = vmatprep.subr.bf16.mxu0 %v2485
    %3569 = vmatpush1.bf16.msra.mxu0 %v2484
    %3570 = vmatprep.subr.bf16.mxu0 %v2487
    %3571 = vmatpush1.bf16.msra.mxu0 %v2486
    %3572 = vmatprep.subr.bf16.mxu0 %v2489
    %3573 = vmatpush1.bf16.msra.mxu0 %v2488
    %3574 = vmatprep.subr.bf16.mxu0 %v2491
    %3575 = vmatpush1.bf16.msra.mxu0 %v2490
    %3576 = vmatprep.subr.bf16.mxu0 %v2493
    %3577 = vmatpush1.bf16.msra.mxu0 %v2492
    %3578 = vmatprep.subr.bf16.mxu0 %v2495
    %3579 = vmatpush1.bf16.msra.mxu0 %v2494
    %3580 = vmatprep.subr.bf16.mxu0 %v2497
    %3581 = vmatpush1.bf16.msra.mxu0 %v2496
    %3582 = vmatprep.subr.bf16.mxu0 %v2499
    %3583 = vmatpush1.bf16.msra.mxu0 %v2498
    %3584 = vmatprep.subr.bf16.mxu0 %v2501
    %3585 = vmatpush1.bf16.msra.mxu0 %v2500
    %3586 = vmatprep.subr.bf16.mxu0 %v2503
    %3587 = vmatpush1.bf16.msra.mxu0 %v2502
    %3588 = vmatprep.subr.bf16.mxu0 %v2505
    %3589 = vmatpush1.bf16.msra.mxu0 %v2504
    %3590 = vmatprep.subr.bf16.mxu0 %v2507
    %3591 = vmatpush1.bf16.msra.mxu0 %v2506
    %3592 = vmatprep.subr.bf16.mxu0 %v2509
    %3593 = vmatpush1.bf16.msra.mxu0 %v2508
    %3594 = vmatprep.subr.bf16.mxu0 %v2511
    %3595 = vmatpush1.bf16.msra.mxu0 %v2510
    %3596 = vmatprep.subr.bf16.mxu0 %v2513
    %3597 = vmatpush1.bf16.msra.mxu0 %v2512
    %3598 = vmatprep.mubr.bf16.mxu0 %v191
    %3599 = vmatmul.mubr.bf16.gmra.mrb[0].mxu0 %v190
    %v3600 = vpop.f32.mrb[0].mxu0
    %v3601 = vadd.f32 %v3558, %v3600
    %v3602 = vpop.f32.mrb[0].mxu0
    %v3603 = vadd.f32 %v3560, %v3602
    %v3604 = vpop.f32.mrb[0].mxu0
    %v3605 = vadd.f32 %v3562, %v3604
    %v3606 = vpop.f32.mrb[0].mxu0
    %v3607 = vadd.f32 %v3564, %v3606
    %3608 = vdwg.mxu0
    %3609 = vmatprep.subr.bf16.mxu0 %v2515
    %3610 = vmatpush1.bf16.msra.mxu0 %v2514
    %3611 = vmatprep.subr.bf16.mxu0 %v2517
    %3612 = vmatpush1.bf16.msra.mxu0 %v2516
    %3613 = vmatprep.subr.bf16.mxu0 %v2519
    %3614 = vmatpush1.bf16.msra.mxu0 %v2518
    %3615 = vmatprep.subr.bf16.mxu0 %v2521
    %3616 = vmatpush1.bf16.msra.mxu0 %v2520
    %3617 = vmatprep.subr.bf16.mxu0 %v2523
    %3618 = vmatpush1.bf16.msra.mxu0 %v2522
    %3619 = vmatprep.subr.bf16.mxu0 %v2525
    %3620 = vmatpush1.bf16.msra.mxu0 %v2524
    %3621 = vmatprep.subr.bf16.mxu0 %v2527
    %3622 = vmatpush1.bf16.msra.mxu0 %v2526
    %3623 = vmatprep.subr.bf16.mxu0 %v2529
    %3624 = vmatpush1.bf16.msra.mxu0 %v2528
    %3625 = vmatprep.subr.bf16.mxu0 %v3005
    %3626 = vmatpush1.bf16.msra.mxu0 %v3002
    %3627 = vmatprep.subr.bf16.mxu0 0
    %3628 = vmatpush1.bf16.msra.mxu0 0
    %3629 = vmatprep.subr.bf16.mxu0 0
    %3630 = vmatpush1.bf16.msra.mxu0 0
    %3631 = vmatprep.subr.bf16.mxu0 0
    %3632 = vmatpush1.bf16.msra.mxu0 0
    %3633 = vmatprep.subr.bf16.mxu0 0
    %3634 = vmatpush1.bf16.msra.mxu0 0
    %3635 = vmatprep.subr.bf16.mxu0 0
    %3636 = vmatpush1.bf16.msra.mxu0 0
    %3637 = vmatprep.subr.bf16.mxu0 0
    %3638 = vmatpush1.bf16.msra.mxu0 0
    %3639 = vmatprep.subr.bf16.mxu0 0
    %3640 = vmatpush1.bf16.msra.mxu0 0
    %3641 = vmatprep.mubr.bf16.mxu0 %v2998
    %3642 = vmatmul.mubr.bf16.gmra.mrb[0].mxu0 %v192
    %v3643 = vpop.f32.mrb[0].mxu0
    %v3644 = vadd.f32 %v3601, %v3643
    %v3645 = vpop.f32.mrb[0].mxu0
    %v3646 = vadd.f32 %v3603, %v3645
    %v3647 = vpop.f32.mrb[0].mxu0
    %v3648 = vadd.f32 %v3605, %v3647
    %v3649 = vpop.f32.mrb[0].mxu0
    %v3650 = vadd.f32 %v3607, %v3649
    %3651 = vdwg.mxu0
    %v3652 = vmax.f32 %v3644, 0.0
    %v3653 = vmax.f32 %v3646, 0.0
    %v3654 = vmax.f32 %v3648, 0.0
    %v3655 = vmax.f32 %v3650, 0.0
    %v3656 = vpack.c.bf16 %v3654, %v3652
    %v3657 = vpack.c.bf16 %v3655, %v3653
    %v3658 = vld [vmem:[#allocation8] sm:$0xff]
    %v3659 = vld [vmem:[#allocation8 + $0x8] sm:$0xff]
    %v3660 = vld [vmem:[#allocation8 + $0x10] sm:$0xff]
    %v3661 = vld [vmem:[#allocation8 + $0x18] sm:$0xff]
    %v3662 = vld [vmem:[#allocation8 + $0x20] sm:$0xff]
    %v3663 = vld [vmem:[#allocation8 + $0x28] sm:$0xff]
    %v3664 = vld [vmem:[#allocation8 + $0x30] sm:$0xff]
    %v3665 = vld [vmem:[#allocation8 + $0x38] sm:$0xff]
    %v3666 = vld [vmem:[#allocation8 + $0x40] sm:$0xff]
    %v3667 = vld [vmem:[#allocation8 + $0x48] sm:$0xff]
    %v3668 = vld [vmem:[#allocation8 + $0x50] sm:$0xff]
    %v3669 = vld [vmem:[#allocation8 + $0x58] sm:$0xff]
    %v3670 = vld [vmem:[#allocation8 + $0x60] sm:$0xff]
    %v3671 = vld [vmem:[#allocation8 + $0x68] sm:$0xff]
    %v3672 = vld [vmem:[#allocation8 + $0x70] sm:$0xff]
    %v3673 = vld [vmem:[#allocation8 + $0x78] sm:$0xff]
    %v3674 = vld [vmem:[#allocation8 + $0x80] sm:$0xff]
    %v3675 = vld [vmem:[#allocation8 + $0x88] sm:$0xff]
    %v3676 = vld [vmem:[#allocation8 + $0x90] sm:$0xff]
    %v3677 = vld [vmem:[#allocation8 + $0x98] sm:$0xff]
    %v3678 = vld [vmem:[#allocation8 + $0xa0] sm:$0xff]
    %v3679 = vld [vmem:[#allocation8 + $0xa8] sm:$0xff]
    %v3680 = vld [vmem:[#allocation8 + $0xb0] sm:$0xff]
    %v3681 = vld [vmem:[#allocation8 + $0xb8] sm:$0xff]
    %v3682 = vld [vmem:[#allocation8 + $0xc0] sm:$0xff]
    %v3683 = vld [vmem:[#allocation8 + $0xc8] sm:$0xff]
    %v3684 = vld [vmem:[#allocation8 + $0xd0] sm:$0xff]
    %v3685 = vld [vmem:[#allocation8 + $0xd8] sm:$0xff]
    %v3686 = vld [vmem:[#allocation8 + $0xe0] sm:$0xff]
    %v3687 = vld [vmem:[#allocation8 + $0xe8] sm:$0xff]
    %v3688 = vld [vmem:[#allocation8 + $0xf0] sm:$0xff]
    %v3689 = vld [vmem:[#allocation8 + $0xf8] sm:$0xff]
    %v3690 = vld [vmem:[#allocation10] sm:$0x3]
    %v3692 = vlaneseq
    %v3693 = vshrl.u32 %v3692, 7
    %v3694 = vsub.s32 0, %v3693
    %v3695 = vrot.slane %v3690, %v3694
    %v3696 = vlaneseq
    %v3697 = vshrl.u32 %v3696, 7
    %v3698 = vsub.s32 1, %v3697
    %v3699 = vrot.slane %v3690, %v3698
    %v3734 = vunpack.c.l.b16 %v3658
    %v3735 = vunpack.c.h.b16 %v3658
    %v3736 = vunpack.c.l.b16 %v3659
    %v3737 = vunpack.c.h.b16 %v3659
    %v3738 = vunpack.c.l.b16 %v3660
    %v3739 = vunpack.c.h.b16 %v3660
    %v3740 = vunpack.c.l.b16 %v3661
    %v3741 = vunpack.c.h.b16 %v3661
    %v3742 = vunpack.c.l.b16 %v3662
    %v3743 = vunpack.c.h.b16 %v3662
    %v3744 = vunpack.c.l.b16 %v3663
    %v3745 = vunpack.c.h.b16 %v3663
    %v3746 = vunpack.c.l.b16 %v3664
    %v3747 = vunpack.c.h.b16 %v3664
    %v3748 = vunpack.c.l.b16 %v3665
    %v3749 = vunpack.c.h.b16 %v3665
    %v3750 = vunpack.c.l.b16 %v3666
    %v3751 = vunpack.c.h.b16 %v3666
    %v3752 = vunpack.c.l.b16 %v3667
    %v3753 = vunpack.c.h.b16 %v3667
    %v3754 = vunpack.c.l.b16 %v3668
    %v3755 = vunpack.c.h.b16 %v3668
    %v3756 = vunpack.c.l.b16 %v3669
    %v3757 = vunpack.c.h.b16 %v3669
    %v3758 = vunpack.c.l.b16 %v3670
    %v3759 = vunpack.c.h.b16 %v3670
    %v3760 = vunpack.c.l.b16 %v3671
    %v3761 = vunpack.c.h.b16 %v3671
    %v3762 = vunpack.c.l.b16 %v3672
    %v3763 = vunpack.c.h.b16 %v3672
    %v3764 = vunpack.c.l.b16 %v3673
    %v3765 = vunpack.c.h.b16 %v3673
    %v3766 = vunpack.c.l.b16 %v3674
    %v3767 = vunpack.c.h.b16 %v3674
    %v3768 = vunpack.c.l.b16 %v3675
    %v3769 = vunpack.c.h.b16 %v3675
    %v3770 = vunpack.c.l.b16 %v3676
    %v3771 = vunpack.c.h.b16 %v3676
    %v3772 = vunpack.c.l.b16 %v3677
    %v3773 = vunpack.c.h.b16 %v3677
    %v3774 = vunpack.c.l.b16 %v3678
    %v3775 = vunpack.c.h.b16 %v3678
    %v3776 = vunpack.c.l.b16 %v3679
    %v3777 = vunpack.c.h.b16 %v3679
    %v3778 = vunpack.c.l.b16 %v3680
    %v3779 = vunpack.c.h.b16 %v3680
    %v3780 = vunpack.c.l.b16 %v3681
    %v3781 = vunpack.c.h.b16 %v3681
    %v3782 = vunpack.c.l.b16 %v3682
    %v3783 = vunpack.c.h.b16 %v3682
    %v3784 = vunpack.c.l.b16 %v3683
    %v3785 = vunpack.c.h.b16 %v3683
    %v3786 = vunpack.c.l.b16 %v3684
    %v3787 = vunpack.c.h.b16 %v3684
    %v3788 = vunpack.c.l.b16 %v3685
    %v3789 = vunpack.c.h.b16 %v3685
    %v3790 = vunpack.c.l.b16 %v3686
    %v3791 = vunpack.c.h.b16 %v3686
    %v3792 = vunpack.c.l.b16 %v3687
    %v3793 = vunpack.c.h.b16 %v3687
    %v3794 = vunpack.c.l.b16 %v3688
    %v3795 = vunpack.c.h.b16 %v3688
    %v3796 = vunpack.c.l.b16 %v3689
    %v3797 = vunpack.c.h.b16 %v3689
    %v3798 = vpack.c.b16 %v3736, %v3734
    %v3799 = vpack.c.b16 %v3737, %v3735
    %v3800 = vpack.c.b16 %v3740, %v3738
    %v3801 = vpack.c.b16 %v3741, %v3739
    %v3802 = vpack.c.b16 %v3744, %v3742
    %v3803 = vpack.c.b16 %v3745, %v3743
    %v3804 = vpack.c.b16 %v3748, %v3746
    %v3805 = vpack.c.b16 %v3749, %v3747
    %v3806 = vpack.c.b16 %v3752, %v3750
    %v3807 = vpack.c.b16 %v3753, %v3751
    %v3808 = vpack.c.b16 %v3756, %v3754
    %v3809 = vpack.c.b16 %v3757, %v3755
    %v3810 = vpack.c.b16 %v3760, %v3758
    %v3811 = vpack.c.b16 %v3761, %v3759
    %v3812 = vpack.c.b16 %v3764, %v3762
    %v3813 = vpack.c.b16 %v3765, %v3763
    %v3814 = vpack.c.b16 %v3768, %v3766
    %v3815 = vpack.c.b16 %v3769, %v3767
    %v3816 = vpack.c.b16 %v3772, %v3770
    %v3817 = vpack.c.b16 %v3773, %v3771
    %v3818 = vpack.c.b16 %v3776, %v3774
    %v3819 = vpack.c.b16 %v3777, %v3775
    %v3820 = vpack.c.b16 %v3780, %v3778
    %v3821 = vpack.c.b16 %v3781, %v3779
    %v3822 = vpack.c.b16 %v3784, %v3782
    %v3823 = vpack.c.b16 %v3785, %v3783
    %v3824 = vpack.c.b16 %v3788, %v3786
    %v3825 = vpack.c.b16 %v3789, %v3787
    %v3826 = vpack.c.b16 %v3792, %v3790
    %v3827 = vpack.c.b16 %v3793, %v3791
    %v3828 = vpack.c.b16 %v3796, %v3794
    %v3829 = vpack.c.b16 %v3797, %v3795
    %3862 = vmatprep.subr.bf16.mxu0 %v3799
    %3863 = vmatpush1.bf16.msra.mxu0 %v3798
    %3864 = vmatprep.subr.bf16.mxu0 %v3801
    %3865 = vmatpush1.bf16.msra.mxu0 %v3800
    %3866 = vmatprep.subr.bf16.mxu0 %v3803
    %3867 = vmatpush1.bf16.msra.mxu0 %v3802
    %3868 = vmatprep.subr.bf16.mxu0 %v3805
    %3869 = vmatpush1.bf16.msra.mxu0 %v3804
    %3870 = vmatprep.subr.bf16.mxu0 %v3807
    %3871 = vmatpush1.bf16.msra.mxu0 %v3806
    %3872 = vmatprep.subr.bf16.mxu0 %v3809
    %3873 = vmatpush1.bf16.msra.mxu0 %v3808
    %3874 = vmatprep.subr.bf16.mxu0 %v3811
    %3875 = vmatpush1.bf16.msra.mxu0 %v3810
    %3876 = vmatprep.subr.bf16.mxu0 %v3813
    %3877 = vmatpush1.bf16.msra.mxu0 %v3812
    %3878 = vmatprep.subr.bf16.mxu0 %v3815
    %3879 = vmatpush1.bf16.msra.mxu0 %v3814
    %3880 = vmatprep.subr.bf16.mxu0 %v3817
    %3881 = vmatpush1.bf16.msra.mxu0 %v3816
    %3882 = vmatprep.subr.bf16.mxu0 %v3819
    %3883 = vmatpush1.bf16.msra.mxu0 %v3818
    %3884 = vmatprep.subr.bf16.mxu0 %v3821
    %3885 = vmatpush1.bf16.msra.mxu0 %v3820
    %3886 = vmatprep.subr.bf16.mxu0 %v3823
    %3887 = vmatpush1.bf16.msra.mxu0 %v3822
    %3888 = vmatprep.subr.bf16.mxu0 %v3825
    %3889 = vmatpush1.bf16.msra.mxu0 %v3824
    %3890 = vmatprep.subr.bf16.mxu0 %v3827
    %3891 = vmatpush1.bf16.msra.mxu0 %v3826
    %3892 = vmatprep.subr.bf16.mxu0 %v3829
    %3893 = vmatpush1.bf16.msra.mxu0 %v3828
    %3894 = vmatprep.mubr.bf16.mxu0 %v3657
    %3895 = vmatmul.mubr.bf16.gmra.mrb[0].mxu0 %v3656
    %v3896 = vpop.f32.mrb[0].mxu0
    %v3897 = vadd.f32 %v3695, %v3896
    %v3898 = vpop.f32.mrb[0].mxu0
    %v3899 = vadd.f32 %v3699, %v3898
    %v3900 = vpop.f32.mrb[0].mxu0
    %v3901 = vadd.f32 %v3695, %v3900
    %v3902 = vpop.f32.mrb[0].mxu0
    %v3903 = vadd.f32 %v3699, %v3902
    %3904 = vdwg.mxu0
    %v3905 = vmax.f32 %v3897, 0.0
    %v3906 = vmax.f32 %v3899, 0.0
    %v3907 = vmax.f32 %v3901, 0.0
    %v3908 = vmax.f32 %v3903, 0.0
    %v3909 = vld [vmem:[#allocation11] sm:$0x3]
    %v3911 = vlaneseq
    %v3912 = vshrl.u32 %v3911, 7
    %v3913 = vsub.s32 0, %v3912
    %v3914 = vrot.slane %v3909, %v3913
    %v3915 = vlaneseq
    %v3916 = vshrl.u32 %v3915, 7
    %v3917 = vsub.s32 1, %v3916
    %v3918 = vrot.slane %v3909, %v3917
    %v3921 = vmul.f32 %v3905, %v3914
    %v3922 = vmul.f32 %v3906, %v3918
    %v3923 = vmul.f32 %v3907, %v3914
    %v3924 = vmul.f32 %v3908, %v3918
    %v3925 = vadd.f32 %v3921, %v3922
    %3926 = vadd.xlane.f32.xlu0 %v3925
    %v3927 = vpop.xlane.xlu0 %3926
    %v3928 = vadd.f32 %v3923, %v3924
    %3929 = vadd.xlane.f32.xlu0 %v3928
    %v3930 = vpop.xlane.xlu0 %3929
    %s3931 = sld [smem:[#allocation2]]
    %v3932 = vstv %s3931
    %v3933 = vadd.f32 %v3927, %v3932
    %v3934 = vadd.f32 %v3930, %v3932
    %v3935 = vmax.f32 %v3933, 0.0
    %v3936 = vmax.f32 %v3934, 0.0
    %vm3937 = vcmask 7168
    %3938 = vst.msk [vmem:[%s7] sm:$0xff] %vm3937, %v3935
    %3939 = vst.msk [vmem:[%s7 + $0x8] sm:$0xff] %vm3937, %v3936
    // Predicated region
    $region54: #{tpu_custom_call.1} parent=1 // pred_check
      _
    $region55: #{tpu_custom_call.1} parent=1 // pred_check_branch
      %3941 = sbr.rel (0) target = $region57
    $region56: #{tpu_custom_call.1} parent=1 // pred_region
      _
    $region57: #{tpu_custom_call.1} parent=1 // pred_fallthru
      _
    // Predicated region
    $region58: #{tpu_custom_call.1} parent=1 // pred_check
      _
    $region59: #{tpu_custom_call.1} parent=1 // pred_check_branch
      %3943 = sbr.rel (0) target = $region61
    $region60: #{tpu_custom_call.1} parent=1 // pred_region
      _
    $region61: #{tpu_custom_call.1} parent=1 // pred_fallthru
      _
    %3944 = vsyncpa [#allocation4], 1
    %3945 = vsyncpa [#allocation6], 1
    %3946 = vsyncpa [#allocation9], 1
    %3947 = vsyncpa [#allocation12], 1

</llo_original>
